<compile_context>
chip_gen: v7x
topology: tpu7x:2x2x1
jax: 0.10.0
libtpu: 0.0.40
codegen_flags: <defaults>
</compile_context>

<pallas_src>
import functools

import jax
import jax.numpy as jnp
from jax.experimental import pallas as pl
from jax.experimental.pallas import tpu as pltpu


def _round_up(n, m):
    return -(-n // m) * m


def _leaky_relu(x, alpha):
    return jnp.where(x > 0, x, alpha * x)


def mlp_kernel(x_ref,
               w1_ref, b1_ref,
               w2_ref, b2_ref,
               w3_ref, b3_ref,
               w4_ref, b4_ref,
               o_ref,
               *, alpha, vector_head):
    compute_dtype = w1_ref.dtype  # bf16 MXU operands

    # In-kernel cast of the f32 input (avoids a separate host-side HBM convert pass).
    x = x_ref[...].astype(compute_dtype)

    # Layer 1: Linear -> (Dropout: identity) -> LeakyReLU   (BN1 folded into W2/b2)
    h = jnp.dot(x, w1_ref[...], preferred_element_type=jnp.float32) + b1_ref[...]
    h = _leaky_relu(h, alpha)

    # Layer 2 (BN2 folded into W3/b3)
    h = jnp.dot(h.astype(compute_dtype), w2_ref[...],
                preferred_element_type=jnp.float32) + b2_ref[...]
    h = _leaky_relu(h, alpha)

    # Layer 3 (BN3 folded into W4/b4)
    h = jnp.dot(h.astype(compute_dtype), w3_ref[...],
                preferred_element_type=jnp.float32) + b3_ref[...]
    h = _leaky_relu(h, alpha)

    # Output head (unpadded).
    if vector_head:
        # out_dim == 1: VPU multiply + lane reduction; w4_ref holds the f32 row (1, third).
        logits = jnp.sum(h * w4_ref[...], axis=-1, keepdims=True) + b4_ref[...]
    else:
        logits = jnp.dot(h.astype(compute_dtype), w4_ref[...],
                         preferred_element_type=jnp.float32) + b4_ref[...]

    # Exact sigmoid on the real out_dim columns only.
    o_ref[...] = (1.0 / (1.0 + jnp.exp(-logits))).astype(o_ref.dtype)


def fold_and_pack_params(params, compute_dtype=jnp.bfloat16):
    """One-time parameter prep (call OUTSIDE the per-step forward path).

    Folds each eval-mode BatchNorm affine into the NEXT Linear:
        W' = diag(scale) @ W,  b' = b + shift @ W
    Casts matmul weights to bf16 (biases stay f32). For out_dim == 1, the head weight is
    stored as an f32 row (1, third) so the kernel can use a VPU dot instead of a tiny matmul.
    """
    s1, t1 = params["bn1_scale"], params["bn1_shift"]
    s2, t2 = params["bn2_scale"], params["bn2_shift"]
    s3, t3 = params["bn3_scale"], params["bn3_shift"]

    w1, b1 = params["w1"], params["b1"]
    w2 = params["w2"] * s1.reshape(-1, 1)
    b2 = params["b2"] + t1 @ params["w2"]
    w3 = params["w3"] * s2.reshape(-1, 1)
    b3 = params["b3"] + t2 @ params["w3"]
    w4 = params["w4"] * s3.reshape(-1, 1)
    b4 = params["b4"] + t3 @ params["w4"]

    out_dim = w4.shape[1]
    if out_dim == 1:
        w4p = w4.T.astype(jnp.float32)        # (1, third) f32 row for the VPU head
    else:
        w4p = w4.astype(compute_dtype)        # unpadded MXU operand

    packed = dict(
        w1=w1.astype(compute_dtype), b1=b1.astype(jnp.float32),
        w2=w2.astype(compute_dtype), b2=b2.astype(jnp.float32),
        w3=w3.astype(compute_dtype), b3=b3.astype(jnp.float32),
        w4=w4p,                      b4=b4.astype(jnp.float32),
    )
    return packed


def _default_tile_b(batch):
    if batch <= 256:
        return _round_up(batch, 8)          # grid = 1
    # grid >= 2 keeps both v7x TensorCores busy; the extra grid step is ~0.35 us on
    # single-TC v5e/v6e, negligible. Cap tile size to bound the x double buffer in VMEM.
    return min(_round_up(-(-batch // 2), 8), 4096)


@functools.partial(jax.jit, static_argnames=("alpha", "tile_b"))
def nn_classifier_forward(x, packed, *, alpha, tile_b=None):
    """Run the fused MLP kernel over the full batch.

    x: (B, input_size) float32 (cast to bf16 inside the kernel).
    packed: output of fold_and_pack_params (pre-folded, pre-cast; weights resident in VMEM).
    """
    B, in_dim = x.shape
    out_dim = packed["b4"].shape[1]
    vector_head = out_dim == 1

    if tile_b is None:
        tile_b = _default_tile_b(B)
    b_pad = _round_up(B, tile_b)
    if b_pad != B:
        x = jnp.pad(x, ((0, b_pad - B), (0, 0)))

    def resident(arr):
        # Full-array block, same block index every grid step -> stays resident in VMEM.
        return pl.BlockSpec(arr.shape, lambda i: (0, 0))

    in_specs = [
        pl.BlockSpec((tile_b, in_dim), lambda i: (i, 0)),
        resident(packed["w1"]), resident(packed["b1"]),
        resident(packed["w2"]), resident(packed["b2"]),
        resident(packed["w3"]), resident(packed["b3"]),
        resident(packed["w4"]), resident(packed["b4"]),
    ]
    out_spec = pl.BlockSpec((tile_b, out_dim), lambda i: (i, 0))

    out = pl.pallas_call(
        functools.partial(mlp_kernel, alpha=alpha, vector_head=vector_head),
        out_shape=jax.ShapeDtypeStruct((b_pad, out_dim), jnp.float32),
        grid=(b_pad // tile_b,),
        in_specs=in_specs,
        out_specs=out_spec,
        compiler_params=pltpu.CompilerParams(
            dimension_semantics=("parallel",)),
    )(x, packed["w1"], packed["b1"], packed["w2"], packed["b2"],
      packed["w3"], packed["b3"], packed["w4"], packed["b4"])

    if b_pad != B:
        out = out[:B]
    return out


def make_params(key, input_size, first, second, third, out_dim, bn_eps=1e-5):
    """Deterministic synthetic parameters (Linear weights/biases + eval-mode BatchNorm)."""
    ks = jax.random.split(key, 16)
    dims = [(input_size, first), (first, second), (second, third), (third, out_dim)]
    params = {}
    for i, (din, dout) in enumerate(dims, start=1):
        bound = 1.0 / jnp.sqrt(jnp.float32(din))
        params[f"w{i}"] = jax.random.uniform(
            ks[2 * i - 2], (din, dout), jnp.float32, -bound, bound)
        params[f"b{i}"] = jax.random.uniform(
            ks[2 * i - 1], (1, dout), jnp.float32, -bound, bound)

    # BatchNorm1d (eval mode) as per-feature affine: scale = gamma/sqrt(var+eps),
    # shift = beta - mean*scale.
    for i, d in enumerate([first, second, third], start=1):
        kg, kb, km, kv = jax.random.split(ks[8 + i], 4)
        gamma = 1.0 + 0.1 * jax.random.normal(kg, (1, d), jnp.float32)
        beta = 0.1 * jax.random.normal(kb, (1, d), jnp.float32)
        mean = 0.1 * jax.random.normal(km, (1, d), jnp.float32)
        var = jnp.abs(1.0 + 0.1 * jax.random.normal(kv, (1, d), jnp.float32))
        scale = gamma / jnp.sqrt(var + bn_eps)
        shift = beta - mean * scale
        params[f"bn{i}_scale"] = scale
        params[f"bn{i}_shift"] = shift
    return params


def reference_forward(x, params, *, alpha):
    """Pure-JAX f32 reference matching the original (unfused) eval-mode module."""
    h = x @ params["w1"] + params["b1"]
    h = jnp.where(h > 0, h, alpha * h)
    h = h * params["bn1_scale"] + params["bn1_shift"]
    h = h @ params["w2"] + params["b2"]
    h = jnp.where(h > 0, h, alpha * h)
    h = h * params["bn2_scale"] + params["bn2_shift"]
    h = h @ params["w3"] + params["b3"]
    h = jnp.where(h > 0, h, alpha * h)
    h = h * params["bn3_scale"] + params["bn3_shift"]
    logits = h @ params["w4"] + params["b4"]
    return jax.nn.sigmoid(logits)


if __name__ == "__main__":
    # Hyperparameters standing in for argparse args (args.first/second/third/ralpha/dr).
    input_size, first, second, third, out_dim = 32, 64, 32, 16, 1
    ralpha = 0.1   # LeakyReLU negative slope
    batch = 1024   # one pallas_call, gridded over the batch axis (grid=2 by default)

    key = jax.random.PRNGKey(0)
    kx, kp = jax.random.split(key)
    x = jax.random.normal(kx, (batch, input_size), jnp.float32)
    params = make_params(kp, input_size, first, second, third, out_dim)

    # One-time parameter folding / packing — hoisted out of the per-call path.
    packed = fold_and_pack_params(params)
    packed = {k: jax.block_until_ready(v) for k, v in packed.items()}

    out = nn_classifier_forward(x, packed, alpha=ralpha)
    out = jax.block_until_ready(out)

    ref = reference_forward(x, params, alpha=ralpha)
    assert out.shape == (batch, out_dim), out.shape
    max_err = float(jnp.max(jnp.abs(out - ref)))
    # bf16 matmul operands vs. pure-f32 reference (sigmoid is exact in the kernel).
    assert max_err < 3e-2, f"mismatch vs reference: max_err={max_err}"

    print("KERNEL_OK")
</pallas_src>

<mosaic_0001>
module attributes {stable_mosaic.version = 11 : i64} {
  func.func @mlp_kernel(%arg0: i32, %arg1: memref<512x32xf32, #tpu.memory_space<vmem>>, %arg2: memref<32x64xbf16, #tpu.memory_space<vmem>>, %arg3: memref<1x64xf32, #tpu.memory_space<vmem>>, %arg4: memref<64x32xbf16, #tpu.memory_space<vmem>>, %arg5: memref<1x32xf32, #tpu.memory_space<vmem>>, %arg6: memref<32x16xbf16, #tpu.memory_space<vmem>>, %arg7: memref<1x16xf32, #tpu.memory_space<vmem>>, %arg8: memref<1x16xf32, #tpu.memory_space<vmem>>, %arg9: memref<1x1xf32, #tpu.memory_space<vmem>>, %arg10: memref<512x1xf32, #tpu.memory_space<vmem>>) attributes {dimension_semantics = [#tpu.dimension_semantics<parallel>], iteration_bounds = array<i64: 2>, scalar_prefetch = 0 : i64, scratch_operands = 0 : i64, tpu.core_type = #tpu.core_type<tc>, window_params = [{transform_indices = @transform_0, window_bounds = array<i64: 512, 32>}, {pipeline_mode = #tpu.pipeline_mode<synchronous>, transform_indices = @transform_1, window_bounds = array<i64: 32, 64>}, {pipeline_mode = #tpu.pipeline_mode<synchronous>, transform_indices = @transform_2, window_bounds = array<i64: 1, 64>}, {pipeline_mode = #tpu.pipeline_mode<synchronous>, transform_indices = @transform_3, window_bounds = array<i64: 64, 32>}, {pipeline_mode = #tpu.pipeline_mode<synchronous>, transform_indices = @transform_4, window_bounds = array<i64: 1, 32>}, {pipeline_mode = #tpu.pipeline_mode<synchronous>, transform_indices = @transform_5, window_bounds = array<i64: 32, 16>}, {pipeline_mode = #tpu.pipeline_mode<synchronous>, transform_indices = @transform_6, window_bounds = array<i64: 1, 16>}, {pipeline_mode = #tpu.pipeline_mode<synchronous>, transform_indices = @transform_7, window_bounds = array<i64: 1, 16>}, {pipeline_mode = #tpu.pipeline_mode<synchronous>, transform_indices = @transform_8, window_bounds = array<i64: 1, 1>}, {transform_indices = @transform_9, window_bounds = array<i64: 512, 1>}]} {
    %c0 = arith.constant 0 : index
    %c0_0 = arith.constant 0 : index
    %0 = vector.load %arg1[%c0, %c0_0] : memref<512x32xf32, #tpu.memory_space<vmem>>, vector<512x32xf32>
    %1 = arith.truncf %0 : vector<512x32xf32> to vector<512x32xbf16>
    %c0_1 = arith.constant 0 : index
    %c0_2 = arith.constant 0 : index
    %2 = vector.load %arg2[%c0_1, %c0_2] : memref<32x64xbf16, #tpu.memory_space<vmem>>, vector<32x64xbf16>
    %cst = arith.constant dense<0.000000e+00> : vector<512x64xf32>
    %3 = tpu.matmul %1, %2, %cst {dimension_numbers = #tpu.dot_dimension_numbers<[1], [0], [0], [1], [0, 0, 1, 1], [], []>} : vector<512x32xbf16>, vector<32x64xbf16>, vector<512x64xf32> -> vector<512x64xf32>
    %c0_3 = arith.constant 0 : index
    %c0_4 = arith.constant 0 : index
    %4 = vector.load %arg3[%c0_3, %c0_4] : memref<1x64xf32, #tpu.memory_space<vmem>>, vector<1x64xf32>
    %5 = vector.broadcast %4 : vector<1x64xf32> to vector<512x64xf32>
    %6 = arith.addf %3, %5 : vector<512x64xf32>
    %cst_5 = arith.constant 0.000000e+00 : f32
    %7 = vector.broadcast %cst_5 : f32 to vector<512x64xf32>
    %8 = arith.cmpf ogt, %6, %7 : vector<512x64xf32>
    %cst_6 = arith.constant 1.000000e-01 : f32
    %9 = vector.broadcast %cst_6 : f32 to vector<512x64xf32>
    %10 = arith.mulf %9, %6 : vector<512x64xf32>
    %11 = arith.select %8, %6, %10 : vector<512x64xi1>, vector<512x64xf32>
    %12 = arith.truncf %11 : vector<512x64xf32> to vector<512x64xbf16>
    %c0_7 = arith.constant 0 : index
    %c0_8 = arith.constant 0 : index
    %13 = vector.load %arg4[%c0_7, %c0_8] : memref<64x32xbf16, #tpu.memory_space<vmem>>, vector<64x32xbf16>
    %cst_9 = arith.constant dense<0.000000e+00> : vector<512x32xf32>
    %14 = tpu.matmul %12, %13, %cst_9 {dimension_numbers = #tpu.dot_dimension_numbers<[1], [0], [0], [1], [0, 0, 1, 1], [], []>} : vector<512x64xbf16>, vector<64x32xbf16>, vector<512x32xf32> -> vector<512x32xf32>
    %c0_10 = arith.constant 0 : index
    %c0_11 = arith.constant 0 : index
    %15 = vector.load %arg5[%c0_10, %c0_11] : memref<1x32xf32, #tpu.memory_space<vmem>>, vector<1x32xf32>
    %16 = vector.broadcast %15 : vector<1x32xf32> to vector<512x32xf32>
    %17 = arith.addf %14, %16 : vector<512x32xf32>
    %cst_12 = arith.constant 0.000000e+00 : f32
    %18 = vector.broadcast %cst_12 : f32 to vector<512x32xf32>
    %19 = arith.cmpf ogt, %17, %18 : vector<512x32xf32>
    %cst_13 = arith.constant 1.000000e-01 : f32
    %20 = vector.broadcast %cst_13 : f32 to vector<512x32xf32>
    %21 = arith.mulf %20, %17 : vector<512x32xf32>
    %22 = arith.select %19, %17, %21 : vector<512x32xi1>, vector<512x32xf32>
    %23 = arith.truncf %22 : vector<512x32xf32> to vector<512x32xbf16>
    %c0_14 = arith.constant 0 : index
    %c0_15 = arith.constant 0 : index
    %24 = vector.load %arg6[%c0_14, %c0_15] : memref<32x16xbf16, #tpu.memory_space<vmem>>, vector<32x16xbf16>
    %cst_16 = arith.constant dense<0.000000e+00> : vector<512x16xf32>
    %25 = tpu.matmul %23, %24, %cst_16 {dimension_numbers = #tpu.dot_dimension_numbers<[1], [0], [0], [1], [0, 0, 1, 1], [], []>} : vector<512x32xbf16>, vector<32x16xbf16>, vector<512x16xf32> -> vector<512x16xf32>
    %c0_17 = arith.constant 0 : index
    %c0_18 = arith.constant 0 : index
    %26 = vector.load %arg7[%c0_17, %c0_18] : memref<1x16xf32, #tpu.memory_space<vmem>>, vector<1x16xf32>
    %27 = vector.broadcast %26 : vector<1x16xf32> to vector<512x16xf32>
    %28 = arith.addf %25, %27 : vector<512x16xf32>
    %cst_19 = arith.constant 0.000000e+00 : f32
    %29 = vector.broadcast %cst_19 : f32 to vector<512x16xf32>
    %30 = arith.cmpf ogt, %28, %29 : vector<512x16xf32>
    %cst_20 = arith.constant 1.000000e-01 : f32
    %31 = vector.broadcast %cst_20 : f32 to vector<512x16xf32>
    %32 = arith.mulf %31, %28 : vector<512x16xf32>
    %33 = arith.select %30, %28, %32 : vector<512x16xi1>, vector<512x16xf32>
    %c0_21 = arith.constant 0 : index
    %c0_22 = arith.constant 0 : index
    %34 = vector.load %arg8[%c0_21, %c0_22] : memref<1x16xf32, #tpu.memory_space<vmem>>, vector<1x16xf32>
    %35 = vector.broadcast %34 : vector<1x16xf32> to vector<512x16xf32>
    %36 = arith.mulf %33, %35 : vector<512x16xf32>
    %cst_23 = arith.constant dense<0.000000e+00> : vector<512xf32>
    %37 = vector.multi_reduction <add>, %36, %cst_23 [1] : vector<512x16xf32> to vector<512xf32>
    %38 = vector.shape_cast %37 : vector<512xf32> to vector<512x1xf32>
    %c0_24 = arith.constant 0 : index
    %c0_25 = arith.constant 0 : index
    %39 = vector.load %arg9[%c0_24, %c0_25] : memref<1x1xf32, #tpu.memory_space<vmem>>, vector<1x1xf32>
    %40 = vector.broadcast %39 : vector<1x1xf32> to vector<512x1xf32>
    %41 = arith.addf %38, %40 : vector<512x1xf32>
    %cst_26 = arith.constant 0.000000e+00 : f32
    %42 = vector.broadcast %cst_26 : f32 to vector<512x1xf32>
    %43 = arith.subf %42, %41 : vector<512x1xf32>
    %44 = math.exp %43 : vector<512x1xf32>
    %cst_27 = arith.constant 1.000000e+00 : f32
    %45 = vector.broadcast %cst_27 : f32 to vector<512x1xf32>
    %46 = arith.addf %45, %44 : vector<512x1xf32>
    %cst_28 = arith.constant 1.000000e+00 : f32
    %47 = vector.broadcast %cst_28 : f32 to vector<512x1xf32>
    %48 = arith.divf %47, %46 : vector<512x1xf32>
    %c0_29 = arith.constant 0 : index
    %c0_30 = arith.constant 0 : index
    %49 = vector.load %arg10[%c0_29, %c0_30] : memref<512x1xf32, #tpu.memory_space<vmem>>, vector<512x1xf32>
    tpu.vector_store %arg10[%c0_29, %c0_30], %48 {strides = array<i32>} : memref<512x1xf32, #tpu.memory_space<vmem>>, vector<512x1xf32>,
    return
  }
  func.func @transform_0(%arg0: i32) -> (i32, i32) {
    %c0_i32 = arith.constant 0 : i32
    %c0_i32_0 = arith.constant 0 : i32
    return %arg0, %c0_i32 : i32, i32
  }
  func.func @transform_1(%arg0: i32) -> (i32, i32) {
    %c0_i32 = arith.constant 0 : i32
    %c0_i32_0 = arith.constant 0 : i32
    %c0_i32_1 = arith.constant 0 : i32
    return %c0_i32, %c0_i32_0 : i32, i32
  }
  func.func @transform_2(%arg0: i32) -> (i32, i32) {
    %c0_i32 = arith.constant 0 : i32
    %c0_i32_0 = arith.constant 0 : i32
    %c0_i32_1 = arith.constant 0 : i32
    return %c0_i32, %c0_i32_0 : i32, i32
  }
  func.func @transform_3(%arg0: i32) -> (i32, i32) {
    %c0_i32 = arith.constant 0 : i32
    %c0_i32_0 = arith.constant 0 : i32
    %c0_i32_1 = arith.constant 0 : i32
    return %c0_i32, %c0_i32_0 : i32, i32
  }
  func.func @transform_4(%arg0: i32) -> (i32, i32) {
    %c0_i32 = arith.constant 0 : i32
    %c0_i32_0 = arith.constant 0 : i32
    %c0_i32_1 = arith.constant 0 : i32
    return %c0_i32, %c0_i32_0 : i32, i32
  }
  func.func @transform_5(%arg0: i32) -> (i32, i32) {
    %c0_i32 = arith.constant 0 : i32
    %c0_i32_0 = arith.constant 0 : i32
    %c0_i32_1 = arith.constant 0 : i32
    return %c0_i32, %c0_i32_0 : i32, i32
  }
  func.func @transform_6(%arg0: i32) -> (i32, i32) {
    %c0_i32 = arith.constant 0 : i32
    %c0_i32_0 = arith.constant 0 : i32
    %c0_i32_1 = arith.constant 0 : i32
    return %c0_i32, %c0_i32_0 : i32, i32
  }
  func.func @transform_7(%arg0: i32) -> (i32, i32) {
    %c0_i32 = arith.constant 0 : i32
    %c0_i32_0 = arith.constant 0 : i32
    %c0_i32_1 = arith.constant 0 : i32
    return %c0_i32, %c0_i32_0 : i32, i32
  }
  func.func @transform_8(%arg0: i32) -> (i32, i32) {
    %c0_i32 = arith.constant 0 : i32
    %c0_i32_0 = arith.constant 0 : i32
    %c0_i32_1 = arith.constant 0 : i32
    return %c0_i32, %c0_i32_0 : i32, i32
  }
  func.func @transform_9(%arg0: i32) -> (i32, i32) {
    %c0_i32 = arith.constant 0 : i32
    %c0_i32_0 = arith.constant 0 : i32
    return %arg0, %c0_i32 : i32, i32
  }
}

</mosaic_0001>

<llo_original>
// kernel: nn_classifier_forward.1
$region0: #{nn_classifier_forward.1}
  #allocation0 [shape = 'u32[]', space=smem, size = 0x4, offset = 0x4, fixed_abs, tag = 'smem constant byte address 0x4 - core index']
  #allocation1 [shape = 'u32[144,128]{1,0:T(1,128)}', space=vmem, size = 0x12000, scoped, tag = 'internal scratch']
  #allocation2 [shape = 'f32[1,1]{1,0:T(1,128)S(1)}', space=vmem, size = 0x200, scoped, tag = 'scoped memory for nn_classifier_forward.1']
  %s0 = inlined_call_operand.vmem [shape: f32[1024,32], index: 0, kind: input, shape index: {}]
  %s1 = inlined_call_operand.vmem [shape: bf16[32,64], index: 1, kind: input, shape index: {}]
  %s2 = inlined_call_operand.vmem [shape: f32[1,64], index: 2, kind: input, shape index: {}]
  %s3 = inlined_call_operand.vmem [shape: bf16[64,32], index: 3, kind: input, shape index: {}]
  %s4 = inlined_call_operand.vmem [shape: f32[1,32], index: 4, kind: input, shape index: {}]
  %s5 = inlined_call_operand.vmem [shape: bf16[32,16], index: 5, kind: input, shape index: {}]
  %s6 = inlined_call_operand.vmem [shape: f32[1,16], index: 6, kind: input, shape index: {}]
  %s7 = inlined_call_operand.vmem [shape: f32[1,16], index: 7, kind: input, shape index: {}]
  %s8 = inlined_call_operand.<no memory space> [shape: f32[1,1], index: 8, kind: input, shape index: {}]
  %s9 = inlined_call_operand.vmem [shape: f32[1024,1], index: 9, kind: output, shape index: {}]
  %s10 = sld [smem:[#allocation0]]
  $region69: #{nn_classifier_forward.1} parent=0
    _
  %s12 = ssub.s32 1, %s10
  %s13 = scalar_select 0, %s12, %s10
  %v14 = vstv %s8
  %15 = vst [vmem:[#allocation2] sm:$0x1] %v14
  loop: start=0, step=1, limit=4
  $region2: #{nn_classifier_forward.1} parent=0 // loop_pre_header
    _
  $region3: #{nn_classifier_forward.1} parent=0 // loop_header
    %s17 = sphi 0, %s21
    %p18 = scmp.ge.s32.totalorder %s17, 4
    %s27 = sphi 0, %s29
    %s30 = sphi 0, %s27
    %s31 = sphi 0, %s30
    %s47 = sphi 0, %s31
    %s51 = sphi 0, %s51
    %s53 = sphi 0, %s51
    %s54 = sphi 0, %s53
    %s68 = sphi 0, %s54
    %s72 = sphi 0, %s72
    %s74 = sphi 0, %s72
    %s75 = sphi 0, %s74
    %s89 = sphi 0, %s75
    %s93 = sphi 0, %s93
    %s95 = sphi 0, %s93
    %s96 = sphi 0, %s95
    %s110 = sphi 0, %s96
    %s114 = sphi 0, %s114
    %s116 = sphi 0, %s114
    %s117 = sphi 0, %s116
    %s131 = sphi 0, %s117
    %s135 = sphi 0, %s135
    %s137 = sphi 0, %s135
    %s138 = sphi 0, %s137
    %s152 = sphi 0, %s138
    %s156 = sphi 0, %s156
    %s158 = sphi 0, %s156
    %s159 = sphi 0, %s158
    %s173 = sphi 0, %s159
    %s177 = sphi 0, %s177
    %s179 = sphi 0, %s177
    %s180 = sphi 0, %s179
    %s194 = sphi 0, %s180
    %s198 = sphi 0, %s198
    %s200 = sphi 0, %s198
    %s201 = sphi 0, %s200
    %s215 = sphi 0, %s201
    %s221 = sphi 0, %s223
    %s224 = sphi 0, %s221
    %s225 = sphi 0, %s224
    %s241 = sphi 0, %s225
  $region4: #{nn_classifier_forward.1} parent=0 // loop_header_branch
    %20 = sbr.rel (%p18) target = $region8
  $region5: #{nn_classifier_forward.1} parent=0 // loop_body
    %s22 = ssub.s32 %s17, 1
    %s23 = ssub.s32 %s17, 2
    %s24 = sadd.s32 %s17, 1
    %s25 = ssub.s32 %s17, %s24
    %p26 = scmp.eq.s32.totalorder %s25, 0
    %s28 = sadd.s32 %s27, 1
    %s29 = scalar_select %p26, %s27, %s28
    %p32 = pneg %p26
    %p33 = scmp.eq.s32.totalorder %s17, 1
    %p34 = por %p32, %p33
    %p35 = scmp.ne.s32.totalorder %s27, %s30
    %p36 = scmp.eq.s32.totalorder %s17, 0
    %p37 = por %p35, %p36
    %p38 = scmp.ne.s32.totalorder %s27, %s30
    %p39 = scmp.eq.s32.totalorder %s22, 1
    %p40 = por %p38, %p39
    %p41 = scmp.ne.s32.totalorder %s30, %s31
    %p42 = scmp.eq.s32.totalorder %s22, 0
    %p43 = por %p41, %p42
    %p44 = scmp.ne.s32.totalorder %s30, %s31
    %p45 = scmp.eq.s32.totalorder %s23, 1
    %p46 = por %p44, %p45
    %p48 = scmp.ne.s32.totalorder %s31, %s47
    %p49 = scmp.eq.s32.totalorder %s23, 0
    %p50 = por %p48, %p49
    %s52 = sadd.s32 %s51, 1
    %p55 = scmp.eq.s32.totalorder %s17, 1
    %p56 = scmp.ne.s32.totalorder %s51, %s53
    %p57 = scmp.eq.s32.totalorder %s17, 0
    %p58 = por %p56, %p57
    %p59 = scmp.ne.s32.totalorder %s51, %s53
    %p60 = scmp.eq.s32.totalorder %s22, 1
    %p61 = por %p59, %p60
    %p62 = scmp.ne.s32.totalorder %s53, %s54
    %p63 = scmp.eq.s32.totalorder %s22, 0
    %p64 = por %p62, %p63
    %p65 = scmp.ne.s32.totalorder %s53, %s54
    %p66 = scmp.eq.s32.totalorder %s23, 1
    %p67 = por %p65, %p66
    %p69 = scmp.ne.s32.totalorder %s54, %s68
    %p70 = scmp.eq.s32.totalorder %s23, 0
    %p71 = por %p69, %p70
    %s73 = sadd.s32 %s72, 1
    %p76 = scmp.eq.s32.totalorder %s17, 1
    %p77 = scmp.ne.s32.totalorder %s72, %s74
    %p78 = scmp.eq.s32.totalorder %s17, 0
    %p79 = por %p77, %p78
    %p80 = scmp.ne.s32.totalorder %s72, %s74
    %p81 = scmp.eq.s32.totalorder %s22, 1
    %p82 = por %p80, %p81
    %p83 = scmp.ne.s32.totalorder %s74, %s75
    %p84 = scmp.eq.s32.totalorder %s22, 0
    %p85 = por %p83, %p84
    %p86 = scmp.ne.s32.totalorder %s74, %s75
    %p87 = scmp.eq.s32.totalorder %s23, 1
    %p88 = por %p86, %p87
    %p90 = scmp.ne.s32.totalorder %s75, %s89
    %p91 = scmp.eq.s32.totalorder %s23, 0
    %p92 = por %p90, %p91
    %s94 = sadd.s32 %s93, 1
    %p97 = scmp.eq.s32.totalorder %s17, 1
    %p98 = scmp.ne.s32.totalorder %s93, %s95
    %p99 = scmp.eq.s32.totalorder %s17, 0
    %p100 = por %p98, %p99
    %p101 = scmp.ne.s32.totalorder %s93, %s95
    %p102 = scmp.eq.s32.totalorder %s22, 1
    %p103 = por %p101, %p102
    %p104 = scmp.ne.s32.totalorder %s95, %s96
    %p105 = scmp.eq.s32.totalorder %s22, 0
    %p106 = por %p104, %p105
    %p107 = scmp.ne.s32.totalorder %s95, %s96
    %p108 = scmp.eq.s32.totalorder %s23, 1
    %p109 = por %p107, %p108
    %p111 = scmp.ne.s32.totalorder %s96, %s110
    %p112 = scmp.eq.s32.totalorder %s23, 0
    %p113 = por %p111, %p112
    %s115 = sadd.s32 %s114, 1
    %p118 = scmp.eq.s32.totalorder %s17, 1
    %p119 = scmp.ne.s32.totalorder %s114, %s116
    %p120 = scmp.eq.s32.totalorder %s17, 0
    %p121 = por %p119, %p120
    %p122 = scmp.ne.s32.totalorder %s114, %s116
    %p123 = scmp.eq.s32.totalorder %s22, 1
    %p124 = por %p122, %p123
    %p125 = scmp.ne.s32.totalorder %s116, %s117
    %p126 = scmp.eq.s32.totalorder %s22, 0
    %p127 = por %p125, %p126
    %p128 = scmp.ne.s32.totalorder %s116, %s117
    %p129 = scmp.eq.s32.totalorder %s23, 1
    %p130 = por %p128, %p129
    %p132 = scmp.ne.s32.totalorder %s117, %s131
    %p133 = scmp.eq.s32.totalorder %s23, 0
    %p134 = por %p132, %p133
    %s136 = sadd.s32 %s135, 1
    %p139 = scmp.eq.s32.totalorder %s17, 1
    %p140 = scmp.ne.s32.totalorder %s135, %s137
    %p141 = scmp.eq.s32.totalorder %s17, 0
    %p142 = por %p140, %p141
    %p143 = scmp.ne.s32.totalorder %s135, %s137
    %p144 = scmp.eq.s32.totalorder %s22, 1
    %p145 = por %p143, %p144
    %p146 = scmp.ne.s32.totalorder %s137, %s138
    %p147 = scmp.eq.s32.totalorder %s22, 0
    %p148 = por %p146, %p147
    %p149 = scmp.ne.s32.totalorder %s137, %s138
    %p150 = scmp.eq.s32.totalorder %s23, 1
    %p151 = por %p149, %p150
    %p153 = scmp.ne.s32.totalorder %s138, %s152
    %p154 = scmp.eq.s32.totalorder %s23, 0
    %p155 = por %p153, %p154
    %s157 = sadd.s32 %s156, 1
    %p160 = scmp.eq.s32.totalorder %s17, 1
    %p161 = scmp.ne.s32.totalorder %s156, %s158
    %p162 = scmp.eq.s32.totalorder %s17, 0
    %p163 = por %p161, %p162
    %p164 = scmp.ne.s32.totalorder %s156, %s158
    %p165 = scmp.eq.s32.totalorder %s22, 1
    %p166 = por %p164, %p165
    %p167 = scmp.ne.s32.totalorder %s158, %s159
    %p168 = scmp.eq.s32.totalorder %s22, 0
    %p169 = por %p167, %p168
    %p170 = scmp.ne.s32.totalorder %s158, %s159
    %p171 = scmp.eq.s32.totalorder %s23, 1
    %p172 = por %p170, %p171
    %p174 = scmp.ne.s32.totalorder %s159, %s173
    %p175 = scmp.eq.s32.totalorder %s23, 0
    %p176 = por %p174, %p175
    %s178 = sadd.s32 %s177, 1
    %p181 = scmp.eq.s32.totalorder %s17, 1
    %p182 = scmp.ne.s32.totalorder %s177, %s179
    %p183 = scmp.eq.s32.totalorder %s17, 0
    %p184 = por %p182, %p183
    %p185 = scmp.ne.s32.totalorder %s177, %s179
    %p186 = scmp.eq.s32.totalorder %s22, 1
    %p187 = por %p185, %p186
    %p188 = scmp.ne.s32.totalorder %s179, %s180
    %p189 = scmp.eq.s32.totalorder %s22, 0
    %p190 = por %p188, %p189
    %p191 = scmp.ne.s32.totalorder %s179, %s180
    %p192 = scmp.eq.s32.totalorder %s23, 1
    %p193 = por %p191, %p192
    %p195 = scmp.ne.s32.totalorder %s180, %s194
    %p196 = scmp.eq.s32.totalorder %s23, 0
    %p197 = por %p195, %p196
    %s199 = sadd.s32 %s198, 1
    %p202 = scmp.eq.s32.totalorder %s17, 1
    %p203 = scmp.ne.s32.totalorder %s198, %s200
    %p204 = scmp.eq.s32.totalorder %s17, 0
    %p205 = por %p203, %p204
    %p206 = scmp.ne.s32.totalorder %s198, %s200
    %p207 = scmp.eq.s32.totalorder %s22, 1
    %p208 = por %p206, %p207
    %p209 = scmp.ne.s32.totalorder %s200, %s201
    %p210 = scmp.eq.s32.totalorder %s22, 0
    %p211 = por %p209, %p210
    %p212 = scmp.ne.s32.totalorder %s200, %s201
    %p213 = scmp.eq.s32.totalorder %s23, 1
    %p214 = por %p212, %p213
    %p216 = scmp.ne.s32.totalorder %s201, %s215
    %p217 = scmp.eq.s32.totalorder %s23, 0
    %p218 = por %p216, %p217
    %s219 = ssub.s32 %s17, %s24
    %p220 = scmp.eq.s32.totalorder %s219, 0
    %s222 = sadd.s32 %s221, 1
    %s223 = scalar_select %p220, %s221, %s222
    %p226 = pneg %p220
    %p227 = scmp.eq.s32.totalorder %s17, 1
    %p228 = por %p226, %p227
    %p229 = scmp.ne.s32.totalorder %s221, %s224
    %p230 = scmp.eq.s32.totalorder %s17, 0
    %p231 = por %p229, %p230
    %p232 = scmp.ne.s32.totalorder %s221, %s224
    %p233 = scmp.eq.s32.totalorder %s22, 1
    %p234 = por %p232, %p233
    %p235 = scmp.ne.s32.totalorder %s224, %s225
    %p236 = scmp.eq.s32.totalorder %s22, 0
    %p237 = por %p235, %p236
    %p238 = scmp.ne.s32.totalorder %s224, %s225
    %p239 = scmp.eq.s32.totalorder %s23, 1
    %p240 = por %p238, %p239
    %p242 = scmp.ne.s32.totalorder %s225, %s241
    %p243 = scmp.eq.s32.totalorder %s23, 0
    %p244 = por %p242, %p243
    %p245 = scmp.le.s32.totalorder 1, %s17
    %p246 = scmp.lt.s32.totalorder %s17, 3
    %p247 = pnand %p245, %p246
    %p248 = pneg %p247
    // Predicated region
    $region9: #{nn_classifier_forward.1} parent=5 // pred_check
      _
    $region10: #{nn_classifier_forward.1} parent=5 // pred_check_branch
      %250 = sbr.rel (%p247) target = $region12
    $region11: #{nn_classifier_forward.1} parent=5 // pred_region
      %s251 = ssub.s32 %s17, 1
      // Predicated region
      $region13: #{nn_classifier_forward.1} parent=11 // pred_check
        %p252 = pneg %p64
      $region14: #{nn_classifier_forward.1} parent=11 // pred_check_branch
        %254 = sbr.rel (%p252) target = $region16
      $region15: #{nn_classifier_forward.1} parent=11 // pred_region
        _
      $region16: #{nn_classifier_forward.1} parent=11 // pred_fallthru
        _
      // Predicated region
      $region17: #{nn_classifier_forward.1} parent=11 // pred_check
        %p255 = pneg %p85
      $region18: #{nn_classifier_forward.1} parent=11 // pred_check_branch
        %257 = sbr.rel (%p255) target = $region20
      $region19: #{nn_classifier_forward.1} parent=11 // pred_region
        _
      $region20: #{nn_classifier_forward.1} parent=11 // pred_fallthru
        _
      // Predicated region
      $region21: #{nn_classifier_forward.1} parent=11 // pred_check
        %p258 = pneg %p106
      $region22: #{nn_classifier_forward.1} parent=11 // pred_check_branch
        %260 = sbr.rel (%p258) target = $region24
      $region23: #{nn_classifier_forward.1} parent=11 // pred_region
        _
      $region24: #{nn_classifier_forward.1} parent=11 // pred_fallthru
        _
      // Predicated region
      $region25: #{nn_classifier_forward.1} parent=11 // pred_check
        %p261 = pneg %p127
      $region26: #{nn_classifier_forward.1} parent=11 // pred_check_branch
        %263 = sbr.rel (%p261) target = $region28
      $region27: #{nn_classifier_forward.1} parent=11 // pred_region
        _
      $region28: #{nn_classifier_forward.1} parent=11 // pred_fallthru
        _
      // Predicated region
      $region29: #{nn_classifier_forward.1} parent=11 // pred_check
        %p264 = pneg %p148
      $region30: #{nn_classifier_forward.1} parent=11 // pred_check_branch
        %266 = sbr.rel (%p264) target = $region32
      $region31: #{nn_classifier_forward.1} parent=11 // pred_region
        _
      $region32: #{nn_classifier_forward.1} parent=11 // pred_fallthru
        _
      // Predicated region
      $region33: #{nn_classifier_forward.1} parent=11 // pred_check
        %p267 = pneg %p169
      $region34: #{nn_classifier_forward.1} parent=11 // pred_check_branch
        %269 = sbr.rel (%p267) target = $region36
      $region35: #{nn_classifier_forward.1} parent=11 // pred_region
        _
      $region36: #{nn_classifier_forward.1} parent=11 // pred_fallthru
        _
      // Predicated region
      $region37: #{nn_classifier_forward.1} parent=11 // pred_check
        %p270 = pneg %p190
      $region38: #{nn_classifier_forward.1} parent=11 // pred_check_branch
        %272 = sbr.rel (%p270) target = $region40
      $region39: #{nn_classifier_forward.1} parent=11 // pred_region
        _
      $region40: #{nn_classifier_forward.1} parent=11 // pred_fallthru
        _
      // Predicated region
      $region41: #{nn_classifier_forward.1} parent=11 // pred_check
        %p273 = pneg %p211
      $region42: #{nn_classifier_forward.1} parent=11 // pred_check_branch
        %275 = sbr.rel (%p273) target = $region44
      $region43: #{nn_classifier_forward.1} parent=11 // pred_region
        _
      $region44: #{nn_classifier_forward.1} parent=11 // pred_fallthru
        _
    $region12: #{nn_classifier_forward.1} parent=5 // pred_fallthru
      _
    %p276 = scmp.lt.s32.totalorder %s17, 2
    // Predicated region
    $region45: #{nn_classifier_forward.1} parent=5 // pred_check
      %p277 = pneg %p276
    $region46: #{nn_classifier_forward.1} parent=5 // pred_check_branch
      %279 = sbr.rel (%p277) target = $region48
    $region47: #{nn_classifier_forward.1} parent=5 // pred_region
      // Predicated region
      $region49: #{nn_classifier_forward.1} parent=47 // pred_check
        %p280 = pneg %p37
      $region50: #{nn_classifier_forward.1} parent=47 // pred_check_branch
        %282 = sbr.rel (%p280) target = $region52
      $region51: #{nn_classifier_forward.1} parent=47 // pred_region
        %s283 = smul.u32 64, %s17
        %p284 = scmp.lt.s32.totalorder %s283, 127
        %s285 = scalar_select %p284, %s283, 127
        %s286 = smul.addr %s285, 8
        %s287 = scalar_lea.vmem %s0, %s286
        %s288 = smul.u32 64, %s17
      $region52: #{nn_classifier_forward.1} parent=47 // pred_fallthru
        _
    $region48: #{nn_classifier_forward.1} parent=5 // pred_fallthru
      _
    %p289 = scmp.le.s32.totalorder 1, %s17
    %p290 = scmp.lt.s32.totalorder %s17, 3
    %p291 = pnand %p289, %p290
    %p292 = pneg %p291
    // Predicated region
    $region53: #{nn_classifier_forward.1} parent=5 // pred_check
      _
    $region54: #{nn_classifier_forward.1} parent=5 // pred_check_branch
      %294 = sbr.rel (%p291) target = $region56
    $region55: #{nn_classifier_forward.1} parent=5 // pred_region
      %s295 = ssub.s32 %s17, 1
      %s296 = smul.u32 64, %s22
      %p297 = scmp.lt.s32.totalorder %s296, 127
      %s298 = scalar_select %p297, %s296, 127
      %s299 = smul.addr %s298, 8
      %s300 = scalar_lea.vmem %s0, %s299
      %p301 = pneg %p43
      %p302 = pneg %p40
      %p303 = pneg %p64
      %p304 = pneg %p61
      %p305 = pneg %p85
      %p306 = pneg %p82
      %p307 = pneg %p106
      %p308 = pneg %p103
      %p309 = pneg %p127
      %p310 = pneg %p124
      %p311 = pneg %p148
      %p312 = pneg %p145
      %p313 = pneg %p169
      %p314 = pneg %p166
      %p315 = pneg %p190
      %p316 = pneg %p187
      %p317 = pneg %p211
      %p318 = pneg %p208
      %p319 = pneg %p237
      %p320 = pneg %p234
      %s321 = smul.u32 64, %s22
      %p322 = scmp.lt.s32.totalorder %s321, 127
      %s323 = scalar_select %p322, %s321, 127
      %s324 = smul.addr %s323, 8
      %s325 = scalar_lea.vmem %s9, %s324
      %s326 = smul.u32 64, %s22
      %p327 = scmp.lt.s32.totalorder %s326, 127
      %s328 = scalar_select %p327, %s326, 127
      %s329 = smul.addr %s328, 8
      %s330 = scalar_lea.vmem %s0, %s329
      %s331 = smul.u32 64, %s22
      %s332 = smul.u32 64, %s22
      %p333 = scmp.lt.s32.totalorder %s332, 127
      %s334 = scalar_select %p333, %s332, 127
      %s335 = smul.addr %s334, 8
      %s336 = scalar_lea.vmem %s9, %s335
      %s337 = smul.u32 64, %s22
      %v339 = vld [vmem:[%s330] sm:$0xff]
      %v340 = vld [vmem:[%s330 + $0x8] sm:$0xff]
      %v341 = vld [vmem:[%s330 + $0x10] sm:$0xff]
      %v342 = vld [vmem:[%s330 + $0x18] sm:$0xff]
      %v343 = vld [vmem:[%s330 + $0x20] sm:$0xff]
      %v344 = vld [vmem:[%s330 + $0x28] sm:$0xff]
      %v345 = vld [vmem:[%s330 + $0x30] sm:$0xff]
      %v346 = vld [vmem:[%s330 + $0x38] sm:$0xff]
      %v347 = vld [vmem:[%s330 + $0x40] sm:$0xff]
      %v348 = vld [vmem:[%s330 + $0x48] sm:$0xff]
      %v349 = vld [vmem:[%s330 + $0x50] sm:$0xff]
      %v350 = vld [vmem:[%s330 + $0x58] sm:$0xff]
      %v351 = vld [vmem:[%s330 + $0x60] sm:$0xff]
      %v352 = vld [vmem:[%s330 + $0x68] sm:$0xff]
      %v353 = vld [vmem:[%s330 + $0x70] sm:$0xff]
      %v354 = vld [vmem:[%s330 + $0x78] sm:$0xff]
      %v355 = vld [vmem:[%s330 + $0x80] sm:$0xff]
      %v356 = vld [vmem:[%s330 + $0x88] sm:$0xff]
      %v357 = vld [vmem:[%s330 + $0x90] sm:$0xff]
      %v358 = vld [vmem:[%s330 + $0x98] sm:$0xff]
      %v359 = vld [vmem:[%s330 + $0xa0] sm:$0xff]
      %v360 = vld [vmem:[%s330 + $0xa8] sm:$0xff]
      %v361 = vld [vmem:[%s330 + $0xb0] sm:$0xff]
      %v362 = vld [vmem:[%s330 + $0xb8] sm:$0xff]
      %v363 = vld [vmem:[%s330 + $0xc0] sm:$0xff]
      %v364 = vld [vmem:[%s330 + $0xc8] sm:$0xff]
      %v365 = vld [vmem:[%s330 + $0xd0] sm:$0xff]
      %v366 = vld [vmem:[%s330 + $0xd8] sm:$0xff]
      %v367 = vld [vmem:[%s330 + $0xe0] sm:$0xff]
      %v368 = vld [vmem:[%s330 + $0xe8] sm:$0xff]
      %v369 = vld [vmem:[%s330 + $0xf0] sm:$0xff]
      %v370 = vld [vmem:[%s330 + $0xf8] sm:$0xff]
      %v371 = vld [vmem:[%s330 + $0x100] sm:$0xff]
      %v372 = vld [vmem:[%s330 + $0x108] sm:$0xff]
      %v373 = vld [vmem:[%s330 + $0x110] sm:$0xff]
      %v374 = vld [vmem:[%s330 + $0x118] sm:$0xff]
      %v375 = vld [vmem:[%s330 + $0x120] sm:$0xff]
      %v376 = vld [vmem:[%s330 + $0x128] sm:$0xff]
      %v377 = vld [vmem:[%s330 + $0x130] sm:$0xff]
      %v378 = vld [vmem:[%s330 + $0x138] sm:$0xff]
      %v379 = vld [vmem:[%s330 + $0x140] sm:$0xff]
      %v380 = vld [vmem:[%s330 + $0x148] sm:$0xff]
      %v381 = vld [vmem:[%s330 + $0x150] sm:$0xff]
      %v382 = vld [vmem:[%s330 + $0x158] sm:$0xff]
      %v383 = vld [vmem:[%s330 + $0x160] sm:$0xff]
      %v384 = vld [vmem:[%s330 + $0x168] sm:$0xff]
      %v385 = vld [vmem:[%s330 + $0x170] sm:$0xff]
      %v386 = vld [vmem:[%s330 + $0x178] sm:$0xff]
      %v387 = vld [vmem:[%s330 + $0x180] sm:$0xff]
      %v388 = vld [vmem:[%s330 + $0x188] sm:$0xff]
      %v389 = vld [vmem:[%s330 + $0x190] sm:$0xff]
      %v390 = vld [vmem:[%s330 + $0x198] sm:$0xff]
      %v391 = vld [vmem:[%s330 + $0x1a0] sm:$0xff]
      %v392 = vld [vmem:[%s330 + $0x1a8] sm:$0xff]
      %v393 = vld [vmem:[%s330 + $0x1b0] sm:$0xff]
      %v394 = vld [vmem:[%s330 + $0x1b8] sm:$0xff]
      %v395 = vld [vmem:[%s330 + $0x1c0] sm:$0xff]
      %v396 = vld [vmem:[%s330 + $0x1c8] sm:$0xff]
      %v397 = vld [vmem:[%s330 + $0x1d0] sm:$0xff]
      %v398 = vld [vmem:[%s330 + $0x1d8] sm:$0xff]
      %v399 = vld [vmem:[%s330 + $0x1e0] sm:$0xff]
      %v400 = vld [vmem:[%s330 + $0x1e8] sm:$0xff]
      %v401 = vld [vmem:[%s330 + $0x1f0] sm:$0xff]
      %v402 = vld [vmem:[%s330 + $0x1f8] sm:$0xff]
      %v403 = vpack.c.bf16 %v340, %v339
      %v404 = vpack.c.bf16 %v342, %v341
      %v405 = vpack.c.bf16 %v344, %v343
      %v406 = vpack.c.bf16 %v346, %v345
      %v407 = vpack.c.bf16 %v348, %v347
      %v408 = vpack.c.bf16 %v350, %v349
      %v409 = vpack.c.bf16 %v352, %v351
      %v410 = vpack.c.bf16 %v354, %v353
      %v411 = vpack.c.bf16 %v356, %v355
      %v412 = vpack.c.bf16 %v358, %v357
      %v413 = vpack.c.bf16 %v360, %v359
      %v414 = vpack.c.bf16 %v362, %v361
      %v415 = vpack.c.bf16 %v364, %v363
      %v416 = vpack.c.bf16 %v366, %v365
      %v417 = vpack.c.bf16 %v368, %v367
      %v418 = vpack.c.bf16 %v370, %v369
      %v419 = vpack.c.bf16 %v372, %v371
      %v420 = vpack.c.bf16 %v374, %v373
      %v421 = vpack.c.bf16 %v376, %v375
      %v422 = vpack.c.bf16 %v378, %v377
      %v423 = vpack.c.bf16 %v380, %v379
      %v424 = vpack.c.bf16 %v382, %v381
      %v425 = vpack.c.bf16 %v384, %v383
      %v426 = vpack.c.bf16 %v386, %v385
      %v427 = vpack.c.bf16 %v388, %v387
      %v428 = vpack.c.bf16 %v390, %v389
      %v429 = vpack.c.bf16 %v392, %v391
      %v430 = vpack.c.bf16 %v394, %v393
      %v431 = vpack.c.bf16 %v396, %v395
      %v432 = vpack.c.bf16 %v398, %v397
      %v433 = vpack.c.bf16 %v400, %v399
      %v434 = vpack.c.bf16 %v402, %v401
      %v435 = vld [vmem:[%s1] sm:$0xf]
      %v436 = vld [vmem:[%s1 + $0x4] sm:$0xf]
      %v437 = vld [vmem:[%s1 + $0x8] sm:$0xf]
      %v438 = vld [vmem:[%s1 + $0xc] sm:$0xf]
      %v439 = vld [vmem:[%s2] sm:$0x1]
      %v441 = vlaneseq
      %v442 = vshrl.u32 %v441, 7
      %v443 = vsub.s32 0, %v442
      %v444 = vrot.slane %v439, %v443
      %v450 = vunpack.c.l.b16 %v435
      %v451 = vunpack.c.l.b16 %v436
      %v452 = vunpack.c.l.b16 %v437
      %v453 = vunpack.c.l.b16 %v438
      %v454 = vpack.c.b16 %v451, %v450
      %v455 = vpack.c.b16 %v453, %v452
      %vm458 = vcmask 261120
      %v460 = vsel %vm458, %v403, 0
      %v463 = vsel %vm458, %v404, 0
      %v466 = vsel %vm458, %v405, 0
      %v469 = vsel %vm458, %v406, 0
      %v472 = vsel %vm458, %v407, 0
      %v475 = vsel %vm458, %v408, 0
      %v478 = vsel %vm458, %v409, 0
      %v481 = vsel %vm458, %v410, 0
      %v484 = vsel %vm458, %v411, 0
      %v487 = vsel %vm458, %v412, 0
      %v490 = vsel %vm458, %v413, 0
      %v493 = vsel %vm458, %v414, 0
      %v496 = vsel %vm458, %v415, 0
      %v499 = vsel %vm458, %v416, 0
      %v502 = vsel %vm458, %v417, 0
      %v505 = vsel %vm458, %v418, 0
      %v508 = vsel %vm458, %v419, 0
      %v511 = vsel %vm458, %v420, 0
      %v514 = vsel %vm458, %v421, 0
      %v517 = vsel %vm458, %v422, 0
      %v520 = vsel %vm458, %v423, 0
      %v523 = vsel %vm458, %v424, 0
      %v526 = vsel %vm458, %v425, 0
      %v529 = vsel %vm458, %v426, 0
      %v532 = vsel %vm458, %v427, 0
      %v535 = vsel %vm458, %v428, 0
      %v538 = vsel %vm458, %v429, 0
      %v541 = vsel %vm458, %v430, 0
      %v544 = vsel %vm458, %v431, 0
      %v547 = vsel %vm458, %v432, 0
      %v550 = vsel %vm458, %v433, 0
      %v553 = vsel %vm458, %v434, 0
      %555 = vmatprep.subr.bf16.mxu0 0
      %556 = vmatpush1.bf16.msra.mxu0 %v454
      %557 = vmatprep.subr.bf16.mxu0 0
      %558 = vmatpush1.bf16.msra.mxu0 %v455
      %559 = vmatprep.subr.bf16.mxu0 0
      %560 = vmatpush1.bf16.msra.mxu0 0
      %561 = vmatprep.subr.bf16.mxu0 0
      %562 = vmatpush1.bf16.msra.mxu0 0
      %563 = vmatprep.subr.bf16.mxu0 0
      %564 = vmatpush1.bf16.msra.mxu0 0
      %565 = vmatprep.subr.bf16.mxu0 0
      %566 = vmatpush1.bf16.msra.mxu0 0
      %567 = vmatprep.subr.bf16.mxu0 0
      %568 = vmatpush1.bf16.msra.mxu0 0
      %569 = vmatprep.subr.bf16.mxu0 0
      %570 = vmatpush1.bf16.msra.mxu0 0
      %571 = vmatprep.subr.bf16.mxu0 0
      %572 = vmatpush1.bf16.msra.mxu0 0
      %573 = vmatprep.subr.bf16.mxu0 0
      %574 = vmatpush1.bf16.msra.mxu0 0
      %575 = vmatprep.subr.bf16.mxu0 0
      %576 = vmatpush1.bf16.msra.mxu0 0
      %577 = vmatprep.subr.bf16.mxu0 0
      %578 = vmatpush1.bf16.msra.mxu0 0
      %579 = vmatprep.subr.bf16.mxu0 0
      %580 = vmatpush1.bf16.msra.mxu0 0
      %581 = vmatprep.subr.bf16.mxu0 0
      %582 = vmatpush1.bf16.msra.mxu0 0
      %583 = vmatprep.subr.bf16.mxu0 0
      %584 = vmatpush1.bf16.msra.mxu0 0
      %585 = vmatprep.subr.bf16.mxu0 0
      %586 = vmatpush1.bf16.msra.mxu0 0
      %587 = vmatprep.mubr.bf16.mxu0 0
      %588 = vmatmul.mubr.bf16.gmra.mrb[0].mxu0 %v460
      %v589 = vpop.f32.mrb[0].mxu0
      %v590 = vadd.f32 %v444, %v589
      %v591 = vpop.f32.mrb[0].mxu0
      %v592 = vpop.f32.mrb[0].mxu0
      %v593 = vadd.f32 %v444, %v592
      %v594 = vpop.f32.mrb[0].mxu0
      %595 = vmatprep.mubr.bf16.mxu0 0
      %596 = vmatmul.mubr.bf16.gmra.mrb[0].mxu0 %v463
      %v597 = vpop.f32.mrb[0].mxu0
      %v598 = vadd.f32 %v444, %v597
      %v599 = vpop.f32.mrb[0].mxu0
      %v600 = vpop.f32.mrb[0].mxu0
      %v601 = vadd.f32 %v444, %v600
      %v602 = vpop.f32.mrb[0].mxu0
      %603 = vmatprep.mubr.bf16.mxu0 0
      %604 = vmatmul.mubr.bf16.gmra.mrb[0].mxu0 %v466
      %v605 = vpop.f32.mrb[0].mxu0
      %v606 = vadd.f32 %v444, %v605
      %v607 = vpop.f32.mrb[0].mxu0
      %v608 = vpop.f32.mrb[0].mxu0
      %v609 = vadd.f32 %v444, %v608
      %v610 = vpop.f32.mrb[0].mxu0
      %611 = vmatprep.mubr.bf16.mxu0 0
      %612 = vmatmul.mubr.bf16.gmra.mrb[0].mxu0 %v469
      %v613 = vpop.f32.mrb[0].mxu0
      %v614 = vadd.f32 %v444, %v613
      %v615 = vpop.f32.mrb[0].mxu0
      %v616 = vpop.f32.mrb[0].mxu0
      %v617 = vadd.f32 %v444, %v616
      %v618 = vpop.f32.mrb[0].mxu0
      %619 = vmatprep.mubr.bf16.mxu0 0
      %620 = vmatmul.mubr.bf16.gmra.mrb[0].mxu0 %v472
      %v621 = vpop.f32.mrb[0].mxu0
      %v622 = vadd.f32 %v444, %v621
      %v623 = vpop.f32.mrb[0].mxu0
      %v624 = vpop.f32.mrb[0].mxu0
      %v625 = vadd.f32 %v444, %v624
      %v626 = vpop.f32.mrb[0].mxu0
      %627 = vmatprep.mubr.bf16.mxu0 0
      %628 = vmatmul.mubr.bf16.gmra.mrb[0].mxu0 %v475
      %v629 = vpop.f32.mrb[0].mxu0
      %v630 = vadd.f32 %v444, %v629
      %v631 = vpop.f32.mrb[0].mxu0
      %v632 = vpop.f32.mrb[0].mxu0
      %v633 = vadd.f32 %v444, %v632
      %v634 = vpop.f32.mrb[0].mxu0
      %635 = vmatprep.mubr.bf16.mxu0 0
      %636 = vmatmul.mubr.bf16.gmra.mrb[0].mxu0 %v478
      %v637 = vpop.f32.mrb[0].mxu0
      %v638 = vadd.f32 %v444, %v637
      %v639 = vpop.f32.mrb[0].mxu0
      %v640 = vpop.f32.mrb[0].mxu0
      %v641 = vadd.f32 %v444, %v640
      %v642 = vpop.f32.mrb[0].mxu0
      %643 = vmatprep.mubr.bf16.mxu0 0
      %644 = vmatmul.mubr.bf16.gmra.mrb[0].mxu0 %v481
      %v645 = vpop.f32.mrb[0].mxu0
      %v646 = vadd.f32 %v444, %v645
      %v647 = vpop.f32.mrb[0].mxu0
      %v648 = vpop.f32.mrb[0].mxu0
      %v649 = vadd.f32 %v444, %v648
      %v650 = vpop.f32.mrb[0].mxu0
      %651 = vmatprep.mubr.bf16.mxu0 0
      %652 = vmatmul.mubr.bf16.gmra.mrb[0].mxu0 %v484
      %v653 = vpop.f32.mrb[0].mxu0
      %v654 = vadd.f32 %v444, %v653
      %v655 = vpop.f32.mrb[0].mxu0
      %v656 = vpop.f32.mrb[0].mxu0
      %v657 = vadd.f32 %v444, %v656
      %v658 = vpop.f32.mrb[0].mxu0
      %659 = vmatprep.mubr.bf16.mxu0 0
      %660 = vmatmul.mubr.bf16.gmra.mrb[0].mxu0 %v487
      %v661 = vpop.f32.mrb[0].mxu0
      %v662 = vadd.f32 %v444, %v661
      %v663 = vpop.f32.mrb[0].mxu0
      %v664 = vpop.f32.mrb[0].mxu0
      %v665 = vadd.f32 %v444, %v664
      %v666 = vpop.f32.mrb[0].mxu0
      %667 = vmatprep.mubr.bf16.mxu0 0
      %668 = vmatmul.mubr.bf16.gmra.mrb[0].mxu0 %v490
      %v669 = vpop.f32.mrb[0].mxu0
      %v670 = vadd.f32 %v444, %v669
      %v671 = vpop.f32.mrb[0].mxu0
      %v672 = vpop.f32.mrb[0].mxu0
      %v673 = vadd.f32 %v444, %v672
      %v674 = vpop.f32.mrb[0].mxu0
      %675 = vmatprep.mubr.bf16.mxu0 0
      %676 = vmatmul.mubr.bf16.gmra.mrb[0].mxu0 %v493
      %v677 = vpop.f32.mrb[0].mxu0
      %v678 = vadd.f32 %v444, %v677
      %v679 = vpop.f32.mrb[0].mxu0
      %v680 = vpop.f32.mrb[0].mxu0
      %v681 = vadd.f32 %v444, %v680
      %v682 = vpop.f32.mrb[0].mxu0
      %683 = vmatprep.mubr.bf16.mxu0 0
      %684 = vmatmul.mubr.bf16.gmra.mrb[0].mxu0 %v496
      %v685 = vpop.f32.mrb[0].mxu0
      %v686 = vadd.f32 %v444, %v685
      %v687 = vpop.f32.mrb[0].mxu0
      %v688 = vpop.f32.mrb[0].mxu0
      %v689 = vadd.f32 %v444, %v688
      %v690 = vpop.f32.mrb[0].mxu0
      %691 = vmatprep.mubr.bf16.mxu0 0
      %692 = vmatmul.mubr.bf16.gmra.mrb[0].mxu0 %v499
      %v693 = vpop.f32.mrb[0].mxu0
      %v694 = vadd.f32 %v444, %v693
      %v695 = vpop.f32.mrb[0].mxu0
      %v696 = vpop.f32.mrb[0].mxu0
      %v697 = vadd.f32 %v444, %v696
      %v698 = vpop.f32.mrb[0].mxu0
      %699 = vmatprep.mubr.bf16.mxu0 0
      %700 = vmatmul.mubr.bf16.gmra.mrb[0].mxu0 %v502
      %v701 = vpop.f32.mrb[0].mxu0
      %v702 = vadd.f32 %v444, %v701
      %v703 = vpop.f32.mrb[0].mxu0
      %v704 = vpop.f32.mrb[0].mxu0
      %v705 = vadd.f32 %v444, %v704
      %v706 = vpop.f32.mrb[0].mxu0
      %707 = vmatprep.mubr.bf16.mxu0 0
      %708 = vmatmul.mubr.bf16.gmra.mrb[0].mxu0 %v505
      %v709 = vpop.f32.mrb[0].mxu0
      %v710 = vadd.f32 %v444, %v709
      %v711 = vpop.f32.mrb[0].mxu0
      %v712 = vpop.f32.mrb[0].mxu0
      %v713 = vadd.f32 %v444, %v712
      %v714 = vpop.f32.mrb[0].mxu0
      %715 = vmatprep.mubr.bf16.mxu0 0
      %716 = vmatmul.mubr.bf16.gmra.mrb[0].mxu0 %v508
      %v717 = vpop.f32.mrb[0].mxu0
      %v718 = vadd.f32 %v444, %v717
      %v719 = vpop.f32.mrb[0].mxu0
      %v720 = vpop.f32.mrb[0].mxu0
      %v721 = vadd.f32 %v444, %v720
      %v722 = vpop.f32.mrb[0].mxu0
      %723 = vmatprep.mubr.bf16.mxu0 0
      %724 = vmatmul.mubr.bf16.gmra.mrb[0].mxu0 %v511
      %v725 = vpop.f32.mrb[0].mxu0
      %v726 = vadd.f32 %v444, %v725
      %v727 = vpop.f32.mrb[0].mxu0
      %v728 = vpop.f32.mrb[0].mxu0
      %v729 = vadd.f32 %v444, %v728
      %v730 = vpop.f32.mrb[0].mxu0
      %731 = vmatprep.mubr.bf16.mxu0 0
      %732 = vmatmul.mubr.bf16.gmra.mrb[0].mxu0 %v514
      %v733 = vpop.f32.mrb[0].mxu0
      %v734 = vadd.f32 %v444, %v733
      %v735 = vpop.f32.mrb[0].mxu0
      %v736 = vpop.f32.mrb[0].mxu0
      %v737 = vadd.f32 %v444, %v736
      %v738 = vpop.f32.mrb[0].mxu0
      %739 = vmatprep.mubr.bf16.mxu0 0
      %740 = vmatmul.mubr.bf16.gmra.mrb[0].mxu0 %v517
      %v741 = vpop.f32.mrb[0].mxu0
      %v742 = vadd.f32 %v444, %v741
      %v743 = vpop.f32.mrb[0].mxu0
      %v744 = vpop.f32.mrb[0].mxu0
      %v745 = vadd.f32 %v444, %v744
      %v746 = vpop.f32.mrb[0].mxu0
      %747 = vmatprep.mubr.bf16.mxu0 0
      %748 = vmatmul.mubr.bf16.gmra.mrb[0].mxu0 %v520
      %v749 = vpop.f32.mrb[0].mxu0
      %v750 = vadd.f32 %v444, %v749
      %v751 = vpop.f32.mrb[0].mxu0
      %v752 = vpop.f32.mrb[0].mxu0
      %v753 = vadd.f32 %v444, %v752
      %v754 = vpop.f32.mrb[0].mxu0
      %755 = vmatprep.mubr.bf16.mxu0 0
      %756 = vmatmul.mubr.bf16.gmra.mrb[0].mxu0 %v523
      %v757 = vpop.f32.mrb[0].mxu0
      %v758 = vadd.f32 %v444, %v757
      %v759 = vpop.f32.mrb[0].mxu0
      %v760 = vpop.f32.mrb[0].mxu0
      %v761 = vadd.f32 %v444, %v760
      %v762 = vpop.f32.mrb[0].mxu0
      %763 = vmatprep.mubr.bf16.mxu0 0
      %764 = vmatmul.mubr.bf16.gmra.mrb[0].mxu0 %v526
      %v765 = vpop.f32.mrb[0].mxu0
      %v766 = vadd.f32 %v444, %v765
      %v767 = vpop.f32.mrb[0].mxu0
      %v768 = vpop.f32.mrb[0].mxu0
      %v769 = vadd.f32 %v444, %v768
      %v770 = vpop.f32.mrb[0].mxu0
      %771 = vmatprep.mubr.bf16.mxu0 0
      %772 = vmatmul.mubr.bf16.gmra.mrb[0].mxu0 %v529
      %v773 = vpop.f32.mrb[0].mxu0
      %v774 = vadd.f32 %v444, %v773
      %v775 = vpop.f32.mrb[0].mxu0
      %v776 = vpop.f32.mrb[0].mxu0
      %v777 = vadd.f32 %v444, %v776
      %v778 = vpop.f32.mrb[0].mxu0
      %779 = vmatprep.mubr.bf16.mxu0 0
      %780 = vmatmul.mubr.bf16.gmra.mrb[0].mxu0 %v532
      %v781 = vpop.f32.mrb[0].mxu0
      %v782 = vadd.f32 %v444, %v781
      %v783 = vpop.f32.mrb[0].mxu0
      %v784 = vpop.f32.mrb[0].mxu0
      %v785 = vadd.f32 %v444, %v784
      %v786 = vpop.f32.mrb[0].mxu0
      %787 = vmatprep.mubr.bf16.mxu0 0
      %788 = vmatmul.mubr.bf16.gmra.mrb[0].mxu0 %v535
      %v789 = vpop.f32.mrb[0].mxu0
      %v790 = vadd.f32 %v444, %v789
      %v791 = vpop.f32.mrb[0].mxu0
      %v792 = vpop.f32.mrb[0].mxu0
      %v793 = vadd.f32 %v444, %v792
      %v794 = vpop.f32.mrb[0].mxu0
      %795 = vmatprep.mubr.bf16.mxu0 0
      %796 = vmatmul.mubr.bf16.gmra.mrb[0].mxu0 %v538
      %v797 = vpop.f32.mrb[0].mxu0
      %v798 = vadd.f32 %v444, %v797
      %v799 = vpop.f32.mrb[0].mxu0
      %v800 = vpop.f32.mrb[0].mxu0
      %v801 = vadd.f32 %v444, %v800
      %v802 = vpop.f32.mrb[0].mxu0
      %803 = vmatprep.mubr.bf16.mxu0 0
      %804 = vmatmul.mubr.bf16.gmra.mrb[0].mxu0 %v541
      %v805 = vpop.f32.mrb[0].mxu0
      %v806 = vadd.f32 %v444, %v805
      %v807 = vpop.f32.mrb[0].mxu0
      %v808 = vpop.f32.mrb[0].mxu0
      %v809 = vadd.f32 %v444, %v808
      %v810 = vpop.f32.mrb[0].mxu0
      %811 = vmatprep.mubr.bf16.mxu0 0
      %812 = vmatmul.mubr.bf16.gmra.mrb[0].mxu0 %v544
      %v813 = vpop.f32.mrb[0].mxu0
      %v814 = vadd.f32 %v444, %v813
      %v815 = vpop.f32.mrb[0].mxu0
      %v816 = vpop.f32.mrb[0].mxu0
      %v817 = vadd.f32 %v444, %v816
      %v818 = vpop.f32.mrb[0].mxu0
      %819 = vmatprep.mubr.bf16.mxu0 0
      %820 = vmatmul.mubr.bf16.gmra.mrb[0].mxu0 %v547
      %v821 = vpop.f32.mrb[0].mxu0
      %v822 = vadd.f32 %v444, %v821
      %v823 = vpop.f32.mrb[0].mxu0
      %v824 = vpop.f32.mrb[0].mxu0
      %v825 = vadd.f32 %v444, %v824
      %v826 = vpop.f32.mrb[0].mxu0
      %827 = vmatprep.mubr.bf16.mxu0 0
      %828 = vmatmul.mubr.bf16.gmra.mrb[0].mxu0 %v550
      %v829 = vpop.f32.mrb[0].mxu0
      %v830 = vadd.f32 %v444, %v829
      %v831 = vpop.f32.mrb[0].mxu0
      %v832 = vpop.f32.mrb[0].mxu0
      %v833 = vadd.f32 %v444, %v832
      %v834 = vpop.f32.mrb[0].mxu0
      %835 = vmatprep.mubr.bf16.mxu0 0
      %836 = vmatmul.mubr.bf16.gmra.mrb[0].mxu0 %v553
      %v837 = vpop.f32.mrb[0].mxu0
      %v838 = vadd.f32 %v444, %v837
      %v839 = vpop.f32.mrb[0].mxu0
      %v840 = vpop.f32.mrb[0].mxu0
      %v841 = vadd.f32 %v444, %v840
      %v842 = vpop.f32.mrb[0].mxu0
      %843 = vdwg.mxu0
      %vm844 = vcmp.gt.f32.partialorder %v590, 0.0
      %vm845 = vcmp.gt.f32.partialorder %v593, 0.0
      %vm846 = vcmp.gt.f32.partialorder %v598, 0.0
      %vm847 = vcmp.gt.f32.partialorder %v601, 0.0
      %vm848 = vcmp.gt.f32.partialorder %v606, 0.0
      %vm849 = vcmp.gt.f32.partialorder %v609, 0.0
      %vm850 = vcmp.gt.f32.partialorder %v614, 0.0
      %vm851 = vcmp.gt.f32.partialorder %v617, 0.0
      %vm852 = vcmp.gt.f32.partialorder %v622, 0.0
      %vm853 = vcmp.gt.f32.partialorder %v625, 0.0
      %vm854 = vcmp.gt.f32.partialorder %v630, 0.0
      %vm855 = vcmp.gt.f32.partialorder %v633, 0.0
      %vm856 = vcmp.gt.f32.partialorder %v638, 0.0
      %vm857 = vcmp.gt.f32.partialorder %v641, 0.0
      %vm858 = vcmp.gt.f32.partialorder %v646, 0.0
      %vm859 = vcmp.gt.f32.partialorder %v649, 0.0
      %vm860 = vcmp.gt.f32.partialorder %v654, 0.0
      %vm861 = vcmp.gt.f32.partialorder %v657, 0.0
      %vm862 = vcmp.gt.f32.partialorder %v662, 0.0
      %vm863 = vcmp.gt.f32.partialorder %v665, 0.0
      %vm864 = vcmp.gt.f32.partialorder %v670, 0.0
      %vm865 = vcmp.gt.f32.partialorder %v673, 0.0
      %vm866 = vcmp.gt.f32.partialorder %v678, 0.0
      %vm867 = vcmp.gt.f32.partialorder %v681, 0.0
      %vm868 = vcmp.gt.f32.partialorder %v686, 0.0
      %vm869 = vcmp.gt.f32.partialorder %v689, 0.0
      %vm870 = vcmp.gt.f32.partialorder %v694, 0.0
      %vm871 = vcmp.gt.f32.partialorder %v697, 0.0
      %vm872 = vcmp.gt.f32.partialorder %v702, 0.0
      %vm873 = vcmp.gt.f32.partialorder %v705, 0.0
      %vm874 = vcmp.gt.f32.partialorder %v710, 0.0
      %vm875 = vcmp.gt.f32.partialorder %v713, 0.0
      %vm876 = vcmp.gt.f32.partialorder %v718, 0.0
      %vm877 = vcmp.gt.f32.partialorder %v721, 0.0
      %vm878 = vcmp.gt.f32.partialorder %v726, 0.0
      %vm879 = vcmp.gt.f32.partialorder %v729, 0.0
      %vm880 = vcmp.gt.f32.partialorder %v734, 0.0
      %vm881 = vcmp.gt.f32.partialorder %v737, 0.0
      %vm882 = vcmp.gt.f32.partialorder %v742, 0.0
      %vm883 = vcmp.gt.f32.partialorder %v745, 0.0
      %vm884 = vcmp.gt.f32.partialorder %v750, 0.0
      %vm885 = vcmp.gt.f32.partialorder %v753, 0.0
      %vm886 = vcmp.gt.f32.partialorder %v758, 0.0
      %vm887 = vcmp.gt.f32.partialorder %v761, 0.0
      %vm888 = vcmp.gt.f32.partialorder %v766, 0.0
      %vm889 = vcmp.gt.f32.partialorder %v769, 0.0
      %vm890 = vcmp.gt.f32.partialorder %v774, 0.0
      %vm891 = vcmp.gt.f32.partialorder %v777, 0.0
      %vm892 = vcmp.gt.f32.partialorder %v782, 0.0
      %vm893 = vcmp.gt.f32.partialorder %v785, 0.0
      %vm894 = vcmp.gt.f32.partialorder %v790, 0.0
      %vm895 = vcmp.gt.f32.partialorder %v793, 0.0
      %vm896 = vcmp.gt.f32.partialorder %v798, 0.0
      %vm897 = vcmp.gt.f32.partialorder %v801, 0.0
      %vm898 = vcmp.gt.f32.partialorder %v806, 0.0
      %vm899 = vcmp.gt.f32.partialorder %v809, 0.0
      %vm900 = vcmp.gt.f32.partialorder %v814, 0.0
      %vm901 = vcmp.gt.f32.partialorder %v817, 0.0
      %vm902 = vcmp.gt.f32.partialorder %v822, 0.0
      %vm903 = vcmp.gt.f32.partialorder %v825, 0.0
      %vm904 = vcmp.gt.f32.partialorder %v830, 0.0
      %vm905 = vcmp.gt.f32.partialorder %v833, 0.0
      %vm906 = vcmp.gt.f32.partialorder %v838, 0.0
      %vm907 = vcmp.gt.f32.partialorder %v841, 0.0
      %v908 = vmul.f32 %v590, 0.1
      %v909 = vmul.f32 %v593, 0.1
      %v910 = vmul.f32 %v598, 0.1
      %v911 = vmul.f32 %v601, 0.1
      %v912 = vmul.f32 %v606, 0.1
      %v913 = vmul.f32 %v609, 0.1
      %v914 = vmul.f32 %v614, 0.1
      %v915 = vmul.f32 %v617, 0.1
      %v916 = vmul.f32 %v622, 0.1
      %v917 = vmul.f32 %v625, 0.1
      %v918 = vmul.f32 %v630, 0.1
      %v919 = vmul.f32 %v633, 0.1
      %v920 = vmul.f32 %v638, 0.1
      %v921 = vmul.f32 %v641, 0.1
      %v922 = vmul.f32 %v646, 0.1
      %v923 = vmul.f32 %v649, 0.1
      %v924 = vmul.f32 %v654, 0.1
      %v925 = vmul.f32 %v657, 0.1
      %v926 = vmul.f32 %v662, 0.1
      %v927 = vmul.f32 %v665, 0.1
      %v928 = vmul.f32 %v670, 0.1
      %v929 = vmul.f32 %v673, 0.1
      %v930 = vmul.f32 %v678, 0.1
      %v931 = vmul.f32 %v681, 0.1
      %v932 = vmul.f32 %v686, 0.1
      %v933 = vmul.f32 %v689, 0.1
      %v934 = vmul.f32 %v694, 0.1
      %v935 = vmul.f32 %v697, 0.1
      %v936 = vmul.f32 %v702, 0.1
      %v937 = vmul.f32 %v705, 0.1
      %v938 = vmul.f32 %v710, 0.1
      %v939 = vmul.f32 %v713, 0.1
      %v940 = vmul.f32 %v718, 0.1
      %v941 = vmul.f32 %v721, 0.1
      %v942 = vmul.f32 %v726, 0.1
      %v943 = vmul.f32 %v729, 0.1
      %v944 = vmul.f32 %v734, 0.1
      %v945 = vmul.f32 %v737, 0.1
      %v946 = vmul.f32 %v742, 0.1
      %v947 = vmul.f32 %v745, 0.1
      %v948 = vmul.f32 %v750, 0.1
      %v949 = vmul.f32 %v753, 0.1
      %v950 = vmul.f32 %v758, 0.1
      %v951 = vmul.f32 %v761, 0.1
      %v952 = vmul.f32 %v766, 0.1
      %v953 = vmul.f32 %v769, 0.1
      %v954 = vmul.f32 %v774, 0.1
      %v955 = vmul.f32 %v777, 0.1
      %v956 = vmul.f32 %v782, 0.1
      %v957 = vmul.f32 %v785, 0.1
      %v958 = vmul.f32 %v790, 0.1
      %v959 = vmul.f32 %v793, 0.1
      %v960 = vmul.f32 %v798, 0.1
      %v961 = vmul.f32 %v801, 0.1
      %v962 = vmul.f32 %v806, 0.1
      %v963 = vmul.f32 %v809, 0.1
      %v964 = vmul.f32 %v814, 0.1
      %v965 = vmul.f32 %v817, 0.1
      %v966 = vmul.f32 %v822, 0.1
      %v967 = vmul.f32 %v825, 0.1
      %v968 = vmul.f32 %v830, 0.1
      %v969 = vmul.f32 %v833, 0.1
      %v970 = vmul.f32 %v838, 0.1
      %v971 = vmul.f32 %v841, 0.1
      %v972 = vsel %vm844, %v590, %v908
      %v973 = vsel %vm845, %v593, %v909
      %v974 = vsel %vm846, %v598, %v910
      %v975 = vsel %vm847, %v601, %v911
      %v976 = vsel %vm848, %v606, %v912
      %v977 = vsel %vm849, %v609, %v913
      %v978 = vsel %vm850, %v614, %v914
      %v979 = vsel %vm851, %v617, %v915
      %v980 = vsel %vm852, %v622, %v916
      %v981 = vsel %vm853, %v625, %v917
      %v982 = vsel %vm854, %v630, %v918
      %v983 = vsel %vm855, %v633, %v919
      %v984 = vsel %vm856, %v638, %v920
      %v985 = vsel %vm857, %v641, %v921
      %v986 = vsel %vm858, %v646, %v922
      %v987 = vsel %vm859, %v649, %v923
      %v988 = vsel %vm860, %v654, %v924
      %v989 = vsel %vm861, %v657, %v925
      %v990 = vsel %vm862, %v662, %v926
      %v991 = vsel %vm863, %v665, %v927
      %v992 = vsel %vm864, %v670, %v928
      %v993 = vsel %vm865, %v673, %v929
      %v994 = vsel %vm866, %v678, %v930
      %v995 = vsel %vm867, %v681, %v931
      %v996 = vsel %vm868, %v686, %v932
      %v997 = vsel %vm869, %v689, %v933
      %v998 = vsel %vm870, %v694, %v934
      %v999 = vsel %vm871, %v697, %v935
      %v1000 = vsel %vm872, %v702, %v936
      %v1001 = vsel %vm873, %v705, %v937
      %v1002 = vsel %vm874, %v710, %v938
      %v1003 = vsel %vm875, %v713, %v939
      %v1004 = vsel %vm876, %v718, %v940
      %v1005 = vsel %vm877, %v721, %v941
      %v1006 = vsel %vm878, %v726, %v942
      %v1007 = vsel %vm879, %v729, %v943
      %v1008 = vsel %vm880, %v734, %v944
      %v1009 = vsel %vm881, %v737, %v945
      %v1010 = vsel %vm882, %v742, %v946
      %v1011 = vsel %vm883, %v745, %v947
      %v1012 = vsel %vm884, %v750, %v948
      %v1013 = vsel %vm885, %v753, %v949
      %v1014 = vsel %vm886, %v758, %v950
      %v1015 = vsel %vm887, %v761, %v951
      %v1016 = vsel %vm888, %v766, %v952
      %v1017 = vsel %vm889, %v769, %v953
      %v1018 = vsel %vm890, %v774, %v954
      %v1019 = vsel %vm891, %v777, %v955
      %v1020 = vsel %vm892, %v782, %v956
      %v1021 = vsel %vm893, %v785, %v957
      %v1022 = vsel %vm894, %v790, %v958
      %v1023 = vsel %vm895, %v793, %v959
      %v1024 = vsel %vm896, %v798, %v960
      %v1025 = vsel %vm897, %v801, %v961
      %v1026 = vsel %vm898, %v806, %v962
      %v1027 = vsel %vm899, %v809, %v963
      %v1028 = vsel %vm900, %v814, %v964
      %v1029 = vsel %vm901, %v817, %v965
      %v1030 = vsel %vm902, %v822, %v966
      %v1031 = vsel %vm903, %v825, %v967
      %v1032 = vsel %vm904, %v830, %v968
      %v1033 = vsel %vm905, %v833, %v969
      %v1034 = vsel %vm906, %v838, %v970
      %v1035 = vsel %vm907, %v841, %v971
      %v1036 = vpack.c.bf16 %v973, %v972
      %v1037 = vpack.c.bf16 %v975, %v974
      %v1038 = vpack.c.bf16 %v977, %v976
      %v1039 = vpack.c.bf16 %v979, %v978
      %v1040 = vpack.c.bf16 %v981, %v980
      %v1041 = vpack.c.bf16 %v983, %v982
      %v1042 = vpack.c.bf16 %v985, %v984
      %v1043 = vpack.c.bf16 %v987, %v986
      %v1044 = vpack.c.bf16 %v989, %v988
      %v1045 = vpack.c.bf16 %v991, %v990
      %v1046 = vpack.c.bf16 %v993, %v992
      %v1047 = vpack.c.bf16 %v995, %v994
      %v1048 = vpack.c.bf16 %v997, %v996
      %v1049 = vpack.c.bf16 %v999, %v998
      %v1050 = vpack.c.bf16 %v1001, %v1000
      %v1051 = vpack.c.bf16 %v1003, %v1002
      %v1052 = vpack.c.bf16 %v1005, %v1004
      %v1053 = vpack.c.bf16 %v1007, %v1006
      %v1054 = vpack.c.bf16 %v1009, %v1008
      %v1055 = vpack.c.bf16 %v1011, %v1010
      %v1056 = vpack.c.bf16 %v1013, %v1012
      %v1057 = vpack.c.bf16 %v1015, %v1014
      %v1058 = vpack.c.bf16 %v1017, %v1016
      %v1059 = vpack.c.bf16 %v1019, %v1018
      %v1060 = vpack.c.bf16 %v1021, %v1020
      %v1061 = vpack.c.bf16 %v1023, %v1022
      %v1062 = vpack.c.bf16 %v1025, %v1024
      %v1063 = vpack.c.bf16 %v1027, %v1026
      %v1064 = vpack.c.bf16 %v1029, %v1028
      %v1065 = vpack.c.bf16 %v1031, %v1030
      %v1066 = vpack.c.bf16 %v1033, %v1032
      %v1067 = vpack.c.bf16 %v1035, %v1034
      %v1068 = vld [vmem:[%s3] sm:$0xf]
      %v1069 = vld [vmem:[%s3 + $0x4] sm:$0xf]
      %v1070 = vld [vmem:[%s3 + $0x8] sm:$0xf]
      %v1071 = vld [vmem:[%s3 + $0xc] sm:$0xf]
      %v1072 = vld [vmem:[%s3 + $0x10] sm:$0xf]
      %v1073 = vld [vmem:[%s3 + $0x14] sm:$0xf]
      %v1074 = vld [vmem:[%s3 + $0x18] sm:$0xf]
      %v1075 = vld [vmem:[%s3 + $0x1c] sm:$0xf]
      %v1076 = vld [vmem:[%s4] sm:$0x1]
      %v1078 = vlaneseq
      %v1079 = vshrl.u32 %v1078, 7
      %v1080 = vsub.s32 0, %v1079
      %v1081 = vrot.slane %v1076, %v1080
      %v1091 = vunpack.c.l.b16 %v1068
      %v1092 = vunpack.c.l.b16 %v1069
      %v1093 = vunpack.c.l.b16 %v1070
      %v1094 = vunpack.c.l.b16 %v1071
      %v1095 = vunpack.c.l.b16 %v1072
      %v1096 = vunpack.c.l.b16 %v1073
      %v1097 = vunpack.c.l.b16 %v1074
      %v1098 = vunpack.c.l.b16 %v1075
      %v1099 = vpack.c.b16 %v1092, %v1091
      %v1100 = vpack.c.b16 %v1094, %v1093
      %v1101 = vpack.c.b16 %v1096, %v1095
      %v1102 = vpack.c.b16 %v1098, %v1097
      %vm1107 = vcmask 523264
      %v1109 = vsel %vm1107, %v1036, 0
      %v1112 = vsel %vm1107, %v1037, 0
      %v1115 = vsel %vm1107, %v1038, 0
      %v1118 = vsel %vm1107, %v1039, 0
      %v1121 = vsel %vm1107, %v1040, 0
      %v1124 = vsel %vm1107, %v1041, 0
      %v1127 = vsel %vm1107, %v1042, 0
      %v1130 = vsel %vm1107, %v1043, 0
      %v1133 = vsel %vm1107, %v1044, 0
      %v1136 = vsel %vm1107, %v1045, 0
      %v1139 = vsel %vm1107, %v1046, 0
      %v1142 = vsel %vm1107, %v1047, 0
      %v1145 = vsel %vm1107, %v1048, 0
      %v1148 = vsel %vm1107, %v1049, 0
      %v1151 = vsel %vm1107, %v1050, 0
      %v1154 = vsel %vm1107, %v1051, 0
      %v1157 = vsel %vm1107, %v1052, 0
      %v1160 = vsel %vm1107, %v1053, 0
      %v1163 = vsel %vm1107, %v1054, 0
      %v1166 = vsel %vm1107, %v1055, 0
      %v1169 = vsel %vm1107, %v1056, 0
      %v1172 = vsel %vm1107, %v1057, 0
      %v1175 = vsel %vm1107, %v1058, 0
      %v1178 = vsel %vm1107, %v1059, 0
      %v1181 = vsel %vm1107, %v1060, 0
      %v1184 = vsel %vm1107, %v1061, 0
      %v1187 = vsel %vm1107, %v1062, 0
      %v1190 = vsel %vm1107, %v1063, 0
      %v1193 = vsel %vm1107, %v1064, 0
      %v1196 = vsel %vm1107, %v1065, 0
      %v1199 = vsel %vm1107, %v1066, 0
      %v1202 = vsel %vm1107, %v1067, 0
      %1204 = vmatprep.subr.bf16.mxu0 0
      %1205 = vmatpush1.bf16.msra.mxu0 %v1099
      %1206 = vmatprep.subr.bf16.mxu0 0
      %1207 = vmatpush1.bf16.msra.mxu0 %v1100
      %1208 = vmatprep.subr.bf16.mxu0 0
      %1209 = vmatpush1.bf16.msra.mxu0 %v1101
      %1210 = vmatprep.subr.bf16.mxu0 0
      %1211 = vmatpush1.bf16.msra.mxu0 %v1102
      %1212 = vmatprep.subr.bf16.mxu0 0
      %1213 = vmatpush1.bf16.msra.mxu0 0
      %1214 = vmatprep.subr.bf16.mxu0 0
      %1215 = vmatpush1.bf16.msra.mxu0 0
      %1216 = vmatprep.subr.bf16.mxu0 0
      %1217 = vmatpush1.bf16.msra.mxu0 0
      %1218 = vmatprep.subr.bf16.mxu0 0
      %1219 = vmatpush1.bf16.msra.mxu0 0
      %1220 = vmatprep.subr.bf16.mxu0 0
      %1221 = vmatpush1.bf16.msra.mxu0 0
      %1222 = vmatprep.subr.bf16.mxu0 0
      %1223 = vmatpush1.bf16.msra.mxu0 0
      %1224 = vmatprep.subr.bf16.mxu0 0
      %1225 = vmatpush1.bf16.msra.mxu0 0
      %1226 = vmatprep.subr.bf16.mxu0 0
      %1227 = vmatpush1.bf16.msra.mxu0 0
      %1228 = vmatprep.subr.bf16.mxu0 0
      %1229 = vmatpush1.bf16.msra.mxu0 0
      %1230 = vmatprep.subr.bf16.mxu0 0
      %1231 = vmatpush1.bf16.msra.mxu0 0
      %1232 = vmatprep.subr.bf16.mxu0 0
      %1233 = vmatpush1.bf16.msra.mxu0 0
      %1234 = vmatprep.subr.bf16.mxu0 0
      %1235 = vmatpush1.bf16.msra.mxu0 0
      %1236 = vmatprep.mubr.bf16.mxu0 0
      %1237 = vmatmul.mubr.bf16.gmra.mrb[0].mxu0 %v1109
      %v1238 = vpop.f32.mrb[0].mxu0
      %v1239 = vadd.f32 %v1081, %v1238
      %v1240 = vpop.f32.mrb[0].mxu0
      %v1241 = vpop.f32.mrb[0].mxu0
      %v1242 = vadd.f32 %v1081, %v1241
      %v1243 = vpop.f32.mrb[0].mxu0
      %1244 = vmatprep.mubr.bf16.mxu0 0
      %1245 = vmatmul.mubr.bf16.gmra.mrb[0].mxu0 %v1112
      %v1246 = vpop.f32.mrb[0].mxu0
      %v1247 = vadd.f32 %v1081, %v1246
      %v1248 = vpop.f32.mrb[0].mxu0
      %v1249 = vpop.f32.mrb[0].mxu0
      %v1250 = vadd.f32 %v1081, %v1249
      %v1251 = vpop.f32.mrb[0].mxu0
      %1252 = vmatprep.mubr.bf16.mxu0 0
      %1253 = vmatmul.mubr.bf16.gmra.mrb[0].mxu0 %v1115
      %v1254 = vpop.f32.mrb[0].mxu0
      %v1255 = vadd.f32 %v1081, %v1254
      %v1256 = vpop.f32.mrb[0].mxu0
      %v1257 = vpop.f32.mrb[0].mxu0
      %v1258 = vadd.f32 %v1081, %v1257
      %v1259 = vpop.f32.mrb[0].mxu0
      %1260 = vmatprep.mubr.bf16.mxu0 0
      %1261 = vmatmul.mubr.bf16.gmra.mrb[0].mxu0 %v1118
      %v1262 = vpop.f32.mrb[0].mxu0
      %v1263 = vadd.f32 %v1081, %v1262
      %v1264 = vpop.f32.mrb[0].mxu0
      %v1265 = vpop.f32.mrb[0].mxu0
      %v1266 = vadd.f32 %v1081, %v1265
      %v1267 = vpop.f32.mrb[0].mxu0
      %1268 = vmatprep.mubr.bf16.mxu0 0
      %1269 = vmatmul.mubr.bf16.gmra.mrb[0].mxu0 %v1121
      %v1270 = vpop.f32.mrb[0].mxu0
      %v1271 = vadd.f32 %v1081, %v1270
      %v1272 = vpop.f32.mrb[0].mxu0
      %v1273 = vpop.f32.mrb[0].mxu0
      %v1274 = vadd.f32 %v1081, %v1273
      %v1275 = vpop.f32.mrb[0].mxu0
      %1276 = vmatprep.mubr.bf16.mxu0 0
      %1277 = vmatmul.mubr.bf16.gmra.mrb[0].mxu0 %v1124
      %v1278 = vpop.f32.mrb[0].mxu0
      %v1279 = vadd.f32 %v1081, %v1278
      %v1280 = vpop.f32.mrb[0].mxu0
      %v1281 = vpop.f32.mrb[0].mxu0
      %v1282 = vadd.f32 %v1081, %v1281
      %v1283 = vpop.f32.mrb[0].mxu0
      %1284 = vmatprep.mubr.bf16.mxu0 0
      %1285 = vmatmul.mubr.bf16.gmra.mrb[0].mxu0 %v1127
      %v1286 = vpop.f32.mrb[0].mxu0
      %v1287 = vadd.f32 %v1081, %v1286
      %v1288 = vpop.f32.mrb[0].mxu0
      %v1289 = vpop.f32.mrb[0].mxu0
      %v1290 = vadd.f32 %v1081, %v1289
      %v1291 = vpop.f32.mrb[0].mxu0
      %1292 = vmatprep.mubr.bf16.mxu0 0
      %1293 = vmatmul.mubr.bf16.gmra.mrb[0].mxu0 %v1130
      %v1294 = vpop.f32.mrb[0].mxu0
      %v1295 = vadd.f32 %v1081, %v1294
      %v1296 = vpop.f32.mrb[0].mxu0
      %v1297 = vpop.f32.mrb[0].mxu0
      %v1298 = vadd.f32 %v1081, %v1297
      %v1299 = vpop.f32.mrb[0].mxu0
      %1300 = vmatprep.mubr.bf16.mxu0 0
      %1301 = vmatmul.mubr.bf16.gmra.mrb[0].mxu0 %v1133
      %v1302 = vpop.f32.mrb[0].mxu0
      %v1303 = vadd.f32 %v1081, %v1302
      %v1304 = vpop.f32.mrb[0].mxu0
      %v1305 = vpop.f32.mrb[0].mxu0
      %v1306 = vadd.f32 %v1081, %v1305
      %v1307 = vpop.f32.mrb[0].mxu0
      %1308 = vmatprep.mubr.bf16.mxu0 0
      %1309 = vmatmul.mubr.bf16.gmra.mrb[0].mxu0 %v1136
      %v1310 = vpop.f32.mrb[0].mxu0
      %v1311 = vadd.f32 %v1081, %v1310
      %v1312 = vpop.f32.mrb[0].mxu0
      %v1313 = vpop.f32.mrb[0].mxu0
      %v1314 = vadd.f32 %v1081, %v1313
      %v1315 = vpop.f32.mrb[0].mxu0
      %1316 = vmatprep.mubr.bf16.mxu0 0
      %1317 = vmatmul.mubr.bf16.gmra.mrb[0].mxu0 %v1139
      %v1318 = vpop.f32.mrb[0].mxu0
      %v1319 = vadd.f32 %v1081, %v1318
      %v1320 = vpop.f32.mrb[0].mxu0
      %v1321 = vpop.f32.mrb[0].mxu0
      %v1322 = vadd.f32 %v1081, %v1321
      %v1323 = vpop.f32.mrb[0].mxu0
      %1324 = vmatprep.mubr.bf16.mxu0 0
      %1325 = vmatmul.mubr.bf16.gmra.mrb[0].mxu0 %v1142
      %v1326 = vpop.f32.mrb[0].mxu0
      %v1327 = vadd.f32 %v1081, %v1326
      %v1328 = vpop.f32.mrb[0].mxu0
      %v1329 = vpop.f32.mrb[0].mxu0
      %v1330 = vadd.f32 %v1081, %v1329
      %v1331 = vpop.f32.mrb[0].mxu0
      %1332 = vmatprep.mubr.bf16.mxu0 0
      %1333 = vmatmul.mubr.bf16.gmra.mrb[0].mxu0 %v1145
      %v1334 = vpop.f32.mrb[0].mxu0
      %v1335 = vadd.f32 %v1081, %v1334
      %v1336 = vpop.f32.mrb[0].mxu0
      %v1337 = vpop.f32.mrb[0].mxu0
      %v1338 = vadd.f32 %v1081, %v1337
      %v1339 = vpop.f32.mrb[0].mxu0
      %1340 = vmatprep.mubr.bf16.mxu0 0
      %1341 = vmatmul.mubr.bf16.gmra.mrb[0].mxu0 %v1148
      %v1342 = vpop.f32.mrb[0].mxu0
      %v1343 = vadd.f32 %v1081, %v1342
      %v1344 = vpop.f32.mrb[0].mxu0
      %v1345 = vpop.f32.mrb[0].mxu0
      %v1346 = vadd.f32 %v1081, %v1345
      %v1347 = vpop.f32.mrb[0].mxu0
      %1348 = vmatprep.mubr.bf16.mxu0 0
      %1349 = vmatmul.mubr.bf16.gmra.mrb[0].mxu0 %v1151
      %v1350 = vpop.f32.mrb[0].mxu0
      %v1351 = vadd.f32 %v1081, %v1350
      %v1352 = vpop.f32.mrb[0].mxu0
      %v1353 = vpop.f32.mrb[0].mxu0
      %v1354 = vadd.f32 %v1081, %v1353
      %v1355 = vpop.f32.mrb[0].mxu0
      %1356 = vmatprep.mubr.bf16.mxu0 0
      %1357 = vmatmul.mubr.bf16.gmra.mrb[0].mxu0 %v1154
      %v1358 = vpop.f32.mrb[0].mxu0
      %v1359 = vadd.f32 %v1081, %v1358
      %v1360 = vpop.f32.mrb[0].mxu0
      %v1361 = vpop.f32.mrb[0].mxu0
      %v1362 = vadd.f32 %v1081, %v1361
      %v1363 = vpop.f32.mrb[0].mxu0
      %1364 = vmatprep.mubr.bf16.mxu0 0
      %1365 = vmatmul.mubr.bf16.gmra.mrb[0].mxu0 %v1157
      %v1366 = vpop.f32.mrb[0].mxu0
      %v1367 = vadd.f32 %v1081, %v1366
      %v1368 = vpop.f32.mrb[0].mxu0
      %v1369 = vpop.f32.mrb[0].mxu0
      %v1370 = vadd.f32 %v1081, %v1369
      %v1371 = vpop.f32.mrb[0].mxu0
      %1372 = vmatprep.mubr.bf16.mxu0 0
      %1373 = vmatmul.mubr.bf16.gmra.mrb[0].mxu0 %v1160
      %v1374 = vpop.f32.mrb[0].mxu0
      %v1375 = vadd.f32 %v1081, %v1374
      %v1376 = vpop.f32.mrb[0].mxu0
      %v1377 = vpop.f32.mrb[0].mxu0
      %v1378 = vadd.f32 %v1081, %v1377
      %v1379 = vpop.f32.mrb[0].mxu0
      %1380 = vmatprep.mubr.bf16.mxu0 0
      %1381 = vmatmul.mubr.bf16.gmra.mrb[0].mxu0 %v1163
      %v1382 = vpop.f32.mrb[0].mxu0
      %v1383 = vadd.f32 %v1081, %v1382
      %v1384 = vpop.f32.mrb[0].mxu0
      %v1385 = vpop.f32.mrb[0].mxu0
      %v1386 = vadd.f32 %v1081, %v1385
      %v1387 = vpop.f32.mrb[0].mxu0
      %1388 = vmatprep.mubr.bf16.mxu0 0
      %1389 = vmatmul.mubr.bf16.gmra.mrb[0].mxu0 %v1166
      %v1390 = vpop.f32.mrb[0].mxu0
      %v1391 = vadd.f32 %v1081, %v1390
      %v1392 = vpop.f32.mrb[0].mxu0
      %v1393 = vpop.f32.mrb[0].mxu0
      %v1394 = vadd.f32 %v1081, %v1393
      %v1395 = vpop.f32.mrb[0].mxu0
      %1396 = vmatprep.mubr.bf16.mxu0 0
      %1397 = vmatmul.mubr.bf16.gmra.mrb[0].mxu0 %v1169
      %v1398 = vpop.f32.mrb[0].mxu0
      %v1399 = vadd.f32 %v1081, %v1398
      %v1400 = vpop.f32.mrb[0].mxu0
      %v1401 = vpop.f32.mrb[0].mxu0
      %v1402 = vadd.f32 %v1081, %v1401
      %v1403 = vpop.f32.mrb[0].mxu0
      %1404 = vmatprep.mubr.bf16.mxu0 0
      %1405 = vmatmul.mubr.bf16.gmra.mrb[0].mxu0 %v1172
      %v1406 = vpop.f32.mrb[0].mxu0
      %v1407 = vadd.f32 %v1081, %v1406
      %v1408 = vpop.f32.mrb[0].mxu0
      %v1409 = vpop.f32.mrb[0].mxu0
      %v1410 = vadd.f32 %v1081, %v1409
      %v1411 = vpop.f32.mrb[0].mxu0
      %1412 = vmatprep.mubr.bf16.mxu0 0
      %1413 = vmatmul.mubr.bf16.gmra.mrb[0].mxu0 %v1175
      %v1414 = vpop.f32.mrb[0].mxu0
      %v1415 = vadd.f32 %v1081, %v1414
      %v1416 = vpop.f32.mrb[0].mxu0
      %v1417 = vpop.f32.mrb[0].mxu0
      %v1418 = vadd.f32 %v1081, %v1417
      %v1419 = vpop.f32.mrb[0].mxu0
      %1420 = vmatprep.mubr.bf16.mxu0 0
      %1421 = vmatmul.mubr.bf16.gmra.mrb[0].mxu0 %v1178
      %v1422 = vpop.f32.mrb[0].mxu0
      %v1423 = vadd.f32 %v1081, %v1422
      %v1424 = vpop.f32.mrb[0].mxu0
      %v1425 = vpop.f32.mrb[0].mxu0
      %v1426 = vadd.f32 %v1081, %v1425
      %v1427 = vpop.f32.mrb[0].mxu0
      %1428 = vmatprep.mubr.bf16.mxu0 0
      %1429 = vmatmul.mubr.bf16.gmra.mrb[0].mxu0 %v1181
      %v1430 = vpop.f32.mrb[0].mxu0
      %v1431 = vadd.f32 %v1081, %v1430
      %v1432 = vpop.f32.mrb[0].mxu0
      %v1433 = vpop.f32.mrb[0].mxu0
      %v1434 = vadd.f32 %v1081, %v1433
      %v1435 = vpop.f32.mrb[0].mxu0
      %1436 = vmatprep.mubr.bf16.mxu0 0
      %1437 = vmatmul.mubr.bf16.gmra.mrb[0].mxu0 %v1184
      %v1438 = vpop.f32.mrb[0].mxu0
      %v1439 = vadd.f32 %v1081, %v1438
      %v1440 = vpop.f32.mrb[0].mxu0
      %v1441 = vpop.f32.mrb[0].mxu0
      %v1442 = vadd.f32 %v1081, %v1441
      %v1443 = vpop.f32.mrb[0].mxu0
      %1444 = vmatprep.mubr.bf16.mxu0 0
      %1445 = vmatmul.mubr.bf16.gmra.mrb[0].mxu0 %v1187
      %v1446 = vpop.f32.mrb[0].mxu0
      %v1447 = vadd.f32 %v1081, %v1446
      %v1448 = vpop.f32.mrb[0].mxu0
      %v1449 = vpop.f32.mrb[0].mxu0
      %v1450 = vadd.f32 %v1081, %v1449
      %v1451 = vpop.f32.mrb[0].mxu0
      %1452 = vmatprep.mubr.bf16.mxu0 0
      %1453 = vmatmul.mubr.bf16.gmra.mrb[0].mxu0 %v1190
      %v1454 = vpop.f32.mrb[0].mxu0
      %v1455 = vadd.f32 %v1081, %v1454
      %v1456 = vpop.f32.mrb[0].mxu0
      %v1457 = vpop.f32.mrb[0].mxu0
      %v1458 = vadd.f32 %v1081, %v1457
      %v1459 = vpop.f32.mrb[0].mxu0
      %1460 = vmatprep.mubr.bf16.mxu0 0
      %1461 = vmatmul.mubr.bf16.gmra.mrb[0].mxu0 %v1193
      %v1462 = vpop.f32.mrb[0].mxu0
      %v1463 = vadd.f32 %v1081, %v1462
      %v1464 = vpop.f32.mrb[0].mxu0
      %v1465 = vpop.f32.mrb[0].mxu0
      %v1466 = vadd.f32 %v1081, %v1465
      %v1467 = vpop.f32.mrb[0].mxu0
      %1468 = vmatprep.mubr.bf16.mxu0 0
      %1469 = vmatmul.mubr.bf16.gmra.mrb[0].mxu0 %v1196
      %v1470 = vpop.f32.mrb[0].mxu0
      %v1471 = vadd.f32 %v1081, %v1470
      %v1472 = vpop.f32.mrb[0].mxu0
      %v1473 = vpop.f32.mrb[0].mxu0
      %v1474 = vadd.f32 %v1081, %v1473
      %v1475 = vpop.f32.mrb[0].mxu0
      %1476 = vmatprep.mubr.bf16.mxu0 0
      %1477 = vmatmul.mubr.bf16.gmra.mrb[0].mxu0 %v1199
      %v1478 = vpop.f32.mrb[0].mxu0
      %v1479 = vadd.f32 %v1081, %v1478
      %v1480 = vpop.f32.mrb[0].mxu0
      %v1481 = vpop.f32.mrb[0].mxu0
      %v1482 = vadd.f32 %v1081, %v1481
      %v1483 = vpop.f32.mrb[0].mxu0
      %1484 = vmatprep.mubr.bf16.mxu0 0
      %1485 = vmatmul.mubr.bf16.gmra.mrb[0].mxu0 %v1202
      %v1486 = vpop.f32.mrb[0].mxu0
      %v1487 = vadd.f32 %v1081, %v1486
      %v1488 = vpop.f32.mrb[0].mxu0
      %v1489 = vpop.f32.mrb[0].mxu0
      %v1490 = vadd.f32 %v1081, %v1489
      %v1491 = vpop.f32.mrb[0].mxu0
      %1492 = vdwg.mxu0
      %vm1493 = vcmp.gt.f32.partialorder %v1239, 0.0
      %vm1494 = vcmp.gt.f32.partialorder %v1242, 0.0
      %vm1495 = vcmp.gt.f32.partialorder %v1247, 0.0
      %vm1496 = vcmp.gt.f32.partialorder %v1250, 0.0
      %vm1497 = vcmp.gt.f32.partialorder %v1255, 0.0
      %vm1498 = vcmp.gt.f32.partialorder %v1258, 0.0
      %vm1499 = vcmp.gt.f32.partialorder %v1263, 0.0
      %vm1500 = vcmp.gt.f32.partialorder %v1266, 0.0
      %vm1501 = vcmp.gt.f32.partialorder %v1271, 0.0
      %vm1502 = vcmp.gt.f32.partialorder %v1274, 0.0
      %vm1503 = vcmp.gt.f32.partialorder %v1279, 0.0
      %vm1504 = vcmp.gt.f32.partialorder %v1282, 0.0
      %vm1505 = vcmp.gt.f32.partialorder %v1287, 0.0
      %vm1506 = vcmp.gt.f32.partialorder %v1290, 0.0
      %vm1507 = vcmp.gt.f32.partialorder %v1295, 0.0
      %vm1508 = vcmp.gt.f32.partialorder %v1298, 0.0
      %vm1509 = vcmp.gt.f32.partialorder %v1303, 0.0
      %vm1510 = vcmp.gt.f32.partialorder %v1306, 0.0
      %vm1511 = vcmp.gt.f32.partialorder %v1311, 0.0
      %vm1512 = vcmp.gt.f32.partialorder %v1314, 0.0
      %vm1513 = vcmp.gt.f32.partialorder %v1319, 0.0
      %vm1514 = vcmp.gt.f32.partialorder %v1322, 0.0
      %vm1515 = vcmp.gt.f32.partialorder %v1327, 0.0
      %vm1516 = vcmp.gt.f32.partialorder %v1330, 0.0
      %vm1517 = vcmp.gt.f32.partialorder %v1335, 0.0
      %vm1518 = vcmp.gt.f32.partialorder %v1338, 0.0
      %vm1519 = vcmp.gt.f32.partialorder %v1343, 0.0
      %vm1520 = vcmp.gt.f32.partialorder %v1346, 0.0
      %vm1521 = vcmp.gt.f32.partialorder %v1351, 0.0
      %vm1522 = vcmp.gt.f32.partialorder %v1354, 0.0
      %vm1523 = vcmp.gt.f32.partialorder %v1359, 0.0
      %vm1524 = vcmp.gt.f32.partialorder %v1362, 0.0
      %vm1525 = vcmp.gt.f32.partialorder %v1367, 0.0
      %vm1526 = vcmp.gt.f32.partialorder %v1370, 0.0
      %vm1527 = vcmp.gt.f32.partialorder %v1375, 0.0
      %vm1528 = vcmp.gt.f32.partialorder %v1378, 0.0
      %vm1529 = vcmp.gt.f32.partialorder %v1383, 0.0
      %vm1530 = vcmp.gt.f32.partialorder %v1386, 0.0
      %vm1531 = vcmp.gt.f32.partialorder %v1391, 0.0
      %vm1532 = vcmp.gt.f32.partialorder %v1394, 0.0
      %vm1533 = vcmp.gt.f32.partialorder %v1399, 0.0
      %vm1534 = vcmp.gt.f32.partialorder %v1402, 0.0
      %vm1535 = vcmp.gt.f32.partialorder %v1407, 0.0
      %vm1536 = vcmp.gt.f32.partialorder %v1410, 0.0
      %vm1537 = vcmp.gt.f32.partialorder %v1415, 0.0
      %vm1538 = vcmp.gt.f32.partialorder %v1418, 0.0
      %vm1539 = vcmp.gt.f32.partialorder %v1423, 0.0
      %vm1540 = vcmp.gt.f32.partialorder %v1426, 0.0
      %vm1541 = vcmp.gt.f32.partialorder %v1431, 0.0
      %vm1542 = vcmp.gt.f32.partialorder %v1434, 0.0
      %vm1543 = vcmp.gt.f32.partialorder %v1439, 0.0
      %vm1544 = vcmp.gt.f32.partialorder %v1442, 0.0
      %vm1545 = vcmp.gt.f32.partialorder %v1447, 0.0
      %vm1546 = vcmp.gt.f32.partialorder %v1450, 0.0
      %vm1547 = vcmp.gt.f32.partialorder %v1455, 0.0
      %vm1548 = vcmp.gt.f32.partialorder %v1458, 0.0
      %vm1549 = vcmp.gt.f32.partialorder %v1463, 0.0
      %vm1550 = vcmp.gt.f32.partialorder %v1466, 0.0
      %vm1551 = vcmp.gt.f32.partialorder %v1471, 0.0
      %vm1552 = vcmp.gt.f32.partialorder %v1474, 0.0
      %vm1553 = vcmp.gt.f32.partialorder %v1479, 0.0
      %vm1554 = vcmp.gt.f32.partialorder %v1482, 0.0
      %vm1555 = vcmp.gt.f32.partialorder %v1487, 0.0
      %vm1556 = vcmp.gt.f32.partialorder %v1490, 0.0
      %v1557 = vmul.f32 %v1239, 0.1
      %v1558 = vmul.f32 %v1242, 0.1
      %v1559 = vmul.f32 %v1247, 0.1
      %v1560 = vmul.f32 %v1250, 0.1
      %v1561 = vmul.f32 %v1255, 0.1
      %v1562 = vmul.f32 %v1258, 0.1
      %v1563 = vmul.f32 %v1263, 0.1
      %v1564 = vmul.f32 %v1266, 0.1
      %v1565 = vmul.f32 %v1271, 0.1
      %v1566 = vmul.f32 %v1274, 0.1
      %v1567 = vmul.f32 %v1279, 0.1
      %v1568 = vmul.f32 %v1282, 0.1
      %v1569 = vmul.f32 %v1287, 0.1
      %v1570 = vmul.f32 %v1290, 0.1
      %v1571 = vmul.f32 %v1295, 0.1
      %v1572 = vmul.f32 %v1298, 0.1
      %v1573 = vmul.f32 %v1303, 0.1
      %v1574 = vmul.f32 %v1306, 0.1
      %v1575 = vmul.f32 %v1311, 0.1
      %v1576 = vmul.f32 %v1314, 0.1
      %v1577 = vmul.f32 %v1319, 0.1
      %v1578 = vmul.f32 %v1322, 0.1
      %v1579 = vmul.f32 %v1327, 0.1
      %v1580 = vmul.f32 %v1330, 0.1
      %v1581 = vmul.f32 %v1335, 0.1
      %v1582 = vmul.f32 %v1338, 0.1
      %v1583 = vmul.f32 %v1343, 0.1
      %v1584 = vmul.f32 %v1346, 0.1
      %v1585 = vmul.f32 %v1351, 0.1
      %v1586 = vmul.f32 %v1354, 0.1
      %v1587 = vmul.f32 %v1359, 0.1
      %v1588 = vmul.f32 %v1362, 0.1
      %v1589 = vmul.f32 %v1367, 0.1
      %v1590 = vmul.f32 %v1370, 0.1
      %v1591 = vmul.f32 %v1375, 0.1
      %v1592 = vmul.f32 %v1378, 0.1
      %v1593 = vmul.f32 %v1383, 0.1
      %v1594 = vmul.f32 %v1386, 0.1
      %v1595 = vmul.f32 %v1391, 0.1
      %v1596 = vmul.f32 %v1394, 0.1
      %v1597 = vmul.f32 %v1399, 0.1
      %v1598 = vmul.f32 %v1402, 0.1
      %v1599 = vmul.f32 %v1407, 0.1
      %v1600 = vmul.f32 %v1410, 0.1
      %v1601 = vmul.f32 %v1415, 0.1
      %v1602 = vmul.f32 %v1418, 0.1
      %v1603 = vmul.f32 %v1423, 0.1
      %v1604 = vmul.f32 %v1426, 0.1
      %v1605 = vmul.f32 %v1431, 0.1
      %v1606 = vmul.f32 %v1434, 0.1
      %v1607 = vmul.f32 %v1439, 0.1
      %v1608 = vmul.f32 %v1442, 0.1
      %v1609 = vmul.f32 %v1447, 0.1
      %v1610 = vmul.f32 %v1450, 0.1
      %v1611 = vmul.f32 %v1455, 0.1
      %v1612 = vmul.f32 %v1458, 0.1
      %v1613 = vmul.f32 %v1463, 0.1
      %v1614 = vmul.f32 %v1466, 0.1
      %v1615 = vmul.f32 %v1471, 0.1
      %v1616 = vmul.f32 %v1474, 0.1
      %v1617 = vmul.f32 %v1479, 0.1
      %v1618 = vmul.f32 %v1482, 0.1
      %v1619 = vmul.f32 %v1487, 0.1
      %v1620 = vmul.f32 %v1490, 0.1
      %v1621 = vsel %vm1493, %v1239, %v1557
      %v1622 = vsel %vm1494, %v1242, %v1558
      %v1623 = vsel %vm1495, %v1247, %v1559
      %v1624 = vsel %vm1496, %v1250, %v1560
      %v1625 = vsel %vm1497, %v1255, %v1561
      %v1626 = vsel %vm1498, %v1258, %v1562
      %v1627 = vsel %vm1499, %v1263, %v1563
      %v1628 = vsel %vm1500, %v1266, %v1564
      %v1629 = vsel %vm1501, %v1271, %v1565
      %v1630 = vsel %vm1502, %v1274, %v1566
      %v1631 = vsel %vm1503, %v1279, %v1567
      %v1632 = vsel %vm1504, %v1282, %v1568
      %v1633 = vsel %vm1505, %v1287, %v1569
      %v1634 = vsel %vm1506, %v1290, %v1570
      %v1635 = vsel %vm1507, %v1295, %v1571
      %v1636 = vsel %vm1508, %v1298, %v1572
      %v1637 = vsel %vm1509, %v1303, %v1573
      %v1638 = vsel %vm1510, %v1306, %v1574
      %v1639 = vsel %vm1511, %v1311, %v1575
      %v1640 = vsel %vm1512, %v1314, %v1576
      %v1641 = vsel %vm1513, %v1319, %v1577
      %v1642 = vsel %vm1514, %v1322, %v1578
      %v1643 = vsel %vm1515, %v1327, %v1579
      %v1644 = vsel %vm1516, %v1330, %v1580
      %v1645 = vsel %vm1517, %v1335, %v1581
      %v1646 = vsel %vm1518, %v1338, %v1582
      %v1647 = vsel %vm1519, %v1343, %v1583
      %v1648 = vsel %vm1520, %v1346, %v1584
      %v1649 = vsel %vm1521, %v1351, %v1585
      %v1650 = vsel %vm1522, %v1354, %v1586
      %v1651 = vsel %vm1523, %v1359, %v1587
      %v1652 = vsel %vm1524, %v1362, %v1588
      %v1653 = vsel %vm1525, %v1367, %v1589
      %v1654 = vsel %vm1526, %v1370, %v1590
      %v1655 = vsel %vm1527, %v1375, %v1591
      %v1656 = vsel %vm1528, %v1378, %v1592
      %v1657 = vsel %vm1529, %v1383, %v1593
      %v1658 = vsel %vm1530, %v1386, %v1594
      %v1659 = vsel %vm1531, %v1391, %v1595
      %v1660 = vsel %vm1532, %v1394, %v1596
      %v1661 = vsel %vm1533, %v1399, %v1597
      %v1662 = vsel %vm1534, %v1402, %v1598
      %v1663 = vsel %vm1535, %v1407, %v1599
      %v1664 = vsel %vm1536, %v1410, %v1600
      %v1665 = vsel %vm1537, %v1415, %v1601
      %v1666 = vsel %vm1538, %v1418, %v1602
      %v1667 = vsel %vm1539, %v1423, %v1603
      %v1668 = vsel %vm1540, %v1426, %v1604
      %v1669 = vsel %vm1541, %v1431, %v1605
      %v1670 = vsel %vm1542, %v1434, %v1606
      %v1671 = vsel %vm1543, %v1439, %v1607
      %v1672 = vsel %vm1544, %v1442, %v1608
      %v1673 = vsel %vm1545, %v1447, %v1609
      %v1674 = vsel %vm1546, %v1450, %v1610
      %v1675 = vsel %vm1547, %v1455, %v1611
      %v1676 = vsel %vm1548, %v1458, %v1612
      %v1677 = vsel %vm1549, %v1463, %v1613
      %v1678 = vsel %vm1550, %v1466, %v1614
      %v1679 = vsel %vm1551, %v1471, %v1615
      %v1680 = vsel %vm1552, %v1474, %v1616
      %v1681 = vsel %vm1553, %v1479, %v1617
      %v1682 = vsel %vm1554, %v1482, %v1618
      %v1683 = vsel %vm1555, %v1487, %v1619
      %v1684 = vsel %vm1556, %v1490, %v1620
      %v1685 = vpack.c.bf16 %v1622, %v1621
      %v1686 = vpack.c.bf16 %v1624, %v1623
      %v1687 = vpack.c.bf16 %v1626, %v1625
      %v1688 = vpack.c.bf16 %v1628, %v1627
      %v1689 = vpack.c.bf16 %v1630, %v1629
      %v1690 = vpack.c.bf16 %v1632, %v1631
      %v1691 = vpack.c.bf16 %v1634, %v1633
      %v1692 = vpack.c.bf16 %v1636, %v1635
      %v1693 = vpack.c.bf16 %v1638, %v1637
      %v1694 = vpack.c.bf16 %v1640, %v1639
      %v1695 = vpack.c.bf16 %v1642, %v1641
      %v1696 = vpack.c.bf16 %v1644, %v1643
      %v1697 = vpack.c.bf16 %v1646, %v1645
      %v1698 = vpack.c.bf16 %v1648, %v1647
      %v1699 = vpack.c.bf16 %v1650, %v1649
      %v1700 = vpack.c.bf16 %v1652, %v1651
      %v1701 = vpack.c.bf16 %v1654, %v1653
      %v1702 = vpack.c.bf16 %v1656, %v1655
      %v1703 = vpack.c.bf16 %v1658, %v1657
      %v1704 = vpack.c.bf16 %v1660, %v1659
      %v1705 = vpack.c.bf16 %v1662, %v1661
      %v1706 = vpack.c.bf16 %v1664, %v1663
      %v1707 = vpack.c.bf16 %v1666, %v1665
      %v1708 = vpack.c.bf16 %v1668, %v1667
      %v1709 = vpack.c.bf16 %v1670, %v1669
      %v1710 = vpack.c.bf16 %v1672, %v1671
      %v1711 = vpack.c.bf16 %v1674, %v1673
      %v1712 = vpack.c.bf16 %v1676, %v1675
      %v1713 = vpack.c.bf16 %v1678, %v1677
      %v1714 = vpack.c.bf16 %v1680, %v1679
      %v1715 = vpack.c.bf16 %v1682, %v1681
      %v1716 = vpack.c.bf16 %v1684, %v1683
      %v1717 = vld [vmem:[%s5] sm:$0xf]
      %v1718 = vld [vmem:[%s5 + $0x4] sm:$0xf]
      %v1719 = vld [vmem:[%s5 + $0x8] sm:$0xf]
      %v1720 = vld [vmem:[%s5 + $0xc] sm:$0xf]
      %v1721 = vld [vmem:[%s6] sm:$0x1]
      %v1723 = vlaneseq
      %v1724 = vshrl.u32 %v1723, 7
      %v1725 = vsub.s32 0, %v1724
      %v1726 = vrot.slane %v1721, %v1725
      %v1732 = vunpack.c.l.b16 %v1717
      %v1733 = vunpack.c.l.b16 %v1718
      %v1734 = vunpack.c.l.b16 %v1719
      %v1735 = vunpack.c.l.b16 %v1720
      %v1736 = vpack.c.b16 %v1733, %v1732
      %v1737 = vpack.c.b16 %v1735, %v1734
      %v1741 = vsel %vm458, %v1685, 0
      %v1744 = vsel %vm458, %v1686, 0
      %v1747 = vsel %vm458, %v1687, 0
      %v1750 = vsel %vm458, %v1688, 0
      %v1753 = vsel %vm458, %v1689, 0
      %v1756 = vsel %vm458, %v1690, 0
      %v1759 = vsel %vm458, %v1691, 0
      %v1762 = vsel %vm458, %v1692, 0
      %v1765 = vsel %vm458, %v1693, 0
      %v1768 = vsel %vm458, %v1694, 0
      %v1771 = vsel %vm458, %v1695, 0
      %v1774 = vsel %vm458, %v1696, 0
      %v1777 = vsel %vm458, %v1697, 0
      %v1780 = vsel %vm458, %v1698, 0
      %v1783 = vsel %vm458, %v1699, 0
      %v1786 = vsel %vm458, %v1700, 0
      %v1789 = vsel %vm458, %v1701, 0
      %v1792 = vsel %vm458, %v1702, 0
      %v1795 = vsel %vm458, %v1703, 0
      %v1798 = vsel %vm458, %v1704, 0
      %v1801 = vsel %vm458, %v1705, 0
      %v1804 = vsel %vm458, %v1706, 0
      %v1807 = vsel %vm458, %v1707, 0
      %v1810 = vsel %vm458, %v1708, 0
      %v1813 = vsel %vm458, %v1709, 0
      %v1816 = vsel %vm458, %v1710, 0
      %v1819 = vsel %vm458, %v1711, 0
      %v1822 = vsel %vm458, %v1712, 0
      %v1825 = vsel %vm458, %v1713, 0
      %v1828 = vsel %vm458, %v1714, 0
      %v1831 = vsel %vm458, %v1715, 0
      %v1834 = vsel %vm458, %v1716, 0
      %1836 = vmatprep.subr.bf16.mxu0 0
      %1837 = vmatpush1.bf16.msra.mxu0 %v1736
      %1838 = vmatprep.subr.bf16.mxu0 0
      %1839 = vmatpush1.bf16.msra.mxu0 %v1737
      %1840 = vmatprep.subr.bf16.mxu0 0
      %1841 = vmatpush1.bf16.msra.mxu0 0
      %1842 = vmatprep.subr.bf16.mxu0 0
      %1843 = vmatpush1.bf16.msra.mxu0 0
      %1844 = vmatprep.subr.bf16.mxu0 0
      %1845 = vmatpush1.bf16.msra.mxu0 0
      %1846 = vmatprep.subr.bf16.mxu0 0
      %1847 = vmatpush1.bf16.msra.mxu0 0
      %1848 = vmatprep.subr.bf16.mxu0 0
      %1849 = vmatpush1.bf16.msra.mxu0 0
      %1850 = vmatprep.subr.bf16.mxu0 0
      %1851 = vmatpush1.bf16.msra.mxu0 0
      %1852 = vmatprep.subr.bf16.mxu0 0
      %1853 = vmatpush1.bf16.msra.mxu0 0
      %1854 = vmatprep.subr.bf16.mxu0 0
      %1855 = vmatpush1.bf16.msra.mxu0 0
      %1856 = vmatprep.subr.bf16.mxu0 0
      %1857 = vmatpush1.bf16.msra.mxu0 0
      %1858 = vmatprep.subr.bf16.mxu0 0
      %1859 = vmatpush1.bf16.msra.mxu0 0
      %1860 = vmatprep.subr.bf16.mxu0 0
      %1861 = vmatpush1.bf16.msra.mxu0 0
      %1862 = vmatprep.subr.bf16.mxu0 0
      %1863 = vmatpush1.bf16.msra.mxu0 0
      %1864 = vmatprep.subr.bf16.mxu0 0
      %1865 = vmatpush1.bf16.msra.mxu0 0
      %1866 = vmatprep.subr.bf16.mxu0 0
      %1867 = vmatpush1.bf16.msra.mxu0 0
      %1868 = vmatprep.mubr.bf16.mxu0 0
      %1869 = vmatmul.mubr.bf16.gmra.mrb[0].mxu0 %v1741
      %v1870 = vpop.f32.mrb[0].mxu0
      %v1871 = vadd.f32 %v1726, %v1870
      %v1872 = vpop.f32.mrb[0].mxu0
      %v1873 = vpop.f32.mrb[0].mxu0
      %v1874 = vadd.f32 %v1726, %v1873
      %v1875 = vpop.f32.mrb[0].mxu0
      %1876 = vmatprep.mubr.bf16.mxu0 0
      %1877 = vmatmul.mubr.bf16.gmra.mrb[0].mxu0 %v1744
      %v1878 = vpop.f32.mrb[0].mxu0
      %v1879 = vadd.f32 %v1726, %v1878
      %v1880 = vpop.f32.mrb[0].mxu0
      %v1881 = vpop.f32.mrb[0].mxu0
      %v1882 = vadd.f32 %v1726, %v1881
      %v1883 = vpop.f32.mrb[0].mxu0
      %1884 = vmatprep.mubr.bf16.mxu0 0
      %1885 = vmatmul.mubr.bf16.gmra.mrb[0].mxu0 %v1747
      %v1886 = vpop.f32.mrb[0].mxu0
      %v1887 = vadd.f32 %v1726, %v1886
      %v1888 = vpop.f32.mrb[0].mxu0
      %v1889 = vpop.f32.mrb[0].mxu0
      %v1890 = vadd.f32 %v1726, %v1889
      %v1891 = vpop.f32.mrb[0].mxu0
      %1892 = vmatprep.mubr.bf16.mxu0 0
      %1893 = vmatmul.mubr.bf16.gmra.mrb[0].mxu0 %v1750
      %v1894 = vpop.f32.mrb[0].mxu0
      %v1895 = vadd.f32 %v1726, %v1894
      %v1896 = vpop.f32.mrb[0].mxu0
      %v1897 = vpop.f32.mrb[0].mxu0
      %v1898 = vadd.f32 %v1726, %v1897
      %v1899 = vpop.f32.mrb[0].mxu0
      %1900 = vmatprep.mubr.bf16.mxu0 0
      %1901 = vmatmul.mubr.bf16.gmra.mrb[0].mxu0 %v1753
      %v1902 = vpop.f32.mrb[0].mxu0
      %v1903 = vadd.f32 %v1726, %v1902
      %v1904 = vpop.f32.mrb[0].mxu0
      %v1905 = vpop.f32.mrb[0].mxu0
      %v1906 = vadd.f32 %v1726, %v1905
      %v1907 = vpop.f32.mrb[0].mxu0
      %1908 = vmatprep.mubr.bf16.mxu0 0
      %1909 = vmatmul.mubr.bf16.gmra.mrb[0].mxu0 %v1756
      %v1910 = vpop.f32.mrb[0].mxu0
      %v1911 = vadd.f32 %v1726, %v1910
      %v1912 = vpop.f32.mrb[0].mxu0
      %v1913 = vpop.f32.mrb[0].mxu0
      %v1914 = vadd.f32 %v1726, %v1913
      %v1915 = vpop.f32.mrb[0].mxu0
      %1916 = vmatprep.mubr.bf16.mxu0 0
      %1917 = vmatmul.mubr.bf16.gmra.mrb[0].mxu0 %v1759
      %v1918 = vpop.f32.mrb[0].mxu0
      %v1919 = vadd.f32 %v1726, %v1918
      %v1920 = vpop.f32.mrb[0].mxu0
      %v1921 = vpop.f32.mrb[0].mxu0
      %v1922 = vadd.f32 %v1726, %v1921
      %v1923 = vpop.f32.mrb[0].mxu0
      %1924 = vmatprep.mubr.bf16.mxu0 0
      %1925 = vmatmul.mubr.bf16.gmra.mrb[0].mxu0 %v1762
      %v1926 = vpop.f32.mrb[0].mxu0
      %v1927 = vadd.f32 %v1726, %v1926
      %v1928 = vpop.f32.mrb[0].mxu0
      %v1929 = vpop.f32.mrb[0].mxu0
      %v1930 = vadd.f32 %v1726, %v1929
      %v1931 = vpop.f32.mrb[0].mxu0
      %1932 = vmatprep.mubr.bf16.mxu0 0
      %1933 = vmatmul.mubr.bf16.gmra.mrb[0].mxu0 %v1765
      %v1934 = vpop.f32.mrb[0].mxu0
      %v1935 = vadd.f32 %v1726, %v1934
      %v1936 = vpop.f32.mrb[0].mxu0
      %v1937 = vpop.f32.mrb[0].mxu0
      %v1938 = vadd.f32 %v1726, %v1937
      %v1939 = vpop.f32.mrb[0].mxu0
      %1940 = vmatprep.mubr.bf16.mxu0 0
      %1941 = vmatmul.mubr.bf16.gmra.mrb[0].mxu0 %v1768
      %v1942 = vpop.f32.mrb[0].mxu0
      %v1943 = vadd.f32 %v1726, %v1942
      %v1944 = vpop.f32.mrb[0].mxu0
      %v1945 = vpop.f32.mrb[0].mxu0
      %v1946 = vadd.f32 %v1726, %v1945
      %v1947 = vpop.f32.mrb[0].mxu0
      %1948 = vmatprep.mubr.bf16.mxu0 0
      %1949 = vmatmul.mubr.bf16.gmra.mrb[0].mxu0 %v1771
      %v1950 = vpop.f32.mrb[0].mxu0
      %v1951 = vadd.f32 %v1726, %v1950
      %v1952 = vpop.f32.mrb[0].mxu0
      %v1953 = vpop.f32.mrb[0].mxu0
      %v1954 = vadd.f32 %v1726, %v1953
      %v1955 = vpop.f32.mrb[0].mxu0
      %1956 = vmatprep.mubr.bf16.mxu0 0
      %1957 = vmatmul.mubr.bf16.gmra.mrb[0].mxu0 %v1774
      %v1958 = vpop.f32.mrb[0].mxu0
      %v1959 = vadd.f32 %v1726, %v1958
      %v1960 = vpop.f32.mrb[0].mxu0
      %v1961 = vpop.f32.mrb[0].mxu0
      %v1962 = vadd.f32 %v1726, %v1961
      %v1963 = vpop.f32.mrb[0].mxu0
      %1964 = vmatprep.mubr.bf16.mxu0 0
      %1965 = vmatmul.mubr.bf16.gmra.mrb[0].mxu0 %v1777
      %v1966 = vpop.f32.mrb[0].mxu0
      %v1967 = vadd.f32 %v1726, %v1966
      %v1968 = vpop.f32.mrb[0].mxu0
      %v1969 = vpop.f32.mrb[0].mxu0
      %v1970 = vadd.f32 %v1726, %v1969
      %v1971 = vpop.f32.mrb[0].mxu0
      %1972 = vmatprep.mubr.bf16.mxu0 0
      %1973 = vmatmul.mubr.bf16.gmra.mrb[0].mxu0 %v1780
      %v1974 = vpop.f32.mrb[0].mxu0
      %v1975 = vadd.f32 %v1726, %v1974
      %v1976 = vpop.f32.mrb[0].mxu0
      %v1977 = vpop.f32.mrb[0].mxu0
      %v1978 = vadd.f32 %v1726, %v1977
      %v1979 = vpop.f32.mrb[0].mxu0
      %1980 = vmatprep.mubr.bf16.mxu0 0
      %1981 = vmatmul.mubr.bf16.gmra.mrb[0].mxu0 %v1783
      %v1982 = vpop.f32.mrb[0].mxu0
      %v1983 = vadd.f32 %v1726, %v1982
      %v1984 = vpop.f32.mrb[0].mxu0
      %v1985 = vpop.f32.mrb[0].mxu0
      %v1986 = vadd.f32 %v1726, %v1985
      %v1987 = vpop.f32.mrb[0].mxu0
      %1988 = vmatprep.mubr.bf16.mxu0 0
      %1989 = vmatmul.mubr.bf16.gmra.mrb[0].mxu0 %v1786
      %v1990 = vpop.f32.mrb[0].mxu0
      %v1991 = vadd.f32 %v1726, %v1990
      %v1992 = vpop.f32.mrb[0].mxu0
      %v1993 = vpop.f32.mrb[0].mxu0
      %v1994 = vadd.f32 %v1726, %v1993
      %v1995 = vpop.f32.mrb[0].mxu0
      %1996 = vmatprep.mubr.bf16.mxu0 0
      %1997 = vmatmul.mubr.bf16.gmra.mrb[0].mxu0 %v1789
      %v1998 = vpop.f32.mrb[0].mxu0
      %v1999 = vadd.f32 %v1726, %v1998
      %v2000 = vpop.f32.mrb[0].mxu0
      %v2001 = vpop.f32.mrb[0].mxu0
      %v2002 = vadd.f32 %v1726, %v2001
      %v2003 = vpop.f32.mrb[0].mxu0
      %2004 = vmatprep.mubr.bf16.mxu0 0
      %2005 = vmatmul.mubr.bf16.gmra.mrb[0].mxu0 %v1792
      %v2006 = vpop.f32.mrb[0].mxu0
      %v2007 = vadd.f32 %v1726, %v2006
      %v2008 = vpop.f32.mrb[0].mxu0
      %v2009 = vpop.f32.mrb[0].mxu0
      %v2010 = vadd.f32 %v1726, %v2009
      %v2011 = vpop.f32.mrb[0].mxu0
      %2012 = vmatprep.mubr.bf16.mxu0 0
      %2013 = vmatmul.mubr.bf16.gmra.mrb[0].mxu0 %v1795
      %v2014 = vpop.f32.mrb[0].mxu0
      %v2015 = vadd.f32 %v1726, %v2014
      %v2016 = vpop.f32.mrb[0].mxu0
      %v2017 = vpop.f32.mrb[0].mxu0
      %v2018 = vadd.f32 %v1726, %v2017
      %v2019 = vpop.f32.mrb[0].mxu0
      %2020 = vmatprep.mubr.bf16.mxu0 0
      %2021 = vmatmul.mubr.bf16.gmra.mrb[0].mxu0 %v1798
      %v2022 = vpop.f32.mrb[0].mxu0
      %v2023 = vadd.f32 %v1726, %v2022
      %v2024 = vpop.f32.mrb[0].mxu0
      %v2025 = vpop.f32.mrb[0].mxu0
      %v2026 = vadd.f32 %v1726, %v2025
      %v2027 = vpop.f32.mrb[0].mxu0
      %2028 = vmatprep.mubr.bf16.mxu0 0
      %2029 = vmatmul.mubr.bf16.gmra.mrb[0].mxu0 %v1801
      %v2030 = vpop.f32.mrb[0].mxu0
      %v2031 = vadd.f32 %v1726, %v2030
      %v2032 = vpop.f32.mrb[0].mxu0
      %v2033 = vpop.f32.mrb[0].mxu0
      %v2034 = vadd.f32 %v1726, %v2033
      %v2035 = vpop.f32.mrb[0].mxu0
      %2036 = vmatprep.mubr.bf16.mxu0 0
      %2037 = vmatmul.mubr.bf16.gmra.mrb[0].mxu0 %v1804
      %v2038 = vpop.f32.mrb[0].mxu0
      %v2039 = vadd.f32 %v1726, %v2038
      %v2040 = vpop.f32.mrb[0].mxu0
      %v2041 = vpop.f32.mrb[0].mxu0
      %v2042 = vadd.f32 %v1726, %v2041
      %v2043 = vpop.f32.mrb[0].mxu0
      %2044 = vmatprep.mubr.bf16.mxu0 0
      %2045 = vmatmul.mubr.bf16.gmra.mrb[0].mxu0 %v1807
      %v2046 = vpop.f32.mrb[0].mxu0
      %v2047 = vadd.f32 %v1726, %v2046
      %v2048 = vpop.f32.mrb[0].mxu0
      %v2049 = vpop.f32.mrb[0].mxu0
      %v2050 = vadd.f32 %v1726, %v2049
      %v2051 = vpop.f32.mrb[0].mxu0
      %2052 = vmatprep.mubr.bf16.mxu0 0
      %2053 = vmatmul.mubr.bf16.gmra.mrb[0].mxu0 %v1810
      %v2054 = vpop.f32.mrb[0].mxu0
      %v2055 = vadd.f32 %v1726, %v2054
      %v2056 = vpop.f32.mrb[0].mxu0
      %v2057 = vpop.f32.mrb[0].mxu0
      %v2058 = vadd.f32 %v1726, %v2057
      %v2059 = vpop.f32.mrb[0].mxu0
      %2060 = vmatprep.mubr.bf16.mxu0 0
      %2061 = vmatmul.mubr.bf16.gmra.mrb[0].mxu0 %v1813
      %v2062 = vpop.f32.mrb[0].mxu0
      %v2063 = vadd.f32 %v1726, %v2062
      %v2064 = vpop.f32.mrb[0].mxu0
      %v2065 = vpop.f32.mrb[0].mxu0
      %v2066 = vadd.f32 %v1726, %v2065
      %v2067 = vpop.f32.mrb[0].mxu0
      %2068 = vmatprep.mubr.bf16.mxu0 0
      %2069 = vmatmul.mubr.bf16.gmra.mrb[0].mxu0 %v1816
      %v2070 = vpop.f32.mrb[0].mxu0
      %v2071 = vadd.f32 %v1726, %v2070
      %v2072 = vpop.f32.mrb[0].mxu0
      %v2073 = vpop.f32.mrb[0].mxu0
      %v2074 = vadd.f32 %v1726, %v2073
      %v2075 = vpop.f32.mrb[0].mxu0
      %2076 = vmatprep.mubr.bf16.mxu0 0
      %2077 = vmatmul.mubr.bf16.gmra.mrb[0].mxu0 %v1819
      %v2078 = vpop.f32.mrb[0].mxu0
      %v2079 = vadd.f32 %v1726, %v2078
      %v2080 = vpop.f32.mrb[0].mxu0
      %v2081 = vpop.f32.mrb[0].mxu0
      %v2082 = vadd.f32 %v1726, %v2081
      %v2083 = vpop.f32.mrb[0].mxu0
      %2084 = vmatprep.mubr.bf16.mxu0 0
      %2085 = vmatmul.mubr.bf16.gmra.mrb[0].mxu0 %v1822
      %v2086 = vpop.f32.mrb[0].mxu0
      %v2087 = vadd.f32 %v1726, %v2086
      %v2088 = vpop.f32.mrb[0].mxu0
      %v2089 = vpop.f32.mrb[0].mxu0
      %v2090 = vadd.f32 %v1726, %v2089
      %v2091 = vpop.f32.mrb[0].mxu0
      %2092 = vmatprep.mubr.bf16.mxu0 0
      %2093 = vmatmul.mubr.bf16.gmra.mrb[0].mxu0 %v1825
      %v2094 = vpop.f32.mrb[0].mxu0
      %v2095 = vadd.f32 %v1726, %v2094
      %v2096 = vpop.f32.mrb[0].mxu0
      %v2097 = vpop.f32.mrb[0].mxu0
      %v2098 = vadd.f32 %v1726, %v2097
      %v2099 = vpop.f32.mrb[0].mxu0
      %2100 = vmatprep.mubr.bf16.mxu0 0
      %2101 = vmatmul.mubr.bf16.gmra.mrb[0].mxu0 %v1828
      %v2102 = vpop.f32.mrb[0].mxu0
      %v2103 = vadd.f32 %v1726, %v2102
      %v2104 = vpop.f32.mrb[0].mxu0
      %v2105 = vpop.f32.mrb[0].mxu0
      %v2106 = vadd.f32 %v1726, %v2105
      %v2107 = vpop.f32.mrb[0].mxu0
      %2108 = vmatprep.mubr.bf16.mxu0 0
      %2109 = vmatmul.mubr.bf16.gmra.mrb[0].mxu0 %v1831
      %v2110 = vpop.f32.mrb[0].mxu0
      %v2111 = vadd.f32 %v1726, %v2110
      %v2112 = vpop.f32.mrb[0].mxu0
      %v2113 = vpop.f32.mrb[0].mxu0
      %v2114 = vadd.f32 %v1726, %v2113
      %v2115 = vpop.f32.mrb[0].mxu0
      %2116 = vmatprep.mubr.bf16.mxu0 0
      %2117 = vmatmul.mubr.bf16.gmra.mrb[0].mxu0 %v1834
      %v2118 = vpop.f32.mrb[0].mxu0
      %v2119 = vadd.f32 %v1726, %v2118
      %v2120 = vpop.f32.mrb[0].mxu0
      %v2121 = vpop.f32.mrb[0].mxu0
      %v2122 = vadd.f32 %v1726, %v2121
      %v2123 = vpop.f32.mrb[0].mxu0
      %2124 = vdwg.mxu0
      %vm2125 = vcmp.gt.f32.partialorder %v1871, 0.0
      %vm2126 = vcmp.gt.f32.partialorder %v1874, 0.0
      %vm2127 = vcmp.gt.f32.partialorder %v1879, 0.0
      %vm2128 = vcmp.gt.f32.partialorder %v1882, 0.0
      %vm2129 = vcmp.gt.f32.partialorder %v1887, 0.0
      %vm2130 = vcmp.gt.f32.partialorder %v1890, 0.0
      %vm2131 = vcmp.gt.f32.partialorder %v1895, 0.0
      %vm2132 = vcmp.gt.f32.partialorder %v1898, 0.0
      %vm2133 = vcmp.gt.f32.partialorder %v1903, 0.0
      %vm2134 = vcmp.gt.f32.partialorder %v1906, 0.0
      %vm2135 = vcmp.gt.f32.partialorder %v1911, 0.0
      %vm2136 = vcmp.gt.f32.partialorder %v1914, 0.0
      %vm2137 = vcmp.gt.f32.partialorder %v1919, 0.0
      %vm2138 = vcmp.gt.f32.partialorder %v1922, 0.0
      %vm2139 = vcmp.gt.f32.partialorder %v1927, 0.0
      %vm2140 = vcmp.gt.f32.partialorder %v1930, 0.0
      %vm2141 = vcmp.gt.f32.partialorder %v1935, 0.0
      %vm2142 = vcmp.gt.f32.partialorder %v1938, 0.0
      %vm2143 = vcmp.gt.f32.partialorder %v1943, 0.0
      %vm2144 = vcmp.gt.f32.partialorder %v1946, 0.0
      %vm2145 = vcmp.gt.f32.partialorder %v1951, 0.0
      %vm2146 = vcmp.gt.f32.partialorder %v1954, 0.0
      %vm2147 = vcmp.gt.f32.partialorder %v1959, 0.0
      %vm2148 = vcmp.gt.f32.partialorder %v1962, 0.0
      %vm2149 = vcmp.gt.f32.partialorder %v1967, 0.0
      %vm2150 = vcmp.gt.f32.partialorder %v1970, 0.0
      %vm2151 = vcmp.gt.f32.partialorder %v1975, 0.0
      %vm2152 = vcmp.gt.f32.partialorder %v1978, 0.0
      %vm2153 = vcmp.gt.f32.partialorder %v1983, 0.0
      %vm2154 = vcmp.gt.f32.partialorder %v1986, 0.0
      %vm2155 = vcmp.gt.f32.partialorder %v1991, 0.0
      %vm2156 = vcmp.gt.f32.partialorder %v1994, 0.0
      %vm2157 = vcmp.gt.f32.partialorder %v1999, 0.0
      %vm2158 = vcmp.gt.f32.partialorder %v2002, 0.0
      %vm2159 = vcmp.gt.f32.partialorder %v2007, 0.0
      %vm2160 = vcmp.gt.f32.partialorder %v2010, 0.0
      %vm2161 = vcmp.gt.f32.partialorder %v2015, 0.0
      %vm2162 = vcmp.gt.f32.partialorder %v2018, 0.0
      %vm2163 = vcmp.gt.f32.partialorder %v2023, 0.0
      %vm2164 = vcmp.gt.f32.partialorder %v2026, 0.0
      %vm2165 = vcmp.gt.f32.partialorder %v2031, 0.0
      %vm2166 = vcmp.gt.f32.partialorder %v2034, 0.0
      %vm2167 = vcmp.gt.f32.partialorder %v2039, 0.0
      %vm2168 = vcmp.gt.f32.partialorder %v2042, 0.0
      %vm2169 = vcmp.gt.f32.partialorder %v2047, 0.0
      %vm2170 = vcmp.gt.f32.partialorder %v2050, 0.0
      %vm2171 = vcmp.gt.f32.partialorder %v2055, 0.0
      %vm2172 = vcmp.gt.f32.partialorder %v2058, 0.0
      %vm2173 = vcmp.gt.f32.partialorder %v2063, 0.0
      %vm2174 = vcmp.gt.f32.partialorder %v2066, 0.0
      %vm2175 = vcmp.gt.f32.partialorder %v2071, 0.0
      %vm2176 = vcmp.gt.f32.partialorder %v2074, 0.0
      %vm2177 = vcmp.gt.f32.partialorder %v2079, 0.0
      %vm2178 = vcmp.gt.f32.partialorder %v2082, 0.0
      %vm2179 = vcmp.gt.f32.partialorder %v2087, 0.0
      %vm2180 = vcmp.gt.f32.partialorder %v2090, 0.0
      %vm2181 = vcmp.gt.f32.partialorder %v2095, 0.0
      %vm2182 = vcmp.gt.f32.partialorder %v2098, 0.0
      %vm2183 = vcmp.gt.f32.partialorder %v2103, 0.0
      %vm2184 = vcmp.gt.f32.partialorder %v2106, 0.0
      %vm2185 = vcmp.gt.f32.partialorder %v2111, 0.0
      %vm2186 = vcmp.gt.f32.partialorder %v2114, 0.0
      %vm2187 = vcmp.gt.f32.partialorder %v2119, 0.0
      %vm2188 = vcmp.gt.f32.partialorder %v2122, 0.0
      %v2189 = vmul.f32 %v1871, 0.1
      %v2190 = vmul.f32 %v1874, 0.1
      %v2191 = vmul.f32 %v1879, 0.1
      %v2192 = vmul.f32 %v1882, 0.1
      %v2193 = vmul.f32 %v1887, 0.1
      %v2194 = vmul.f32 %v1890, 0.1
      %v2195 = vmul.f32 %v1895, 0.1
      %v2196 = vmul.f32 %v1898, 0.1
      %v2197 = vmul.f32 %v1903, 0.1
      %v2198 = vmul.f32 %v1906, 0.1
      %v2199 = vmul.f32 %v1911, 0.1
      %v2200 = vmul.f32 %v1914, 0.1
      %v2201 = vmul.f32 %v1919, 0.1
      %v2202 = vmul.f32 %v1922, 0.1
      %v2203 = vmul.f32 %v1927, 0.1
      %v2204 = vmul.f32 %v1930, 0.1
      %v2205 = vmul.f32 %v1935, 0.1
      %v2206 = vmul.f32 %v1938, 0.1
      %v2207 = vmul.f32 %v1943, 0.1
      %v2208 = vmul.f32 %v1946, 0.1
      %v2209 = vmul.f32 %v1951, 0.1
      %v2210 = vmul.f32 %v1954, 0.1
      %v2211 = vmul.f32 %v1959, 0.1
      %v2212 = vmul.f32 %v1962, 0.1
      %v2213 = vmul.f32 %v1967, 0.1
      %v2214 = vmul.f32 %v1970, 0.1
      %v2215 = vmul.f32 %v1975, 0.1
      %v2216 = vmul.f32 %v1978, 0.1
      %v2217 = vmul.f32 %v1983, 0.1
      %v2218 = vmul.f32 %v1986, 0.1
      %v2219 = vmul.f32 %v1991, 0.1
      %v2220 = vmul.f32 %v1994, 0.1
      %v2221 = vmul.f32 %v1999, 0.1
      %v2222 = vmul.f32 %v2002, 0.1
      %v2223 = vmul.f32 %v2007, 0.1
      %v2224 = vmul.f32 %v2010, 0.1
      %v2225 = vmul.f32 %v2015, 0.1
      %v2226 = vmul.f32 %v2018, 0.1
      %v2227 = vmul.f32 %v2023, 0.1
      %v2228 = vmul.f32 %v2026, 0.1
      %v2229 = vmul.f32 %v2031, 0.1
      %v2230 = vmul.f32 %v2034, 0.1
      %v2231 = vmul.f32 %v2039, 0.1
      %v2232 = vmul.f32 %v2042, 0.1
      %v2233 = vmul.f32 %v2047, 0.1
      %v2234 = vmul.f32 %v2050, 0.1
      %v2235 = vmul.f32 %v2055, 0.1
      %v2236 = vmul.f32 %v2058, 0.1
      %v2237 = vmul.f32 %v2063, 0.1
      %v2238 = vmul.f32 %v2066, 0.1
      %v2239 = vmul.f32 %v2071, 0.1
      %v2240 = vmul.f32 %v2074, 0.1
      %v2241 = vmul.f32 %v2079, 0.1
      %v2242 = vmul.f32 %v2082, 0.1
      %v2243 = vmul.f32 %v2087, 0.1
      %v2244 = vmul.f32 %v2090, 0.1
      %v2245 = vmul.f32 %v2095, 0.1
      %v2246 = vmul.f32 %v2098, 0.1
      %v2247 = vmul.f32 %v2103, 0.1
      %v2248 = vmul.f32 %v2106, 0.1
      %v2249 = vmul.f32 %v2111, 0.1
      %v2250 = vmul.f32 %v2114, 0.1
      %v2251 = vmul.f32 %v2119, 0.1
      %v2252 = vmul.f32 %v2122, 0.1
      %v2253 = vsel %vm2125, %v1871, %v2189
      %v2254 = vsel %vm2126, %v1874, %v2190
      %v2255 = vsel %vm2127, %v1879, %v2191
      %v2256 = vsel %vm2128, %v1882, %v2192
      %v2257 = vsel %vm2129, %v1887, %v2193
      %v2258 = vsel %vm2130, %v1890, %v2194
      %v2259 = vsel %vm2131, %v1895, %v2195
      %v2260 = vsel %vm2132, %v1898, %v2196
      %v2261 = vsel %vm2133, %v1903, %v2197
      %v2262 = vsel %vm2134, %v1906, %v2198
      %v2263 = vsel %vm2135, %v1911, %v2199
      %v2264 = vsel %vm2136, %v1914, %v2200
      %v2265 = vsel %vm2137, %v1919, %v2201
      %v2266 = vsel %vm2138, %v1922, %v2202
      %v2267 = vsel %vm2139, %v1927, %v2203
      %v2268 = vsel %vm2140, %v1930, %v2204
      %v2269 = vsel %vm2141, %v1935, %v2205
      %v2270 = vsel %vm2142, %v1938, %v2206
      %v2271 = vsel %vm2143, %v1943, %v2207
      %v2272 = vsel %vm2144, %v1946, %v2208
      %v2273 = vsel %vm2145, %v1951, %v2209
      %v2274 = vsel %vm2146, %v1954, %v2210
      %v2275 = vsel %vm2147, %v1959, %v2211
      %v2276 = vsel %vm2148, %v1962, %v2212
      %v2277 = vsel %vm2149, %v1967, %v2213
      %v2278 = vsel %vm2150, %v1970, %v2214
      %v2279 = vsel %vm2151, %v1975, %v2215
      %v2280 = vsel %vm2152, %v1978, %v2216
      %v2281 = vsel %vm2153, %v1983, %v2217
      %v2282 = vsel %vm2154, %v1986, %v2218
      %v2283 = vsel %vm2155, %v1991, %v2219
      %v2284 = vsel %vm2156, %v1994, %v2220
      %v2285 = vsel %vm2157, %v1999, %v2221
      %v2286 = vsel %vm2158, %v2002, %v2222
      %v2287 = vsel %vm2159, %v2007, %v2223
      %v2288 = vsel %vm2160, %v2010, %v2224
      %v2289 = vsel %vm2161, %v2015, %v2225
      %v2290 = vsel %vm2162, %v2018, %v2226
      %v2291 = vsel %vm2163, %v2023, %v2227
      %v2292 = vsel %vm2164, %v2026, %v2228
      %v2293 = vsel %vm2165, %v2031, %v2229
      %v2294 = vsel %vm2166, %v2034, %v2230
      %v2295 = vsel %vm2167, %v2039, %v2231
      %v2296 = vsel %vm2168, %v2042, %v2232
      %v2297 = vsel %vm2169, %v2047, %v2233
      %v2298 = vsel %vm2170, %v2050, %v2234
      %v2299 = vsel %vm2171, %v2055, %v2235
      %v2300 = vsel %vm2172, %v2058, %v2236
      %v2301 = vsel %vm2173, %v2063, %v2237
      %v2302 = vsel %vm2174, %v2066, %v2238
      %v2303 = vsel %vm2175, %v2071, %v2239
      %v2304 = vsel %vm2176, %v2074, %v2240
      %v2305 = vsel %vm2177, %v2079, %v2241
      %v2306 = vsel %vm2178, %v2082, %v2242
      %v2307 = vsel %vm2179, %v2087, %v2243
      %v2308 = vsel %vm2180, %v2090, %v2244
      %v2309 = vsel %vm2181, %v2095, %v2245
      %v2310 = vsel %vm2182, %v2098, %v2246
      %v2311 = vsel %vm2183, %v2103, %v2247
      %v2312 = vsel %vm2184, %v2106, %v2248
      %v2313 = vsel %vm2185, %v2111, %v2249
      %v2314 = vsel %vm2186, %v2114, %v2250
      %v2315 = vsel %vm2187, %v2119, %v2251
      %v2316 = vsel %vm2188, %v2122, %v2252
      %v2317 = vld [vmem:[%s7] sm:$0x1]
      %v2319 = vlaneseq
      %v2320 = vshrl.u32 %v2319, 7
      %v2321 = vsub.s32 0, %v2320
      %v2322 = vrot.slane %v2317, %v2321
      %v2324 = vmul.f32 %v2253, %v2322
      %v2325 = vmul.f32 %v2254, %v2322
      %v2326 = vmul.f32 %v2255, %v2322
      %v2327 = vmul.f32 %v2256, %v2322
      %v2328 = vmul.f32 %v2257, %v2322
      %v2329 = vmul.f32 %v2258, %v2322
      %v2330 = vmul.f32 %v2259, %v2322
      %v2331 = vmul.f32 %v2260, %v2322
      %v2332 = vmul.f32 %v2261, %v2322
      %v2333 = vmul.f32 %v2262, %v2322
      %v2334 = vmul.f32 %v2263, %v2322
      %v2335 = vmul.f32 %v2264, %v2322
      %v2336 = vmul.f32 %v2265, %v2322
      %v2337 = vmul.f32 %v2266, %v2322
      %v2338 = vmul.f32 %v2267, %v2322
      %v2339 = vmul.f32 %v2268, %v2322
      %v2340 = vmul.f32 %v2269, %v2322
      %v2341 = vmul.f32 %v2270, %v2322
      %v2342 = vmul.f32 %v2271, %v2322
      %v2343 = vmul.f32 %v2272, %v2322
      %v2344 = vmul.f32 %v2273, %v2322
      %v2345 = vmul.f32 %v2274, %v2322
      %v2346 = vmul.f32 %v2275, %v2322
      %v2347 = vmul.f32 %v2276, %v2322
      %v2348 = vmul.f32 %v2277, %v2322
      %v2349 = vmul.f32 %v2278, %v2322
      %v2350 = vmul.f32 %v2279, %v2322
      %v2351 = vmul.f32 %v2280, %v2322
      %v2352 = vmul.f32 %v2281, %v2322
      %v2353 = vmul.f32 %v2282, %v2322
      %v2354 = vmul.f32 %v2283, %v2322
      %v2355 = vmul.f32 %v2284, %v2322
      %v2356 = vmul.f32 %v2285, %v2322
      %v2357 = vmul.f32 %v2286, %v2322
      %v2358 = vmul.f32 %v2287, %v2322
      %v2359 = vmul.f32 %v2288, %v2322
      %v2360 = vmul.f32 %v2289, %v2322
      %v2361 = vmul.f32 %v2290, %v2322
      %v2362 = vmul.f32 %v2291, %v2322
      %v2363 = vmul.f32 %v2292, %v2322
      %v2364 = vmul.f32 %v2293, %v2322
      %v2365 = vmul.f32 %v2294, %v2322
      %v2366 = vmul.f32 %v2295, %v2322
      %v2367 = vmul.f32 %v2296, %v2322
      %v2368 = vmul.f32 %v2297, %v2322
      %v2369 = vmul.f32 %v2298, %v2322
      %v2370 = vmul.f32 %v2299, %v2322
      %v2371 = vmul.f32 %v2300, %v2322
      %v2372 = vmul.f32 %v2301, %v2322
      %v2373 = vmul.f32 %v2302, %v2322
      %v2374 = vmul.f32 %v2303, %v2322
      %v2375 = vmul.f32 %v2304, %v2322
      %v2376 = vmul.f32 %v2305, %v2322
      %v2377 = vmul.f32 %v2306, %v2322
      %v2378 = vmul.f32 %v2307, %v2322
      %v2379 = vmul.f32 %v2308, %v2322
      %v2380 = vmul.f32 %v2309, %v2322
      %v2381 = vmul.f32 %v2310, %v2322
      %v2382 = vmul.f32 %v2311, %v2322
      %v2383 = vmul.f32 %v2312, %v2322
      %v2384 = vmul.f32 %v2313, %v2322
      %v2385 = vmul.f32 %v2314, %v2322
      %v2386 = vmul.f32 %v2315, %v2322
      %v2387 = vmul.f32 %v2316, %v2322
      %vm2388 = vcmask 130048
      %v2389 = vsel %vm2388, %v2324, 0.0
      %2390 = vadd.xlane.f32.xlu0 %v2389
      %v2391 = vpop.xlane.xlu0 %2390
      %v2392 = vsel %vm2388, %v2325, 0.0
      %2393 = vadd.xlane.f32.xlu0 %v2392
      %v2394 = vpop.xlane.xlu0 %2393
      %v2395 = vsel %vm2388, %v2326, 0.0
      %2396 = vadd.xlane.f32.xlu0 %v2395
      %v2397 = vpop.xlane.xlu0 %2396
      %v2398 = vsel %vm2388, %v2327, 0.0
      %2399 = vadd.xlane.f32.xlu0 %v2398
      %v2400 = vpop.xlane.xlu0 %2399
      %v2401 = vsel %vm2388, %v2328, 0.0
      %2402 = vadd.xlane.f32.xlu0 %v2401
      %v2403 = vpop.xlane.xlu0 %2402
      %v2404 = vsel %vm2388, %v2329, 0.0
      %2405 = vadd.xlane.f32.xlu0 %v2404
      %v2406 = vpop.xlane.xlu0 %2405
      %v2407 = vsel %vm2388, %v2330, 0.0
      %2408 = vadd.xlane.f32.xlu0 %v2407
      %v2409 = vpop.xlane.xlu0 %2408
      %v2410 = vsel %vm2388, %v2331, 0.0
      %2411 = vadd.xlane.f32.xlu0 %v2410
      %v2412 = vpop.xlane.xlu0 %2411
      %v2413 = vsel %vm2388, %v2332, 0.0
      %2414 = vadd.xlane.f32.xlu0 %v2413
      %v2415 = vpop.xlane.xlu0 %2414
      %v2416 = vsel %vm2388, %v2333, 0.0
      %2417 = vadd.xlane.f32.xlu0 %v2416
      %v2418 = vpop.xlane.xlu0 %2417
      %v2419 = vsel %vm2388, %v2334, 0.0
      %2420 = vadd.xlane.f32.xlu0 %v2419
      %v2421 = vpop.xlane.xlu0 %2420
      %v2422 = vsel %vm2388, %v2335, 0.0
      %2423 = vadd.xlane.f32.xlu0 %v2422
      %v2424 = vpop.xlane.xlu0 %2423
      %v2425 = vsel %vm2388, %v2336, 0.0
      %2426 = vadd.xlane.f32.xlu0 %v2425
      %v2427 = vpop.xlane.xlu0 %2426
      %v2428 = vsel %vm2388, %v2337, 0.0
      %2429 = vadd.xlane.f32.xlu0 %v2428
      %v2430 = vpop.xlane.xlu0 %2429
      %v2431 = vsel %vm2388, %v2338, 0.0
      %2432 = vadd.xlane.f32.xlu0 %v2431
      %v2433 = vpop.xlane.xlu0 %2432
      %v2434 = vsel %vm2388, %v2339, 0.0
      %2435 = vadd.xlane.f32.xlu0 %v2434
      %v2436 = vpop.xlane.xlu0 %2435
      %v2437 = vsel %vm2388, %v2340, 0.0
      %2438 = vadd.xlane.f32.xlu0 %v2437
      %v2439 = vpop.xlane.xlu0 %2438
      %v2440 = vsel %vm2388, %v2341, 0.0
      %2441 = vadd.xlane.f32.xlu0 %v2440
      %v2442 = vpop.xlane.xlu0 %2441
      %v2443 = vsel %vm2388, %v2342, 0.0
      %2444 = vadd.xlane.f32.xlu0 %v2443
      %v2445 = vpop.xlane.xlu0 %2444
      %v2446 = vsel %vm2388, %v2343, 0.0
      %2447 = vadd.xlane.f32.xlu0 %v2446
      %v2448 = vpop.xlane.xlu0 %2447
      %v2449 = vsel %vm2388, %v2344, 0.0
      %2450 = vadd.xlane.f32.xlu0 %v2449
      %v2451 = vpop.xlane.xlu0 %2450
      %v2452 = vsel %vm2388, %v2345, 0.0
      %2453 = vadd.xlane.f32.xlu0 %v2452
      %v2454 = vpop.xlane.xlu0 %2453
      %v2455 = vsel %vm2388, %v2346, 0.0
      %2456 = vadd.xlane.f32.xlu0 %v2455
      %v2457 = vpop.xlane.xlu0 %2456
      %v2458 = vsel %vm2388, %v2347, 0.0
      %2459 = vadd.xlane.f32.xlu0 %v2458
      %v2460 = vpop.xlane.xlu0 %2459
      %v2461 = vsel %vm2388, %v2348, 0.0
      %2462 = vadd.xlane.f32.xlu0 %v2461
      %v2463 = vpop.xlane.xlu0 %2462
      %v2464 = vsel %vm2388, %v2349, 0.0
      %2465 = vadd.xlane.f32.xlu0 %v2464
      %v2466 = vpop.xlane.xlu0 %2465
      %v2467 = vsel %vm2388, %v2350, 0.0
      %2468 = vadd.xlane.f32.xlu0 %v2467
      %v2469 = vpop.xlane.xlu0 %2468
      %v2470 = vsel %vm2388, %v2351, 0.0
      %2471 = vadd.xlane.f32.xlu0 %v2470
      %v2472 = vpop.xlane.xlu0 %2471
      %v2473 = vsel %vm2388, %v2352, 0.0
      %2474 = vadd.xlane.f32.xlu0 %v2473
      %v2475 = vpop.xlane.xlu0 %2474
      %v2476 = vsel %vm2388, %v2353, 0.0
      %2477 = vadd.xlane.f32.xlu0 %v2476
      %v2478 = vpop.xlane.xlu0 %2477
      %v2479 = vsel %vm2388, %v2354, 0.0
      %2480 = vadd.xlane.f32.xlu0 %v2479
      %v2481 = vpop.xlane.xlu0 %2480
      %v2482 = vsel %vm2388, %v2355, 0.0
      %2483 = vadd.xlane.f32.xlu0 %v2482
      %v2484 = vpop.xlane.xlu0 %2483
      %v2485 = vsel %vm2388, %v2356, 0.0
      %2486 = vadd.xlane.f32.xlu0 %v2485
      %v2487 = vpop.xlane.xlu0 %2486
      %v2488 = vsel %vm2388, %v2357, 0.0
      %2489 = vadd.xlane.f32.xlu0 %v2488
      %v2490 = vpop.xlane.xlu0 %2489
      %v2491 = vsel %vm2388, %v2358, 0.0
      %2492 = vadd.xlane.f32.xlu0 %v2491
      %v2493 = vpop.xlane.xlu0 %2492
      %v2494 = vsel %vm2388, %v2359, 0.0
      %2495 = vadd.xlane.f32.xlu0 %v2494
      %v2496 = vpop.xlane.xlu0 %2495
      %v2497 = vsel %vm2388, %v2360, 0.0
      %2498 = vadd.xlane.f32.xlu0 %v2497
      %v2499 = vpop.xlane.xlu0 %2498
      %v2500 = vsel %vm2388, %v2361, 0.0
      %2501 = vadd.xlane.f32.xlu0 %v2500
      %v2502 = vpop.xlane.xlu0 %2501
      %v2503 = vsel %vm2388, %v2362, 0.0
      %2504 = vadd.xlane.f32.xlu0 %v2503
      %v2505 = vpop.xlane.xlu0 %2504
      %v2506 = vsel %vm2388, %v2363, 0.0
      %2507 = vadd.xlane.f32.xlu0 %v2506
      %v2508 = vpop.xlane.xlu0 %2507
      %v2509 = vsel %vm2388, %v2364, 0.0
      %2510 = vadd.xlane.f32.xlu0 %v2509
      %v2511 = vpop.xlane.xlu0 %2510
      %v2512 = vsel %vm2388, %v2365, 0.0
      %2513 = vadd.xlane.f32.xlu0 %v2512
      %v2514 = vpop.xlane.xlu0 %2513
      %v2515 = vsel %vm2388, %v2366, 0.0
      %2516 = vadd.xlane.f32.xlu0 %v2515
      %v2517 = vpop.xlane.xlu0 %2516
      %v2518 = vsel %vm2388, %v2367, 0.0
      %2519 = vadd.xlane.f32.xlu0 %v2518
      %v2520 = vpop.xlane.xlu0 %2519
      %v2521 = vsel %vm2388, %v2368, 0.0
      %2522 = vadd.xlane.f32.xlu0 %v2521
      %v2523 = vpop.xlane.xlu0 %2522
      %v2524 = vsel %vm2388, %v2369, 0.0
      %2525 = vadd.xlane.f32.xlu0 %v2524
      %v2526 = vpop.xlane.xlu0 %2525
      %v2527 = vsel %vm2388, %v2370, 0.0
      %2528 = vadd.xlane.f32.xlu0 %v2527
      %v2529 = vpop.xlane.xlu0 %2528
      %v2530 = vsel %vm2388, %v2371, 0.0
      %2531 = vadd.xlane.f32.xlu0 %v2530
      %v2532 = vpop.xlane.xlu0 %2531
      %v2533 = vsel %vm2388, %v2372, 0.0
      %2534 = vadd.xlane.f32.xlu0 %v2533
      %v2535 = vpop.xlane.xlu0 %2534
      %v2536 = vsel %vm2388, %v2373, 0.0
      %2537 = vadd.xlane.f32.xlu0 %v2536
      %v2538 = vpop.xlane.xlu0 %2537
      %v2539 = vsel %vm2388, %v2374, 0.0
      %2540 = vadd.xlane.f32.xlu0 %v2539
      %v2541 = vpop.xlane.xlu0 %2540
      %v2542 = vsel %vm2388, %v2375, 0.0
      %2543 = vadd.xlane.f32.xlu0 %v2542
      %v2544 = vpop.xlane.xlu0 %2543
      %v2545 = vsel %vm2388, %v2376, 0.0
      %2546 = vadd.xlane.f32.xlu0 %v2545
      %v2547 = vpop.xlane.xlu0 %2546
      %v2548 = vsel %vm2388, %v2377, 0.0
      %2549 = vadd.xlane.f32.xlu0 %v2548
      %v2550 = vpop.xlane.xlu0 %2549
      %v2551 = vsel %vm2388, %v2378, 0.0
      %2552 = vadd.xlane.f32.xlu0 %v2551
      %v2553 = vpop.xlane.xlu0 %2552
      %v2554 = vsel %vm2388, %v2379, 0.0
      %2555 = vadd.xlane.f32.xlu0 %v2554
      %v2556 = vpop.xlane.xlu0 %2555
      %v2557 = vsel %vm2388, %v2380, 0.0
      %2558 = vadd.xlane.f32.xlu0 %v2557
      %v2559 = vpop.xlane.xlu0 %2558
      %v2560 = vsel %vm2388, %v2381, 0.0
      %2561 = vadd.xlane.f32.xlu0 %v2560
      %v2562 = vpop.xlane.xlu0 %2561
      %v2563 = vsel %vm2388, %v2382, 0.0
      %2564 = vadd.xlane.f32.xlu0 %v2563
      %v2565 = vpop.xlane.xlu0 %2564
      %v2566 = vsel %vm2388, %v2383, 0.0
      %2567 = vadd.xlane.f32.xlu0 %v2566
      %v2568 = vpop.xlane.xlu0 %2567
      %v2569 = vsel %vm2388, %v2384, 0.0
      %2570 = vadd.xlane.f32.xlu0 %v2569
      %v2571 = vpop.xlane.xlu0 %2570
      %v2572 = vsel %vm2388, %v2385, 0.0
      %2573 = vadd.xlane.f32.xlu0 %v2572
      %v2574 = vpop.xlane.xlu0 %2573
      %v2575 = vsel %vm2388, %v2386, 0.0
      %2576 = vadd.xlane.f32.xlu0 %v2575
      %v2577 = vpop.xlane.xlu0 %2576
      %v2578 = vsel %vm2388, %v2387, 0.0
      %2579 = vadd.xlane.f32.xlu0 %v2578
      %v2580 = vpop.xlane.xlu0 %2579
      %v2581 = vld [vmem:[#allocation2] sm:$0x1]
      %v2583 = vlaneseq
      %v2584 = vshrl.u32 %v2583, 7
      %v2585 = vsub.s32 0, %v2584
      %v2586 = vrot.slane %v2581, %v2585
      %v2588 = vadd.f32 %v2391, %v2586
      %v2589 = vadd.f32 %v2394, %v2586
      %v2590 = vadd.f32 %v2397, %v2586
      %v2591 = vadd.f32 %v2400, %v2586
      %v2592 = vadd.f32 %v2403, %v2586
      %v2593 = vadd.f32 %v2406, %v2586
      %v2594 = vadd.f32 %v2409, %v2586
      %v2595 = vadd.f32 %v2412, %v2586
      %v2596 = vadd.f32 %v2415, %v2586
      %v2597 = vadd.f32 %v2418, %v2586
      %v2598 = vadd.f32 %v2421, %v2586
      %v2599 = vadd.f32 %v2424, %v2586
      %v2600 = vadd.f32 %v2427, %v2586
      %v2601 = vadd.f32 %v2430, %v2586
      %v2602 = vadd.f32 %v2433, %v2586
      %v2603 = vadd.f32 %v2436, %v2586
      %v2604 = vadd.f32 %v2439, %v2586
      %v2605 = vadd.f32 %v2442, %v2586
      %v2606 = vadd.f32 %v2445, %v2586
      %v2607 = vadd.f32 %v2448, %v2586
      %v2608 = vadd.f32 %v2451, %v2586
      %v2609 = vadd.f32 %v2454, %v2586
      %v2610 = vadd.f32 %v2457, %v2586
      %v2611 = vadd.f32 %v2460, %v2586
      %v2612 = vadd.f32 %v2463, %v2586
      %v2613 = vadd.f32 %v2466, %v2586
      %v2614 = vadd.f32 %v2469, %v2586
      %v2615 = vadd.f32 %v2472, %v2586
      %v2616 = vadd.f32 %v2475, %v2586
      %v2617 = vadd.f32 %v2478, %v2586
      %v2618 = vadd.f32 %v2481, %v2586
      %v2619 = vadd.f32 %v2484, %v2586
      %v2620 = vadd.f32 %v2487, %v2586
      %v2621 = vadd.f32 %v2490, %v2586
      %v2622 = vadd.f32 %v2493, %v2586
      %v2623 = vadd.f32 %v2496, %v2586
      %v2624 = vadd.f32 %v2499, %v2586
      %v2625 = vadd.f32 %v2502, %v2586
      %v2626 = vadd.f32 %v2505, %v2586
      %v2627 = vadd.f32 %v2508, %v2586
      %v2628 = vadd.f32 %v2511, %v2586
      %v2629 = vadd.f32 %v2514, %v2586
      %v2630 = vadd.f32 %v2517, %v2586
      %v2631 = vadd.f32 %v2520, %v2586
      %v2632 = vadd.f32 %v2523, %v2586
      %v2633 = vadd.f32 %v2526, %v2586
      %v2634 = vadd.f32 %v2529, %v2586
      %v2635 = vadd.f32 %v2532, %v2586
      %v2636 = vadd.f32 %v2535, %v2586
      %v2637 = vadd.f32 %v2538, %v2586
      %v2638 = vadd.f32 %v2541, %v2586
      %v2639 = vadd.f32 %v2544, %v2586
      %v2640 = vadd.f32 %v2547, %v2586
      %v2641 = vadd.f32 %v2550, %v2586
      %v2642 = vadd.f32 %v2553, %v2586
      %v2643 = vadd.f32 %v2556, %v2586
      %v2644 = vadd.f32 %v2559, %v2586
      %v2645 = vadd.f32 %v2562, %v2586
      %v2646 = vadd.f32 %v2565, %v2586
      %v2647 = vadd.f32 %v2568, %v2586
      %v2648 = vadd.f32 %v2571, %v2586
      %v2649 = vadd.f32 %v2574, %v2586
      %v2650 = vadd.f32 %v2577, %v2586
      %v2651 = vadd.f32 %v2580, %v2586
      %v2652 = vsub.f32 0.0, %v2588
      %v2653 = vsub.f32 0.0, %v2589
      %v2654 = vsub.f32 0.0, %v2590
      %v2655 = vsub.f32 0.0, %v2591
      %v2656 = vsub.f32 0.0, %v2592
      %v2657 = vsub.f32 0.0, %v2593
      %v2658 = vsub.f32 0.0, %v2594
      %v2659 = vsub.f32 0.0, %v2595
      %v2660 = vsub.f32 0.0, %v2596
      %v2661 = vsub.f32 0.0, %v2597
      %v2662 = vsub.f32 0.0, %v2598
      %v2663 = vsub.f32 0.0, %v2599
      %v2664 = vsub.f32 0.0, %v2600
      %v2665 = vsub.f32 0.0, %v2601
      %v2666 = vsub.f32 0.0, %v2602
      %v2667 = vsub.f32 0.0, %v2603
      %v2668 = vsub.f32 0.0, %v2604
      %v2669 = vsub.f32 0.0, %v2605
      %v2670 = vsub.f32 0.0, %v2606
      %v2671 = vsub.f32 0.0, %v2607
      %v2672 = vsub.f32 0.0, %v2608
      %v2673 = vsub.f32 0.0, %v2609
      %v2674 = vsub.f32 0.0, %v2610
      %v2675 = vsub.f32 0.0, %v2611
      %v2676 = vsub.f32 0.0, %v2612
      %v2677 = vsub.f32 0.0, %v2613
      %v2678 = vsub.f32 0.0, %v2614
      %v2679 = vsub.f32 0.0, %v2615
      %v2680 = vsub.f32 0.0, %v2616
      %v2681 = vsub.f32 0.0, %v2617
      %v2682 = vsub.f32 0.0, %v2618
      %v2683 = vsub.f32 0.0, %v2619
      %v2684 = vsub.f32 0.0, %v2620
      %v2685 = vsub.f32 0.0, %v2621
      %v2686 = vsub.f32 0.0, %v2622
      %v2687 = vsub.f32 0.0, %v2623
      %v2688 = vsub.f32 0.0, %v2624
      %v2689 = vsub.f32 0.0, %v2625
      %v2690 = vsub.f32 0.0, %v2626
      %v2691 = vsub.f32 0.0, %v2627
      %v2692 = vsub.f32 0.0, %v2628
      %v2693 = vsub.f32 0.0, %v2629
      %v2694 = vsub.f32 0.0, %v2630
      %v2695 = vsub.f32 0.0, %v2631
      %v2696 = vsub.f32 0.0, %v2632
      %v2697 = vsub.f32 0.0, %v2633
      %v2698 = vsub.f32 0.0, %v2634
      %v2699 = vsub.f32 0.0, %v2635
      %v2700 = vsub.f32 0.0, %v2636
      %v2701 = vsub.f32 0.0, %v2637
      %v2702 = vsub.f32 0.0, %v2638
      %v2703 = vsub.f32 0.0, %v2639
      %v2704 = vsub.f32 0.0, %v2640
      %v2705 = vsub.f32 0.0, %v2641
      %v2706 = vsub.f32 0.0, %v2642
      %v2707 = vsub.f32 0.0, %v2643
      %v2708 = vsub.f32 0.0, %v2644
      %v2709 = vsub.f32 0.0, %v2645
      %v2710 = vsub.f32 0.0, %v2646
      %v2711 = vsub.f32 0.0, %v2647
      %v2712 = vsub.f32 0.0, %v2648
      %v2713 = vsub.f32 0.0, %v2649
      %v2714 = vsub.f32 0.0, %v2650
      %v2715 = vsub.f32 0.0, %v2651
      %v2716 = vmul.f32 %v2652, 1.442695
      %v2717 = vpow.pop %v2716
      %v2718 = vmul.f32 %v2653, 1.442695
      %v2719 = vpow.pop %v2718
      %v2720 = vmul.f32 %v2654, 1.442695
      %v2721 = vpow.pop %v2720
      %v2722 = vmul.f32 %v2655, 1.442695
      %v2723 = vpow.pop %v2722
      %v2724 = vmul.f32 %v2656, 1.442695
      %v2725 = vpow.pop %v2724
      %v2726 = vmul.f32 %v2657, 1.442695
      %v2727 = vpow.pop %v2726
      %v2728 = vmul.f32 %v2658, 1.442695
      %v2729 = vpow.pop %v2728
      %v2730 = vmul.f32 %v2659, 1.442695
      %v2731 = vpow.pop %v2730
      %v2732 = vmul.f32 %v2660, 1.442695
      %v2733 = vpow.pop %v2732
      %v2734 = vmul.f32 %v2661, 1.442695
      %v2735 = vpow.pop %v2734
      %v2736 = vmul.f32 %v2662, 1.442695
      %v2737 = vpow.pop %v2736
      %v2738 = vmul.f32 %v2663, 1.442695
      %v2739 = vpow.pop %v2738
      %v2740 = vmul.f32 %v2664, 1.442695
      %v2741 = vpow.pop %v2740
      %v2742 = vmul.f32 %v2665, 1.442695
      %v2743 = vpow.pop %v2742
      %v2744 = vmul.f32 %v2666, 1.442695
      %v2745 = vpow.pop %v2744
      %v2746 = vmul.f32 %v2667, 1.442695
      %v2747 = vpow.pop %v2746
      %v2748 = vmul.f32 %v2668, 1.442695
      %v2749 = vpow.pop %v2748
      %v2750 = vmul.f32 %v2669, 1.442695
      %v2751 = vpow.pop %v2750
      %v2752 = vmul.f32 %v2670, 1.442695
      %v2753 = vpow.pop %v2752
      %v2754 = vmul.f32 %v2671, 1.442695
      %v2755 = vpow.pop %v2754
      %v2756 = vmul.f32 %v2672, 1.442695
      %v2757 = vpow.pop %v2756
      %v2758 = vmul.f32 %v2673, 1.442695
      %v2759 = vpow.pop %v2758
      %v2760 = vmul.f32 %v2674, 1.442695
      %v2761 = vpow.pop %v2760
      %v2762 = vmul.f32 %v2675, 1.442695
      %v2763 = vpow.pop %v2762
      %v2764 = vmul.f32 %v2676, 1.442695
      %v2765 = vpow.pop %v2764
      %v2766 = vmul.f32 %v2677, 1.442695
      %v2767 = vpow.pop %v2766
      %v2768 = vmul.f32 %v2678, 1.442695
      %v2769 = vpow.pop %v2768
      %v2770 = vmul.f32 %v2679, 1.442695
      %v2771 = vpow.pop %v2770
      %v2772 = vmul.f32 %v2680, 1.442695
      %v2773 = vpow.pop %v2772
      %v2774 = vmul.f32 %v2681, 1.442695
      %v2775 = vpow.pop %v2774
      %v2776 = vmul.f32 %v2682, 1.442695
      %v2777 = vpow.pop %v2776
      %v2778 = vmul.f32 %v2683, 1.442695
      %v2779 = vpow.pop %v2778
      %v2780 = vmul.f32 %v2684, 1.442695
      %v2781 = vpow.pop %v2780
      %v2782 = vmul.f32 %v2685, 1.442695
      %v2783 = vpow.pop %v2782
      %v2784 = vmul.f32 %v2686, 1.442695
      %v2785 = vpow.pop %v2784
      %v2786 = vmul.f32 %v2687, 1.442695
      %v2787 = vpow.pop %v2786
      %v2788 = vmul.f32 %v2688, 1.442695
      %v2789 = vpow.pop %v2788
      %v2790 = vmul.f32 %v2689, 1.442695
      %v2791 = vpow.pop %v2790
      %v2792 = vmul.f32 %v2690, 1.442695
      %v2793 = vpow.pop %v2792
      %v2794 = vmul.f32 %v2691, 1.442695
      %v2795 = vpow.pop %v2794
      %v2796 = vmul.f32 %v2692, 1.442695
      %v2797 = vpow.pop %v2796
      %v2798 = vmul.f32 %v2693, 1.442695
      %v2799 = vpow.pop %v2798
      %v2800 = vmul.f32 %v2694, 1.442695
      %v2801 = vpow.pop %v2800
      %v2802 = vmul.f32 %v2695, 1.442695
      %v2803 = vpow.pop %v2802
      %v2804 = vmul.f32 %v2696, 1.442695
      %v2805 = vpow.pop %v2804
      %v2806 = vmul.f32 %v2697, 1.442695
      %v2807 = vpow.pop %v2806
      %v2808 = vmul.f32 %v2698, 1.442695
      %v2809 = vpow.pop %v2808
      %v2810 = vmul.f32 %v2699, 1.442695
      %v2811 = vpow.pop %v2810
      %v2812 = vmul.f32 %v2700, 1.442695
      %v2813 = vpow.pop %v2812
      %v2814 = vmul.f32 %v2701, 1.442695
      %v2815 = vpow.pop %v2814
      %v2816 = vmul.f32 %v2702, 1.442695
      %v2817 = vpow.pop %v2816
      %v2818 = vmul.f32 %v2703, 1.442695
      %v2819 = vpow.pop %v2818
      %v2820 = vmul.f32 %v2704, 1.442695
      %v2821 = vpow.pop %v2820
      %v2822 = vmul.f32 %v2705, 1.442695
      %v2823 = vpow.pop %v2822
      %v2824 = vmul.f32 %v2706, 1.442695
      %v2825 = vpow.pop %v2824
      %v2826 = vmul.f32 %v2707, 1.442695
      %v2827 = vpow.pop %v2826
      %v2828 = vmul.f32 %v2708, 1.442695
      %v2829 = vpow.pop %v2828
      %v2830 = vmul.f32 %v2709, 1.442695
      %v2831 = vpow.pop %v2830
      %v2832 = vmul.f32 %v2710, 1.442695
      %v2833 = vpow.pop %v2832
      %v2834 = vmul.f32 %v2711, 1.442695
      %v2835 = vpow.pop %v2834
      %v2836 = vmul.f32 %v2712, 1.442695
      %v2837 = vpow.pop %v2836
      %v2838 = vmul.f32 %v2713, 1.442695
      %v2839 = vpow.pop %v2838
      %v2840 = vmul.f32 %v2714, 1.442695
      %v2841 = vpow.pop %v2840
      %v2842 = vmul.f32 %v2715, 1.442695
      %v2843 = vpow.pop %v2842
      %v2844 = vadd.f32 %v2717, 1.0
      %v2845 = vadd.f32 %v2719, 1.0
      %v2846 = vadd.f32 %v2721, 1.0
      %v2847 = vadd.f32 %v2723, 1.0
      %v2848 = vadd.f32 %v2725, 1.0
      %v2849 = vadd.f32 %v2727, 1.0
      %v2850 = vadd.f32 %v2729, 1.0
      %v2851 = vadd.f32 %v2731, 1.0
      %v2852 = vadd.f32 %v2733, 1.0
      %v2853 = vadd.f32 %v2735, 1.0
      %v2854 = vadd.f32 %v2737, 1.0
      %v2855 = vadd.f32 %v2739, 1.0
      %v2856 = vadd.f32 %v2741, 1.0
      %v2857 = vadd.f32 %v2743, 1.0
      %v2858 = vadd.f32 %v2745, 1.0
      %v2859 = vadd.f32 %v2747, 1.0
      %v2860 = vadd.f32 %v2749, 1.0
      %v2861 = vadd.f32 %v2751, 1.0
      %v2862 = vadd.f32 %v2753, 1.0
      %v2863 = vadd.f32 %v2755, 1.0
      %v2864 = vadd.f32 %v2757, 1.0
      %v2865 = vadd.f32 %v2759, 1.0
      %v2866 = vadd.f32 %v2761, 1.0
      %v2867 = vadd.f32 %v2763, 1.0
      %v2868 = vadd.f32 %v2765, 1.0
      %v2869 = vadd.f32 %v2767, 1.0
      %v2870 = vadd.f32 %v2769, 1.0
      %v2871 = vadd.f32 %v2771, 1.0
      %v2872 = vadd.f32 %v2773, 1.0
      %v2873 = vadd.f32 %v2775, 1.0
      %v2874 = vadd.f32 %v2777, 1.0
      %v2875 = vadd.f32 %v2779, 1.0
      %v2876 = vadd.f32 %v2781, 1.0
      %v2877 = vadd.f32 %v2783, 1.0
      %v2878 = vadd.f32 %v2785, 1.0
      %v2879 = vadd.f32 %v2787, 1.0
      %v2880 = vadd.f32 %v2789, 1.0
      %v2881 = vadd.f32 %v2791, 1.0
      %v2882 = vadd.f32 %v2793, 1.0
      %v2883 = vadd.f32 %v2795, 1.0
      %v2884 = vadd.f32 %v2797, 1.0
      %v2885 = vadd.f32 %v2799, 1.0
      %v2886 = vadd.f32 %v2801, 1.0
      %v2887 = vadd.f32 %v2803, 1.0
      %v2888 = vadd.f32 %v2805, 1.0
      %v2889 = vadd.f32 %v2807, 1.0
      %v2890 = vadd.f32 %v2809, 1.0
      %v2891 = vadd.f32 %v2811, 1.0
      %v2892 = vadd.f32 %v2813, 1.0
      %v2893 = vadd.f32 %v2815, 1.0
      %v2894 = vadd.f32 %v2817, 1.0
      %v2895 = vadd.f32 %v2819, 1.0
      %v2896 = vadd.f32 %v2821, 1.0
      %v2897 = vadd.f32 %v2823, 1.0
      %v2898 = vadd.f32 %v2825, 1.0
      %v2899 = vadd.f32 %v2827, 1.0
      %v2900 = vadd.f32 %v2829, 1.0
      %v2901 = vadd.f32 %v2831, 1.0
      %v2902 = vadd.f32 %v2833, 1.0
      %v2903 = vadd.f32 %v2835, 1.0
      %v2904 = vadd.f32 %v2837, 1.0
      %v2905 = vadd.f32 %v2839, 1.0
      %v2906 = vadd.f32 %v2841, 1.0
      %v2907 = vadd.f32 %v2843, 1.0
      %v2908 = vrcp.pop %v2844
      %v2909 = vmul.f32 1.0, %v2908
      %v2910 = vrcp.pop %v2845
      %v2911 = vmul.f32 1.0, %v2910
      %v2912 = vrcp.pop %v2846
      %v2913 = vmul.f32 1.0, %v2912
      %v2914 = vrcp.pop %v2847
      %v2915 = vmul.f32 1.0, %v2914
      %v2916 = vrcp.pop %v2848
      %v2917 = vmul.f32 1.0, %v2916
      %v2918 = vrcp.pop %v2849
      %v2919 = vmul.f32 1.0, %v2918
      %v2920 = vrcp.pop %v2850
      %v2921 = vmul.f32 1.0, %v2920
      %v2922 = vrcp.pop %v2851
      %v2923 = vmul.f32 1.0, %v2922
      %v2924 = vrcp.pop %v2852
      %v2925 = vmul.f32 1.0, %v2924
      %v2926 = vrcp.pop %v2853
      %v2927 = vmul.f32 1.0, %v2926
      %v2928 = vrcp.pop %v2854
      %v2929 = vmul.f32 1.0, %v2928
      %v2930 = vrcp.pop %v2855
      %v2931 = vmul.f32 1.0, %v2930
      %v2932 = vrcp.pop %v2856
      %v2933 = vmul.f32 1.0, %v2932
      %v2934 = vrcp.pop %v2857
      %v2935 = vmul.f32 1.0, %v2934
      %v2936 = vrcp.pop %v2858
      %v2937 = vmul.f32 1.0, %v2936
      %v2938 = vrcp.pop %v2859
      %v2939 = vmul.f32 1.0, %v2938
      %v2940 = vrcp.pop %v2860
      %v2941 = vmul.f32 1.0, %v2940
      %v2942 = vrcp.pop %v2861
      %v2943 = vmul.f32 1.0, %v2942
      %v2944 = vrcp.pop %v2862
      %v2945 = vmul.f32 1.0, %v2944
      %v2946 = vrcp.pop %v2863
      %v2947 = vmul.f32 1.0, %v2946
      %v2948 = vrcp.pop %v2864
      %v2949 = vmul.f32 1.0, %v2948
      %v2950 = vrcp.pop %v2865
      %v2951 = vmul.f32 1.0, %v2950
      %v2952 = vrcp.pop %v2866
      %v2953 = vmul.f32 1.0, %v2952
      %v2954 = vrcp.pop %v2867
      %v2955 = vmul.f32 1.0, %v2954
      %v2956 = vrcp.pop %v2868
      %v2957 = vmul.f32 1.0, %v2956
      %v2958 = vrcp.pop %v2869
      %v2959 = vmul.f32 1.0, %v2958
      %v2960 = vrcp.pop %v2870
      %v2961 = vmul.f32 1.0, %v2960
      %v2962 = vrcp.pop %v2871
      %v2963 = vmul.f32 1.0, %v2962
      %v2964 = vrcp.pop %v2872
      %v2965 = vmul.f32 1.0, %v2964
      %v2966 = vrcp.pop %v2873
      %v2967 = vmul.f32 1.0, %v2966
      %v2968 = vrcp.pop %v2874
      %v2969 = vmul.f32 1.0, %v2968
      %v2970 = vrcp.pop %v2875
      %v2971 = vmul.f32 1.0, %v2970
      %v2972 = vrcp.pop %v2876
      %v2973 = vmul.f32 1.0, %v2972
      %v2974 = vrcp.pop %v2877
      %v2975 = vmul.f32 1.0, %v2974
      %v2976 = vrcp.pop %v2878
      %v2977 = vmul.f32 1.0, %v2976
      %v2978 = vrcp.pop %v2879
      %v2979 = vmul.f32 1.0, %v2978
      %v2980 = vrcp.pop %v2880
      %v2981 = vmul.f32 1.0, %v2980
      %v2982 = vrcp.pop %v2881
      %v2983 = vmul.f32 1.0, %v2982
      %v2984 = vrcp.pop %v2882
      %v2985 = vmul.f32 1.0, %v2984
      %v2986 = vrcp.pop %v2883
      %v2987 = vmul.f32 1.0, %v2986
      %v2988 = vrcp.pop %v2884
      %v2989 = vmul.f32 1.0, %v2988
      %v2990 = vrcp.pop %v2885
      %v2991 = vmul.f32 1.0, %v2990
      %v2992 = vrcp.pop %v2886
      %v2993 = vmul.f32 1.0, %v2992
      %v2994 = vrcp.pop %v2887
      %v2995 = vmul.f32 1.0, %v2994
      %v2996 = vrcp.pop %v2888
      %v2997 = vmul.f32 1.0, %v2996
      %v2998 = vrcp.pop %v2889
      %v2999 = vmul.f32 1.0, %v2998
      %v3000 = vrcp.pop %v2890
      %v3001 = vmul.f32 1.0, %v3000
      %v3002 = vrcp.pop %v2891
      %v3003 = vmul.f32 1.0, %v3002
      %v3004 = vrcp.pop %v2892
      %v3005 = vmul.f32 1.0, %v3004
      %v3006 = vrcp.pop %v2893
      %v3007 = vmul.f32 1.0, %v3006
      %v3008 = vrcp.pop %v2894
      %v3009 = vmul.f32 1.0, %v3008
      %v3010 = vrcp.pop %v2895
      %v3011 = vmul.f32 1.0, %v3010
      %v3012 = vrcp.pop %v2896
      %v3013 = vmul.f32 1.0, %v3012
      %v3014 = vrcp.pop %v2897
      %v3015 = vmul.f32 1.0, %v3014
      %v3016 = vrcp.pop %v2898
      %v3017 = vmul.f32 1.0, %v3016
      %v3018 = vrcp.pop %v2899
      %v3019 = vmul.f32 1.0, %v3018
      %v3020 = vrcp.pop %v2900
      %v3021 = vmul.f32 1.0, %v3020
      %v3022 = vrcp.pop %v2901
      %v3023 = vmul.f32 1.0, %v3022
      %v3024 = vrcp.pop %v2902
      %v3025 = vmul.f32 1.0, %v3024
      %v3026 = vrcp.pop %v2903
      %v3027 = vmul.f32 1.0, %v3026
      %v3028 = vrcp.pop %v2904
      %v3029 = vmul.f32 1.0, %v3028
      %v3030 = vrcp.pop %v2905
      %v3031 = vmul.f32 1.0, %v3030
      %v3032 = vrcp.pop %v2906
      %v3033 = vmul.f32 1.0, %v3032
      %v3034 = vrcp.pop %v2907
      %v3035 = vmul.f32 1.0, %v3034
      %vm3036 = vcmask 7168
      %3037 = vst.msk [vmem:[%s336] sm:$0xff] %vm3036, %v2909
      %3038 = vst.msk [vmem:[%s336 + $0x8] sm:$0xff] %vm3036, %v2911
      %3039 = vst.msk [vmem:[%s336 + $0x10] sm:$0xff] %vm3036, %v2913
      %3040 = vst.msk [vmem:[%s336 + $0x18] sm:$0xff] %vm3036, %v2915
      %3041 = vst.msk [vmem:[%s336 + $0x20] sm:$0xff] %vm3036, %v2917
      %3042 = vst.msk [vmem:[%s336 + $0x28] sm:$0xff] %vm3036, %v2919
      %3043 = vst.msk [vmem:[%s336 + $0x30] sm:$0xff] %vm3036, %v2921
      %3044 = vst.msk [vmem:[%s336 + $0x38] sm:$0xff] %vm3036, %v2923
      %3045 = vst.msk [vmem:[%s336 + $0x40] sm:$0xff] %vm3036, %v2925
      %3046 = vst.msk [vmem:[%s336 + $0x48] sm:$0xff] %vm3036, %v2927
      %3047 = vst.msk [vmem:[%s336 + $0x50] sm:$0xff] %vm3036, %v2929
      %3048 = vst.msk [vmem:[%s336 + $0x58] sm:$0xff] %vm3036, %v2931
      %3049 = vst.msk [vmem:[%s336 + $0x60] sm:$0xff] %vm3036, %v2933
      %3050 = vst.msk [vmem:[%s336 + $0x68] sm:$0xff] %vm3036, %v2935
      %3051 = vst.msk [vmem:[%s336 + $0x70] sm:$0xff] %vm3036, %v2937
      %3052 = vst.msk [vmem:[%s336 + $0x78] sm:$0xff] %vm3036, %v2939
      %3053 = vst.msk [vmem:[%s336 + $0x80] sm:$0xff] %vm3036, %v2941
      %3054 = vst.msk [vmem:[%s336 + $0x88] sm:$0xff] %vm3036, %v2943
      %3055 = vst.msk [vmem:[%s336 + $0x90] sm:$0xff] %vm3036, %v2945
      %3056 = vst.msk [vmem:[%s336 + $0x98] sm:$0xff] %vm3036, %v2947
      %3057 = vst.msk [vmem:[%s336 + $0xa0] sm:$0xff] %vm3036, %v2949
      %3058 = vst.msk [vmem:[%s336 + $0xa8] sm:$0xff] %vm3036, %v2951
      %3059 = vst.msk [vmem:[%s336 + $0xb0] sm:$0xff] %vm3036, %v2953
      %3060 = vst.msk [vmem:[%s336 + $0xb8] sm:$0xff] %vm3036, %v2955
      %3061 = vst.msk [vmem:[%s336 + $0xc0] sm:$0xff] %vm3036, %v2957
      %3062 = vst.msk [vmem:[%s336 + $0xc8] sm:$0xff] %vm3036, %v2959
      %3063 = vst.msk [vmem:[%s336 + $0xd0] sm:$0xff] %vm3036, %v2961
      %3064 = vst.msk [vmem:[%s336 + $0xd8] sm:$0xff] %vm3036, %v2963
      %3065 = vst.msk [vmem:[%s336 + $0xe0] sm:$0xff] %vm3036, %v2965
      %3066 = vst.msk [vmem:[%s336 + $0xe8] sm:$0xff] %vm3036, %v2967
      %3067 = vst.msk [vmem:[%s336 + $0xf0] sm:$0xff] %vm3036, %v2969
      %3068 = vst.msk [vmem:[%s336 + $0xf8] sm:$0xff] %vm3036, %v2971
      %3069 = vst.msk [vmem:[%s336 + $0x100] sm:$0xff] %vm3036, %v2973
      %3070 = vst.msk [vmem:[%s336 + $0x108] sm:$0xff] %vm3036, %v2975
      %3071 = vst.msk [vmem:[%s336 + $0x110] sm:$0xff] %vm3036, %v2977
      %3072 = vst.msk [vmem:[%s336 + $0x118] sm:$0xff] %vm3036, %v2979
      %3073 = vst.msk [vmem:[%s336 + $0x120] sm:$0xff] %vm3036, %v2981
      %3074 = vst.msk [vmem:[%s336 + $0x128] sm:$0xff] %vm3036, %v2983
      %3075 = vst.msk [vmem:[%s336 + $0x130] sm:$0xff] %vm3036, %v2985
      %3076 = vst.msk [vmem:[%s336 + $0x138] sm:$0xff] %vm3036, %v2987
      %3077 = vst.msk [vmem:[%s336 + $0x140] sm:$0xff] %vm3036, %v2989
      %3078 = vst.msk [vmem:[%s336 + $0x148] sm:$0xff] %vm3036, %v2991
      %3079 = vst.msk [vmem:[%s336 + $0x150] sm:$0xff] %vm3036, %v2993
      %3080 = vst.msk [vmem:[%s336 + $0x158] sm:$0xff] %vm3036, %v2995
      %3081 = vst.msk [vmem:[%s336 + $0x160] sm:$0xff] %vm3036, %v2997
      %3082 = vst.msk [vmem:[%s336 + $0x168] sm:$0xff] %vm3036, %v2999
      %3083 = vst.msk [vmem:[%s336 + $0x170] sm:$0xff] %vm3036, %v3001
      %3084 = vst.msk [vmem:[%s336 + $0x178] sm:$0xff] %vm3036, %v3003
      %3085 = vst.msk [vmem:[%s336 + $0x180] sm:$0xff] %vm3036, %v3005
      %3086 = vst.msk [vmem:[%s336 + $0x188] sm:$0xff] %vm3036, %v3007
      %3087 = vst.msk [vmem:[%s336 + $0x190] sm:$0xff] %vm3036, %v3009
      %3088 = vst.msk [vmem:[%s336 + $0x198] sm:$0xff] %vm3036, %v3011
      %3089 = vst.msk [vmem:[%s336 + $0x1a0] sm:$0xff] %vm3036, %v3013
      %3090 = vst.msk [vmem:[%s336 + $0x1a8] sm:$0xff] %vm3036, %v3015
      %3091 = vst.msk [vmem:[%s336 + $0x1b0] sm:$0xff] %vm3036, %v3017
      %3092 = vst.msk [vmem:[%s336 + $0x1b8] sm:$0xff] %vm3036, %v3019
      %3093 = vst.msk [vmem:[%s336 + $0x1c0] sm:$0xff] %vm3036, %v3021
      %3094 = vst.msk [vmem:[%s336 + $0x1c8] sm:$0xff] %vm3036, %v3023
      %3095 = vst.msk [vmem:[%s336 + $0x1d0] sm:$0xff] %vm3036, %v3025
      %3096 = vst.msk [vmem:[%s336 + $0x1d8] sm:$0xff] %vm3036, %v3027
      %3097 = vst.msk [vmem:[%s336 + $0x1e0] sm:$0xff] %vm3036, %v3029
      %3098 = vst.msk [vmem:[%s336 + $0x1e8] sm:$0xff] %vm3036, %v3031
      %3099 = vst.msk [vmem:[%s336 + $0x1f0] sm:$0xff] %vm3036, %v3033
      %3100 = vst.msk [vmem:[%s336 + $0x1f8] sm:$0xff] %vm3036, %v3035
      %s3101 = smul.u32 64, %s22
      %p3102 = scmp.lt.s32.totalorder %s3101, 127
      %s3103 = scalar_select %p3102, %s3101, 127
      %s3104 = smul.addr %s3103, 8
      %s3105 = scalar_lea.vmem %s9, %s3104
      // Predicated region
      $region57: #{nn_classifier_forward.1} parent=55 // pred_check
        %p3106 = pneg %p234
      $region58: #{nn_classifier_forward.1} parent=55 // pred_check_branch
        %3108 = sbr.rel (%p3106) target = $region60
      $region59: #{nn_classifier_forward.1} parent=55 // pred_region
        %s3109 = smul.u32 64, %s22
      $region60: #{nn_classifier_forward.1} parent=55 // pred_fallthru
        _
    $region56: #{nn_classifier_forward.1} parent=5 // pred_fallthru
      _
    %p3110 = scmp.le.s32.totalorder 2, %s17
    // Predicated region
    $region61: #{nn_classifier_forward.1} parent=5 // pred_check
      %p3111 = pneg %p3110
    $region62: #{nn_classifier_forward.1} parent=5 // pred_check_branch
      %3113 = sbr.rel (%p3111) target = $region64
    $region63: #{nn_classifier_forward.1} parent=5 // pred_region
      %s3114 = ssub.s32 %s17, 2
      // Predicated region
      $region65: #{nn_classifier_forward.1} parent=63 // pred_check
        %p3115 = pneg %p240
      $region66: #{nn_classifier_forward.1} parent=63 // pred_check_branch
        %3117 = sbr.rel (%p3115) target = $region68
      $region67: #{nn_classifier_forward.1} parent=63 // pred_region
        %s3118 = smul.u32 64, %s23
        %p3119 = scmp.lt.s32.totalorder %s3118, 127
        %s3120 = scalar_select %p3119, %s3118, 127
        %s3121 = smul.addr %s3120, 8
        %s3122 = scalar_lea.vmem %s9, %s3121
      $region68: #{nn_classifier_forward.1} parent=63 // pred_fallthru
        _
    $region64: #{nn_classifier_forward.1} parent=5 // pred_fallthru
      _
  $region6: #{nn_classifier_forward.1} parent=0 // loop_footer
    %s21 = sadd.s32 1, %s17
  $region7: #{nn_classifier_forward.1} parent=0 // loop_footer_branch
    %16 = sbr.rel target = $region3
  $region8: #{nn_classifier_forward.1} parent=0 // loop_exit
    _

</llo_original>
